<compile_context>
chip_gen: v7x
topology: tpu7x:2x2x1
jax: 0.10.0
libtpu: 0.0.40
codegen_flags: <defaults>
</compile_context>

<pallas_src>
import functools

import jax
import jax.numpy as jnp
from jax import lax
from jax.experimental import pallas as pl
from jax.experimental.pallas import tpu as pltpu

EPS = 1e-5
_VMEM_LIMIT = 32 * 1024 * 1024   # conservative: fits v7x's smaller physical VMEM


def _cout_tile(cout):
    """Lane-dense Cout tiles (multiples of 128) when possible, else whole Cout."""
    return 128 if (cout > 128 and cout % 128 == 0) else cout


# ----------------------------------------------------------------------------
# Pallas kernels
# ----------------------------------------------------------------------------
def _conv3x3_bn_kernel(xp_ref, w_ref, s_ref, t_ref, o_ref, *, apply_relu,
                       compute_dtype):
    """3x3 conv (input pre-padded by 1) + folded BN (+ ReLU) for one image/Cout tile.

    xp_ref: (1, H+2, W+2, Cin)   w_ref: (3, 3, Cin, Ct)
    s_ref/t_ref: (1, Ct)         o_ref: (1, H, W, Ct)
    Each tap is an (H*W, Cin) x (Cin, Ct) MXU matmul accumulated in f32.
    """
    _, h_pad, w_pad, cin = xp_ref.shape
    H, W = h_pad - 2, w_pad - 2
    ct = o_ref.shape[3]

    xp = xp_ref[0].astype(compute_dtype)          # (H+2, W+2, Cin)
    w_all = w_ref[...].astype(compute_dtype)      # (3, 3, Cin, Ct)

    acc = jnp.zeros((H * W, ct), jnp.float32)
    for ky in range(3):
        for kx in range(3):
            win = xp[ky:ky + H, kx:kx + W, :].reshape(H * W, cin)
            acc += jnp.dot(win, w_all[ky, kx],
                           preferred_element_type=jnp.float32)

    y = acc * s_ref[...] + t_ref[...]             # folded BN (f32)
    if apply_relu:
        y = jnp.maximum(y, 0.0)
    o_ref[0] = y.reshape(H, W, ct).astype(o_ref.dtype)


def _conv3x3_bn_add_relu_kernel(*refs, proj, emit_preact, compute_dtype):
    """conv2 (3x3) + BN2 + shortcut (+ fused 1x1 proj conv/BN) + add + ReLU.

    Ref order: h1_pad, w2, s2, t2, shortcut_src[, w_sc, s_sc, t_sc], out[, preact]
    """
    if proj:
        hp_ref, w_ref, s_ref, t_ref, xs_ref, wsc_ref, ssc_ref, tsc_ref = refs[:8]
        outs = refs[8:]
    else:
        hp_ref, w_ref, s_ref, t_ref, xs_ref = refs[:5]
        outs = refs[5:]
    o_ref = outs[0]
    pre_ref = outs[1] if emit_preact else None

    _, h_pad, w_pad, cin = hp_ref.shape
    H, W = h_pad - 2, w_pad - 2
    ct = o_ref.shape[3]

    hp = hp_ref[0].astype(compute_dtype)          # (H+2, W+2, planes)
    w_all = w_ref[...].astype(compute_dtype)      # (3, 3, planes, Ct)

    acc = jnp.zeros((H * W, ct), jnp.float32)
    for ky in range(3):
        for kx in range(3):
            win = hp[ky:ky + H, kx:kx + W, :].reshape(H * W, cin)
            acc += jnp.dot(win, w_all[ky, kx],
                           preferred_element_type=jnp.float32)
    y = acc * s_ref[...] + t_ref[...]             # conv2 + folded BN2

    if proj:   # 1x1 (strided) projection conv + BN, fused (MXU matmul)
        csc = xs_ref.shape[3]
        xs2 = xs_ref[0].reshape(H * W, csc).astype(compute_dtype)
        sc = jnp.dot(xs2, wsc_ref[...].astype(compute_dtype),
                     preferred_element_type=jnp.float32)
        sc = sc * ssc_ref[...] + tsc_ref[...]
    else:      # identity shortcut
        sc = xs_ref[0].reshape(H * W, ct).astype(jnp.float32)

    pre = y + sc
    if emit_preact:
        pre_ref[0] = pre.reshape(H, W, ct).astype(pre_ref.dtype)
    o_ref[0] = jnp.maximum(pre, 0.0).reshape(H, W, ct).astype(o_ref.dtype)


# ----------------------------------------------------------------------------
# Wrappers around pallas_call
# ----------------------------------------------------------------------------
def conv3x3_bn(x_nhwc, w, scale, shift, *, apply_relu, out_dtype, compute_dtype):
    B, H, W, Cin = x_nhwc.shape
    Cout = w.shape[3]
    ct = _cout_tile(Cout)
    n_co = Cout // ct
    xpad = jnp.pad(x_nhwc, ((0, 0), (1, 1), (1, 1), (0, 0)))

    kern = functools.partial(_conv3x3_bn_kernel, apply_relu=apply_relu,
                             compute_dtype=compute_dtype)
    return pl.pallas_call(
        kern,
        out_shape=jax.ShapeDtypeStruct((B, H, W, Cout), out_dtype),
        grid=(B, n_co),
        in_specs=[
            pl.BlockSpec((1, H + 2, W + 2, Cin), lambda b, c: (b, 0, 0, 0)),
            pl.BlockSpec((3, 3, Cin, ct), lambda b, c: (0, 0, 0, c)),
            pl.BlockSpec((1, ct), lambda b, c: (0, c)),
            pl.BlockSpec((1, ct), lambda b, c: (0, c)),
        ],
        out_specs=pl.BlockSpec((1, H, W, ct), lambda b, c: (b, 0, 0, c)),
        compiler_params=pltpu.CompilerParams(
            dimension_semantics=("parallel", "parallel"),
            vmem_limit_bytes=_VMEM_LIMIT),
    )(xpad, w.astype(compute_dtype),
      scale.reshape(1, Cout).astype(jnp.float32),
      shift.reshape(1, Cout).astype(jnp.float32))


def conv3x3_bn_add_relu(h_nhwc, w, scale, shift, sc_src, proj_params, *,
                        emit_preact, out_dtype, compute_dtype):
    B, H, W, Cin = h_nhwc.shape
    Cout = w.shape[3]
    ct = _cout_tile(Cout)
    n_co = Cout // ct
    hpad = jnp.pad(h_nhwc, ((0, 0), (1, 1), (1, 1), (0, 0)))
    proj = proj_params is not None

    in_specs = [
        pl.BlockSpec((1, H + 2, W + 2, Cin), lambda b, c: (b, 0, 0, 0)),
        pl.BlockSpec((3, 3, Cin, ct), lambda b, c: (0, 0, 0, c)),
        pl.BlockSpec((1, ct), lambda b, c: (0, c)),
        pl.BlockSpec((1, ct), lambda b, c: (0, c)),
    ]
    args = [hpad, w.astype(compute_dtype),
            scale.reshape(1, Cout).astype(jnp.float32),
            shift.reshape(1, Cout).astype(jnp.float32)]

    if proj:
        wsc, ssc, tsc = proj_params
        Csc = sc_src.shape[3]
        in_specs += [
            pl.BlockSpec((1, H, W, Csc), lambda b, c: (b, 0, 0, 0)),
            pl.BlockSpec((Csc, ct), lambda b, c: (0, c)),
            pl.BlockSpec((1, ct), lambda b, c: (0, c)),
            pl.BlockSpec((1, ct), lambda b, c: (0, c)),
        ]
        args += [sc_src, wsc.astype(compute_dtype),
                 ssc.reshape(1, Cout).astype(jnp.float32),
                 tsc.reshape(1, Cout).astype(jnp.float32)]
    else:
        in_specs += [pl.BlockSpec((1, H, W, ct), lambda b, c: (b, 0, 0, c))]
        args += [sc_src]

    out_block = pl.BlockSpec((1, H, W, ct), lambda b, c: (b, 0, 0, c))
    if emit_preact:
        out_shape = (jax.ShapeDtypeStruct((B, H, W, Cout), out_dtype),
                     jax.ShapeDtypeStruct((B, H, W, Cout), out_dtype))
        out_specs = (out_block, out_block)
    else:
        out_shape = jax.ShapeDtypeStruct((B, H, W, Cout), out_dtype)
        out_specs = out_block

    kern = functools.partial(_conv3x3_bn_add_relu_kernel, proj=proj,
                             emit_preact=emit_preact, compute_dtype=compute_dtype)
    return pl.pallas_call(
        kern,
        out_shape=out_shape,
        grid=(B, n_co),
        in_specs=in_specs,
        out_specs=out_specs,
        compiler_params=pltpu.CompilerParams(
            dimension_semantics=("parallel", "parallel"),
            vmem_limit_bytes=_VMEM_LIMIT),
    )(*args)


def _fold_bn(bn):
    s = bn["gamma"] / jnp.sqrt(bn["var"] + EPS)
    return s, bn["beta"] - bn["mean"] * s


def basic_block_forward(x_nchw, params, stride=1, is_last=False,
                        compute_dtype=jnp.bfloat16):
    """Pallas implementation of BasicBlock.forward.  Input/output layout: NCHW."""
    x = jnp.transpose(x_nchw, (0, 2, 3, 1)).astype(jnp.float32)   # NHWC
    _, _, _, Cin = x.shape
    planes = params["w1"].shape[3]

    s1, t1 = _fold_bn(params["bn1"])
    s2, t2 = _fold_bn(params["bn2"])

    # conv1 (3x3, stride, pad=1) + bn1 + relu; intermediate kept in compute dtype.
    h1 = conv3x3_bn(x, params["w1"], s1, t1, apply_relu=True,
                    out_dtype=compute_dtype, compute_dtype=compute_dtype)
    if stride != 1:
        # TODO(synk): fold the stride into the kernel's tap-window reads instead.
        h1 = h1[:, ::stride, ::stride, :]

    proj = (stride != 1) or (Cin != planes)      # expansion = 1
    if proj:
        ssc, tsc = _fold_bn(params["bn_sc"])
        xs = x[:, ::stride, ::stride, :] if stride != 1 else x
        proj_params = (params["w_sc"], ssc, tsc)
    else:
        xs = x
        proj_params = None

    res = conv3x3_bn_add_relu(h1, params["w2"], s2, t2, xs, proj_params,
                              emit_preact=is_last, out_dtype=jnp.float32,
                              compute_dtype=compute_dtype)
    if is_last:
        out, pre = res
        return (jnp.transpose(out, (0, 3, 1, 2)),
                jnp.transpose(pre, (0, 3, 1, 2)))
    return jnp.transpose(res, (0, 3, 1, 2))


# ----------------------------------------------------------------------------
# Pure-JAX reference (for correctness check only)
# ----------------------------------------------------------------------------
def _ref_forward(x, p, stride=1, is_last=False):
    def bn(y, b):
        s = b["gamma"] / jnp.sqrt(b["var"] + EPS)
        t = b["beta"] - b["mean"] * s
        return y * s[None, :, None, None] + t[None, :, None, None]

    def conv(y, w, stride=1, pad=0):
        return lax.conv_general_dilated(
            y, w, (stride, stride), [(pad, pad), (pad, pad)],
            dimension_numbers=("NCHW", "HWIO", "NCHW"))

    o = jax.nn.relu(bn(conv(x, p["w1"], stride=stride, pad=1), p["bn1"]))
    o = bn(conv(o, p["w2"], stride=1, pad=1), p["bn2"])
    if "w_sc" in p:
        sc = bn(conv(x, p["w_sc"][None, None], stride=stride, pad=0), p["bn_sc"])
    else:
        sc = x
    pre = o + sc
    out = jax.nn.relu(pre)
    return (out, pre) if is_last else out


# ----------------------------------------------------------------------------
# Deterministic parameter init (shapes follow BasicBlock.__init__; 3x3 weights
# stored as (kh, kw, Cin, Cout), 1x1 shortcut as (Cin, Cout)).
# ----------------------------------------------------------------------------
def init_params(key, in_planes, planes, stride=1):
    ks = jax.random.split(key, 8)

    def bn_params(k, c):
        k1, k2, k3, k4 = jax.random.split(k, 4)
        return {"gamma": 1.0 + 0.1 * jax.random.normal(k1, (c,), jnp.float32),
                "beta": 0.1 * jax.random.normal(k2, (c,), jnp.float32),
                "mean": 0.1 * jax.random.normal(k3, (c,), jnp.float32),
                "var": jnp.abs(jax.random.normal(k4, (c,), jnp.float32)) + 0.5}

    p = {
        "w1": 0.2 * jax.random.normal(ks[0], (3, 3, in_planes, planes), jnp.float32),
        "bn1": bn_params(ks[1], planes),
        "w2": 0.1 * jax.random.normal(ks[2], (3, 3, planes, planes), jnp.float32),
        "bn2": bn_params(ks[3], planes),
    }
    if stride != 1 or in_planes != planes:       # expansion = 1
        p["w_sc"] = 0.2 * jax.random.normal(ks[4], (in_planes, planes), jnp.float32)
        p["bn_sc"] = bn_params(ks[5], planes)
    return p


def _max_norm_err(a, b):
    return float(jnp.max(jnp.abs(a - b)) / (jnp.max(jnp.abs(b)) + 1e-6))


if __name__ == "__main__":
    key = jax.random.PRNGKey(0)
    k1, k2, k3, k4 = jax.random.split(key, 4)
    B, H, W = 2, 16, 16

    # ---- Case 1: identity shortcut (in_planes == planes, stride=1), is_last=True
    C = 8
    x1 = jax.random.normal(k1, (B, C, H, W), jnp.float32)
    p1 = init_params(k2, C, C, stride=1)
    ref_out, ref_pre = _ref_forward(x1, p1, stride=1, is_last=True)

    # f32 compute path: tight numerical check against the XLA reference.
    out32, pre32 = basic_block_forward(x1, p1, stride=1, is_last=True,
                                       compute_dtype=jnp.float32)
    out32 = jax.block_until_ready(out32)
    pre32 = jax.block_until_ready(pre32)
    assert out32.shape == ref_out.shape and pre32.shape == ref_pre.shape
    assert jnp.allclose(out32, ref_out, rtol=2e-3, atol=2e-3), "f32 out mismatch"
    assert jnp.allclose(pre32, ref_pre, rtol=2e-3, atol=2e-3), "f32 preact mismatch"

    # bf16 matmul operands (f32 accumulation): fast MXU path, looser tolerance.
    out16, pre16 = basic_block_forward(x1, p1, stride=1, is_last=True,
                                       compute_dtype=jnp.bfloat16)
    out16 = jax.block_until_ready(out16)
    pre16 = jax.block_until_ready(pre16)
    assert _max_norm_err(out16, ref_out) < 2e-2, "bf16 out mismatch"
    assert _max_norm_err(pre16, ref_pre) < 2e-2, "bf16 preact mismatch"

    # ---- Case 2: projection shortcut (in_planes != planes), is_last=False
    Cin2, planes2 = 4, 16
    x2 = jax.random.normal(k3, (B, Cin2, H, W), jnp.float32)
    p2 = init_params(k4, Cin2, planes2, stride=1)
    out2 = basic_block_forward(x2, p2, stride=1, is_last=False,
                               compute_dtype=jnp.bfloat16)
    out2 = jax.block_until_ready(out2)
    ref2 = _ref_forward(x2, p2, stride=1, is_last=False)
    assert out2.shape == ref2.shape
    assert _max_norm_err(out2, ref2) < 2e-2, "projection out mismatch"

    print("KERNEL_OK")
</pallas_src>

<mosaic_0001>
module attributes {stable_mosaic.version = 11 : i64} {
  func.func @_conv3x3_bn_kernel(%arg0: i32, %arg1: i32, %arg2: memref<1x18x18x8xf32, #tpu.memory_space<vmem>>, %arg3: memref<3x3x8x8xf32, #tpu.memory_space<vmem>>, %arg4: memref<1x8xf32, #tpu.memory_space<vmem>>, %arg5: memref<1x8xf32, #tpu.memory_space<vmem>>, %arg6: memref<1x16x16x8xf32, #tpu.memory_space<vmem>>) attributes {dimension_semantics = [#tpu.dimension_semantics<parallel>, #tpu.dimension_semantics<parallel>], iteration_bounds = array<i64: 2, 1>, scalar_prefetch = 0 : i64, scratch_operands = 0 : i64, tpu.core_type = #tpu.core_type<tc>, window_params = [{transform_indices = @transform_0, window_bounds = array<i64: 1, 18, 18, 8>}, {transform_indices = @transform_1, window_bounds = array<i64: 3, 3, 8, 8>}, {transform_indices = @transform_2, window_bounds = array<i64: 1, 8>}, {transform_indices = @transform_3, window_bounds = array<i64: 1, 8>}, {transform_indices = @transform_4, window_bounds = array<i64: 1, 16, 16, 8>}]} {
    %c0 = arith.constant 0 : index
    %c0_0 = arith.constant 0 : index
    %c0_1 = arith.constant 0 : index
    %c0_2 = arith.constant 0 : index
    %0 = vector.load %arg2[%c0, %c0_0, %c0_1, %c0_2] : memref<1x18x18x8xf32, #tpu.memory_space<vmem>>, vector<1x18x18x8xf32>
    %1 = vector.shape_cast %0 : vector<1x18x18x8xf32> to vector<18x18x8xf32>
    %c0_3 = arith.constant 0 : index
    %c0_4 = arith.constant 0 : index
    %c0_5 = arith.constant 0 : index
    %c0_6 = arith.constant 0 : index
    %2 = vector.load %arg3[%c0_3, %c0_4, %c0_5, %c0_6] : memref<3x3x8x8xf32, #tpu.memory_space<vmem>>, vector<3x3x8x8xf32>
    %cst = arith.constant 0.000000e+00 : f32
    %3 = vector.broadcast %cst : f32 to vector<256x8xf32>
    %4 = vector.extract_strided_slice %1 {offsets = [0, 0, 0], sizes = [16, 16, 8], strides = [1, 1, 1]} : vector<18x18x8xf32> to vector<16x16x8xf32>
    %5 = vector.shape_cast %4 : vector<16x16x8xf32> to vector<256x8xf32>
    %6 = vector.extract_strided_slice %2 {offsets = [0, 0, 0, 0], sizes = [1, 1, 8, 8], strides = [1, 1, 1, 1]} : vector<3x3x8x8xf32> to vector<1x1x8x8xf32>
    %7 = vector.shape_cast %6 : vector<1x1x8x8xf32> to vector<8x8xf32>
    %cst_7 = arith.constant dense<0.000000e+00> : vector<256x8xf32>
    %8 = tpu.matmul %5, %7, %cst_7 {dimension_numbers = #tpu.dot_dimension_numbers<[1], [0], [0], [1], [0, 0, 1, 1], [], []>} : vector<256x8xf32>, vector<8x8xf32>, vector<256x8xf32> -> vector<256x8xf32>
    %9 = arith.addf %3, %8 : vector<256x8xf32>
    %10 = vector.extract_strided_slice %1 {offsets = [0, 1, 0], sizes = [16, 16, 8], strides = [1, 1, 1]} : vector<18x18x8xf32> to vector<16x16x8xf32>
    %11 = vector.shape_cast %10 : vector<16x16x8xf32> to vector<256x8xf32>
    %12 = vector.extract_strided_slice %2 {offsets = [0, 1, 0, 0], sizes = [1, 1, 8, 8], strides = [1, 1, 1, 1]} : vector<3x3x8x8xf32> to vector<1x1x8x8xf32>
    %13 = vector.shape_cast %12 : vector<1x1x8x8xf32> to vector<8x8xf32>
    %cst_8 = arith.constant dense<0.000000e+00> : vector<256x8xf32>
    %14 = tpu.matmul %11, %13, %cst_8 {dimension_numbers = #tpu.dot_dimension_numbers<[1], [0], [0], [1], [0, 0, 1, 1], [], []>} : vector<256x8xf32>, vector<8x8xf32>, vector<256x8xf32> -> vector<256x8xf32>
    %15 = arith.addf %9, %14 : vector<256x8xf32>
    %16 = vector.extract_strided_slice %1 {offsets = [0, 2, 0], sizes = [16, 16, 8], strides = [1, 1, 1]} : vector<18x18x8xf32> to vector<16x16x8xf32>
    %17 = vector.shape_cast %16 : vector<16x16x8xf32> to vector<256x8xf32>
    %18 = vector.extract_strided_slice %2 {offsets = [0, 2, 0, 0], sizes = [1, 1, 8, 8], strides = [1, 1, 1, 1]} : vector<3x3x8x8xf32> to vector<1x1x8x8xf32>
    %19 = vector.shape_cast %18 : vector<1x1x8x8xf32> to vector<8x8xf32>
    %cst_9 = arith.constant dense<0.000000e+00> : vector<256x8xf32>
    %20 = tpu.matmul %17, %19, %cst_9 {dimension_numbers = #tpu.dot_dimension_numbers<[1], [0], [0], [1], [0, 0, 1, 1], [], []>} : vector<256x8xf32>, vector<8x8xf32>, vector<256x8xf32> -> vector<256x8xf32>
    %21 = arith.addf %15, %20 : vector<256x8xf32>
    %22 = vector.extract_strided_slice %1 {offsets = [1, 0, 0], sizes = [16, 16, 8], strides = [1, 1, 1]} : vector<18x18x8xf32> to vector<16x16x8xf32>
    %23 = vector.shape_cast %22 : vector<16x16x8xf32> to vector<256x8xf32>
    %24 = vector.extract_strided_slice %2 {offsets = [1, 0, 0, 0], sizes = [1, 1, 8, 8], strides = [1, 1, 1, 1]} : vector<3x3x8x8xf32> to vector<1x1x8x8xf32>
    %25 = vector.shape_cast %24 : vector<1x1x8x8xf32> to vector<8x8xf32>
    %cst_10 = arith.constant dense<0.000000e+00> : vector<256x8xf32>
    %26 = tpu.matmul %23, %25, %cst_10 {dimension_numbers = #tpu.dot_dimension_numbers<[1], [0], [0], [1], [0, 0, 1, 1], [], []>} : vector<256x8xf32>, vector<8x8xf32>, vector<256x8xf32> -> vector<256x8xf32>
    %27 = arith.addf %21, %26 : vector<256x8xf32>
    %28 = vector.extract_strided_slice %1 {offsets = [1, 1, 0], sizes = [16, 16, 8], strides = [1, 1, 1]} : vector<18x18x8xf32> to vector<16x16x8xf32>
    %29 = vector.shape_cast %28 : vector<16x16x8xf32> to vector<256x8xf32>
    %30 = vector.extract_strided_slice %2 {offsets = [1, 1, 0, 0], sizes = [1, 1, 8, 8], strides = [1, 1, 1, 1]} : vector<3x3x8x8xf32> to vector<1x1x8x8xf32>
    %31 = vector.shape_cast %30 : vector<1x1x8x8xf32> to vector<8x8xf32>
    %cst_11 = arith.constant dense<0.000000e+00> : vector<256x8xf32>
    %32 = tpu.matmul %29, %31, %cst_11 {dimension_numbers = #tpu.dot_dimension_numbers<[1], [0], [0], [1], [0, 0, 1, 1], [], []>} : vector<256x8xf32>, vector<8x8xf32>, vector<256x8xf32> -> vector<256x8xf32>
    %33 = arith.addf %27, %32 : vector<256x8xf32>
    %34 = vector.extract_strided_slice %1 {offsets = [1, 2, 0], sizes = [16, 16, 8], strides = [1, 1, 1]} : vector<18x18x8xf32> to vector<16x16x8xf32>
    %35 = vector.shape_cast %34 : vector<16x16x8xf32> to vector<256x8xf32>
    %36 = vector.extract_strided_slice %2 {offsets = [1, 2, 0, 0], sizes = [1, 1, 8, 8], strides = [1, 1, 1, 1]} : vector<3x3x8x8xf32> to vector<1x1x8x8xf32>
    %37 = vector.shape_cast %36 : vector<1x1x8x8xf32> to vector<8x8xf32>
    %cst_12 = arith.constant dense<0.000000e+00> : vector<256x8xf32>
    %38 = tpu.matmul %35, %37, %cst_12 {dimension_numbers = #tpu.dot_dimension_numbers<[1], [0], [0], [1], [0, 0, 1, 1], [], []>} : vector<256x8xf32>, vector<8x8xf32>, vector<256x8xf32> -> vector<256x8xf32>
    %39 = arith.addf %33, %38 : vector<256x8xf32>
    %40 = vector.extract_strided_slice %1 {offsets = [2, 0, 0], sizes = [16, 16, 8], strides = [1, 1, 1]} : vector<18x18x8xf32> to vector<16x16x8xf32>
    %41 = vector.shape_cast %40 : vector<16x16x8xf32> to vector<256x8xf32>
    %42 = vector.extract_strided_slice %2 {offsets = [2, 0, 0, 0], sizes = [1, 1, 8, 8], strides = [1, 1, 1, 1]} : vector<3x3x8x8xf32> to vector<1x1x8x8xf32>
    %43 = vector.shape_cast %42 : vector<1x1x8x8xf32> to vector<8x8xf32>
    %cst_13 = arith.constant dense<0.000000e+00> : vector<256x8xf32>
    %44 = tpu.matmul %41, %43, %cst_13 {dimension_numbers = #tpu.dot_dimension_numbers<[1], [0], [0], [1], [0, 0, 1, 1], [], []>} : vector<256x8xf32>, vector<8x8xf32>, vector<256x8xf32> -> vector<256x8xf32>
    %45 = arith.addf %39, %44 : vector<256x8xf32>
    %46 = vector.extract_strided_slice %1 {offsets = [2, 1, 0], sizes = [16, 16, 8], strides = [1, 1, 1]} : vector<18x18x8xf32> to vector<16x16x8xf32>
    %47 = vector.shape_cast %46 : vector<16x16x8xf32> to vector<256x8xf32>
    %48 = vector.extract_strided_slice %2 {offsets = [2, 1, 0, 0], sizes = [1, 1, 8, 8], strides = [1, 1, 1, 1]} : vector<3x3x8x8xf32> to vector<1x1x8x8xf32>
    %49 = vector.shape_cast %48 : vector<1x1x8x8xf32> to vector<8x8xf32>
    %cst_14 = arith.constant dense<0.000000e+00> : vector<256x8xf32>
    %50 = tpu.matmul %47, %49, %cst_14 {dimension_numbers = #tpu.dot_dimension_numbers<[1], [0], [0], [1], [0, 0, 1, 1], [], []>} : vector<256x8xf32>, vector<8x8xf32>, vector<256x8xf32> -> vector<256x8xf32>
    %51 = arith.addf %45, %50 : vector<256x8xf32>
    %52 = vector.extract_strided_slice %1 {offsets = [2, 2, 0], sizes = [16, 16, 8], strides = [1, 1, 1]} : vector<18x18x8xf32> to vector<16x16x8xf32>
    %53 = vector.shape_cast %52 : vector<16x16x8xf32> to vector<256x8xf32>
    %54 = vector.extract_strided_slice %2 {offsets = [2, 2, 0, 0], sizes = [1, 1, 8, 8], strides = [1, 1, 1, 1]} : vector<3x3x8x8xf32> to vector<1x1x8x8xf32>
    %55 = vector.shape_cast %54 : vector<1x1x8x8xf32> to vector<8x8xf32>
    %cst_15 = arith.constant dense<0.000000e+00> : vector<256x8xf32>
    %56 = tpu.matmul %53, %55, %cst_15 {dimension_numbers = #tpu.dot_dimension_numbers<[1], [0], [0], [1], [0, 0, 1, 1], [], []>} : vector<256x8xf32>, vector<8x8xf32>, vector<256x8xf32> -> vector<256x8xf32>
    %57 = arith.addf %51, %56 : vector<256x8xf32>
    %c0_16 = arith.constant 0 : index
    %c0_17 = arith.constant 0 : index
    %58 = vector.load %arg4[%c0_16, %c0_17] : memref<1x8xf32, #tpu.memory_space<vmem>>, vector<1x8xf32>
    %59 = vector.broadcast %58 : vector<1x8xf32> to vector<256x8xf32>
    %60 = arith.mulf %57, %59 : vector<256x8xf32>
    %c0_18 = arith.constant 0 : index
    %c0_19 = arith.constant 0 : index
    %61 = vector.load %arg5[%c0_18, %c0_19] : memref<1x8xf32, #tpu.memory_space<vmem>>, vector<1x8xf32>
    %62 = vector.broadcast %61 : vector<1x8xf32> to vector<256x8xf32>
    %63 = arith.addf %60, %62 : vector<256x8xf32>
    %cst_20 = arith.constant 0.000000e+00 : f32
    %64 = vector.broadcast %cst_20 : f32 to vector<256x8xf32>
    %65 = arith.maximumf %63, %64 : vector<256x8xf32>
    %66 = vector.shape_cast %65 : vector<256x8xf32> to vector<16x16x8xf32>
    %c0_21 = arith.constant 0 : index
    %c0_22 = arith.constant 0 : index
    %c0_23 = arith.constant 0 : index
    %c0_24 = arith.constant 0 : index
    %67 = vector.load %arg6[%c0_21, %c0_22, %c0_23, %c0_24] : memref<1x16x16x8xf32, #tpu.memory_space<vmem>>, vector<1x16x16x8xf32>
    %68 = vector.shape_cast %67 : vector<1x16x16x8xf32> to vector<16x16x8xf32>
    %69 = vector.shape_cast %66 : vector<16x16x8xf32> to vector<1x16x16x8xf32>
    tpu.vector_store %arg6[%c0_21, %c0_22, %c0_23, %c0_24], %69 {strides = array<i32>} : memref<1x16x16x8xf32, #tpu.memory_space<vmem>>, vector<1x16x16x8xf32>,
    return
  }
  func.func @transform_0(%arg0: i32, %arg1: i32) -> (i32, i32, i32, i32) {
    %c0_i32 = arith.constant 0 : i32
    %c0_i32_0 = arith.constant 0 : i32
    %c0_i32_1 = arith.constant 0 : i32
    %c0_i32_2 = arith.constant 0 : i32
    return %arg0, %c0_i32, %c0_i32_0, %c0_i32_1 : i32, i32, i32, i32
  }
  func.func @transform_1(%arg0: i32, %arg1: i32) -> (i32, i32, i32, i32) {
    %c0_i32 = arith.constant 0 : i32
    %c0_i32_0 = arith.constant 0 : i32
    %c0_i32_1 = arith.constant 0 : i32
    %c0_i32_2 = arith.constant 0 : i32
    return %c0_i32, %c0_i32_0, %c0_i32_1, %arg1 : i32, i32, i32, i32
  }
  func.func @transform_2(%arg0: i32, %arg1: i32) -> (i32, i32) {
    %c0_i32 = arith.constant 0 : i32
    %c0_i32_0 = arith.constant 0 : i32
    return %c0_i32, %arg1 : i32, i32
  }
  func.func @transform_3(%arg0: i32, %arg1: i32) -> (i32, i32) {
    %c0_i32 = arith.constant 0 : i32
    %c0_i32_0 = arith.constant 0 : i32
    return %c0_i32, %arg1 : i32, i32
  }
  func.func @transform_4(%arg0: i32, %arg1: i32) -> (i32, i32, i32, i32) {
    %c0_i32 = arith.constant 0 : i32
    %c0_i32_0 = arith.constant 0 : i32
    %c0_i32_1 = arith.constant 0 : i32
    return %arg0, %c0_i32, %c0_i32_0, %arg1 : i32, i32, i32, i32
  }
}

</mosaic_0001>

<llo_original>
// kernel: tpu_custom_call.1
$region0: #{tpu_custom_call.1}
  #allocation0 [shape = 'u32[]', space=smem, size = 0x4, offset = 0x4, fixed_abs, tag = 'smem constant byte address 0x4 - core index']
  #allocation1 [shape = 'u32[144,128]{1,0:T(1,128)}', space=vmem, size = 0x12000, scoped, tag = 'internal scratch']
  %s0 = inlined_call_operand.vmem [shape: f32[2,18,18,8], index: 0, kind: input, shape index: {}]
  %s1 = inlined_call_operand.vmem [shape: f32[3,3,8,8], index: 1, kind: input, shape index: {}]
  %s2 = inlined_call_operand.vmem [shape: f32[1,8], index: 2, kind: input, shape index: {}]
  %s3 = inlined_call_operand.vmem [shape: f32[1,8], index: 3, kind: input, shape index: {}]
  %s4 = inlined_call_operand.vmem [shape: f32[2,16,16,8], index: 4, kind: output, shape index: {}]
  %s5 = sld [smem:[#allocation0]]
  $region49: #{tpu_custom_call.1} parent=0
    _
  %s7 = ssub.s32 1, %s5
  %s8 = scalar_select 0, %s7, %s5
  loop: start=0, step=1, limit=4
  $region2: #{tpu_custom_call.1} parent=0 // loop_pre_header
    _
  $region3: #{tpu_custom_call.1} parent=0 // loop_header
    %s10 = sphi 0, %s14
    %p11 = scmp.ge.s32.totalorder %s10, 4
    %s17 = sphi 0, %s29
    %s18 = sphi 0, %s25
    %s19 = sphi 0, %s17
    %s20 = sphi 0, %s18
    %s21 = sphi 0, %s19
    %s22 = sphi 0, %s20
    %s32 = sphi 0, %s34
    %s35 = sphi 0, %s32
    %s36 = sphi 0, %s35
    %s52 = sphi 0, %s36
    %s58 = sphi 0, %s60
    %s61 = sphi 0, %s58
    %s62 = sphi 0, %s61
    %s78 = sphi 0, %s62
    %s84 = sphi 0, %s86
    %s87 = sphi 0, %s84
    %s88 = sphi 0, %s87
    %s104 = sphi 0, %s88
    %s110 = sphi 0, %s112
    %s113 = sphi 0, %s110
    %s114 = sphi 0, %s113
    %s130 = sphi 0, %s114
    %s138 = sphi 0, %s140
    %s141 = sphi 0, %s138
    %s142 = sphi 0, %s141
    %s158 = sphi 0, %s142
  $region4: #{tpu_custom_call.1} parent=0 // loop_header_branch
    %13 = sbr.rel (%p11) target = $region8
  $region5: #{tpu_custom_call.1} parent=0 // loop_body
    %s15 = ssub.s32 %s10, 1
    %s16 = ssub.s32 %s10, 2
    %s23 = sadd.s32 1, %s18
    %p24 = scmp.ge.s32.totalorder %s23, 1
    %s25 = scalar_select %p24, 0, %s23
    %s26 = sadd.s32 1, %s17
    %s27 = scalar_select %p24, %s26, %s17
    %p28 = scmp.ge.s32.totalorder %s27, 2
    %s29 = scalar_select %p28, 0, %s27
    %s30 = ssub.s32 %s17, %s29
    %p31 = scmp.eq.s32.totalorder %s30, 0
    %s33 = sadd.s32 %s32, 1
    %s34 = scalar_select %p31, %s32, %s33
    %p37 = pneg %p31
    %p38 = scmp.eq.s32.totalorder %s10, 1
    %p39 = por %p37, %p38
    %p40 = scmp.ne.s32.totalorder %s32, %s35
    %p41 = scmp.eq.s32.totalorder %s10, 0
    %p42 = por %p40, %p41
    %p43 = scmp.ne.s32.totalorder %s32, %s35
    %p44 = scmp.eq.s32.totalorder %s15, 1
    %p45 = por %p43, %p44
    %p46 = scmp.ne.s32.totalorder %s35, %s36
    %p47 = scmp.eq.s32.totalorder %s15, 0
    %p48 = por %p46, %p47
    %p49 = scmp.ne.s32.totalorder %s35, %s36
    %p50 = scmp.eq.s32.totalorder %s16, 1
    %p51 = por %p49, %p50
    %p53 = scmp.ne.s32.totalorder %s36, %s52
    %p54 = scmp.eq.s32.totalorder %s16, 0
    %p55 = por %p53, %p54
    %s56 = ssub.s32 %s18, %s25
    %p57 = scmp.eq.s32.totalorder %s56, 0
    %s59 = sadd.s32 %s58, 1
    %s60 = scalar_select %p57, %s58, %s59
    %p63 = pneg %p57
    %p64 = scmp.eq.s32.totalorder %s10, 1
    %p65 = por %p63, %p64
    %p66 = scmp.ne.s32.totalorder %s58, %s61
    %p67 = scmp.eq.s32.totalorder %s10, 0
    %p68 = por %p66, %p67
    %p69 = scmp.ne.s32.totalorder %s58, %s61
    %p70 = scmp.eq.s32.totalorder %s15, 1
    %p71 = por %p69, %p70
    %p72 = scmp.ne.s32.totalorder %s61, %s62
    %p73 = scmp.eq.s32.totalorder %s15, 0
    %p74 = por %p72, %p73
    %p75 = scmp.ne.s32.totalorder %s61, %s62
    %p76 = scmp.eq.s32.totalorder %s16, 1
    %p77 = por %p75, %p76
    %p79 = scmp.ne.s32.totalorder %s62, %s78
    %p80 = scmp.eq.s32.totalorder %s16, 0
    %p81 = por %p79, %p80
    %s82 = ssub.s32 %s18, %s25
    %p83 = scmp.eq.s32.totalorder %s82, 0
    %s85 = sadd.s32 %s84, 1
    %s86 = scalar_select %p83, %s84, %s85
    %p89 = pneg %p83
    %p90 = scmp.eq.s32.totalorder %s10, 1
    %p91 = por %p89, %p90
    %p92 = scmp.ne.s32.totalorder %s84, %s87
    %p93 = scmp.eq.s32.totalorder %s10, 0
    %p94 = por %p92, %p93
    %p95 = scmp.ne.s32.totalorder %s84, %s87
    %p96 = scmp.eq.s32.totalorder %s15, 1
    %p97 = por %p95, %p96
    %p98 = scmp.ne.s32.totalorder %s87, %s88
    %p99 = scmp.eq.s32.totalorder %s15, 0
    %p100 = por %p98, %p99
    %p101 = scmp.ne.s32.totalorder %s87, %s88
    %p102 = scmp.eq.s32.totalorder %s16, 1
    %p103 = por %p101, %p102
    %p105 = scmp.ne.s32.totalorder %s88, %s104
    %p106 = scmp.eq.s32.totalorder %s16, 0
    %p107 = por %p105, %p106
    %s108 = ssub.s32 %s18, %s25
    %p109 = scmp.eq.s32.totalorder %s108, 0
    %s111 = sadd.s32 %s110, 1
    %s112 = scalar_select %p109, %s110, %s111
    %p115 = pneg %p109
    %p116 = scmp.eq.s32.totalorder %s10, 1
    %p117 = por %p115, %p116
    %p118 = scmp.ne.s32.totalorder %s110, %s113
    %p119 = scmp.eq.s32.totalorder %s10, 0
    %p120 = por %p118, %p119
    %p121 = scmp.ne.s32.totalorder %s110, %s113
    %p122 = scmp.eq.s32.totalorder %s15, 1
    %p123 = por %p121, %p122
    %p124 = scmp.ne.s32.totalorder %s113, %s114
    %p125 = scmp.eq.s32.totalorder %s15, 0
    %p126 = por %p124, %p125
    %p127 = scmp.ne.s32.totalorder %s113, %s114
    %p128 = scmp.eq.s32.totalorder %s16, 1
    %p129 = por %p127, %p128
    %p131 = scmp.ne.s32.totalorder %s114, %s130
    %p132 = scmp.eq.s32.totalorder %s16, 0
    %p133 = por %p131, %p132
    %s134 = ssub.s32 %s17, %s29
    %s135 = ssub.s32 %s18, %s25
    %s136 = sor.u32 %s134, %s135
    %p137 = scmp.eq.s32.totalorder %s136, 0
    %s139 = sadd.s32 %s138, 1
    %s140 = scalar_select %p137, %s138, %s139
    %p143 = pneg %p137
    %p144 = scmp.eq.s32.totalorder %s10, 1
    %p145 = por %p143, %p144
    %p146 = scmp.ne.s32.totalorder %s138, %s141
    %p147 = scmp.eq.s32.totalorder %s10, 0
    %p148 = por %p146, %p147
    %p149 = scmp.ne.s32.totalorder %s138, %s141
    %p150 = scmp.eq.s32.totalorder %s15, 1
    %p151 = por %p149, %p150
    %p152 = scmp.ne.s32.totalorder %s141, %s142
    %p153 = scmp.eq.s32.totalorder %s15, 0
    %p154 = por %p152, %p153
    %p155 = scmp.ne.s32.totalorder %s141, %s142
    %p156 = scmp.eq.s32.totalorder %s16, 1
    %p157 = por %p155, %p156
    %p159 = scmp.ne.s32.totalorder %s142, %s158
    %p160 = scmp.eq.s32.totalorder %s16, 0
    %p161 = por %p159, %p160
    %p162 = scmp.le.s32.totalorder 1, %s10
    %p163 = scmp.lt.s32.totalorder %s10, 3
    %p164 = pnand %p162, %p163
    %p165 = pneg %p164
    // Predicated region
    $region9: #{tpu_custom_call.1} parent=5 // pred_check
      _
    $region10: #{tpu_custom_call.1} parent=5 // pred_check_branch
      %167 = sbr.rel (%p164) target = $region12
    $region11: #{tpu_custom_call.1} parent=5 // pred_region
      %s168 = ssub.s32 %s10, 1
      // Predicated region
      $region13: #{tpu_custom_call.1} parent=11 // pred_check
        %p169 = pneg %p74
      $region14: #{tpu_custom_call.1} parent=11 // pred_check_branch
        %171 = sbr.rel (%p169) target = $region16
      $region15: #{tpu_custom_call.1} parent=11 // pred_region
        %p172 = scmp.lt.s32.totalorder %s20, 0
        %s173 = scalar_select %p172, %s20, 0
        %s174 = smul.addr %s173, 8
        %s175 = scalar_lea.vmem %s1, %s174
      $region16: #{tpu_custom_call.1} parent=11 // pred_fallthru
        _
      // Predicated region
      $region17: #{tpu_custom_call.1} parent=11 // pred_check
        %p176 = pneg %p100
      $region18: #{tpu_custom_call.1} parent=11 // pred_check_branch
        %178 = sbr.rel (%p176) target = $region20
      $region19: #{tpu_custom_call.1} parent=11 // pred_region
        %p179 = scmp.lt.s32.totalorder %s20, 0
        %s180 = scalar_select %p179, %s20, 0
        %s181 = scalar_lea.vmem %s2, %s180
      $region20: #{tpu_custom_call.1} parent=11 // pred_fallthru
        _
      // Predicated region
      $region21: #{tpu_custom_call.1} parent=11 // pred_check
        %p182 = pneg %p126
      $region22: #{tpu_custom_call.1} parent=11 // pred_check_branch
        %184 = sbr.rel (%p182) target = $region24
      $region23: #{tpu_custom_call.1} parent=11 // pred_region
        %p185 = scmp.lt.s32.totalorder %s20, 0
        %s186 = scalar_select %p185, %s20, 0
        %s187 = scalar_lea.vmem %s3, %s186
      $region24: #{tpu_custom_call.1} parent=11 // pred_fallthru
        _
    $region12: #{tpu_custom_call.1} parent=5 // pred_fallthru
      _
    %p188 = scmp.lt.s32.totalorder %s10, 2
    // Predicated region
    $region25: #{tpu_custom_call.1} parent=5 // pred_check
      %p189 = pneg %p188
    $region26: #{tpu_custom_call.1} parent=5 // pred_check_branch
      %191 = sbr.rel (%p189) target = $region28
    $region27: #{tpu_custom_call.1} parent=5 // pred_region
      // Predicated region
      $region29: #{tpu_custom_call.1} parent=27 // pred_check
        %p192 = pneg %p42
      $region30: #{tpu_custom_call.1} parent=27 // pred_check_branch
        %194 = sbr.rel (%p192) target = $region32
      $region31: #{tpu_custom_call.1} parent=27 // pred_region
        %p195 = scmp.lt.s32.totalorder %s17, 1
        %s196 = scalar_select %p195, %s17, 1
        %s197 = smul.addr %s196, 54
        %s198 = smul.addr %s197, 8
        %s199 = scalar_lea.vmem %s0, %s198
      $region32: #{tpu_custom_call.1} parent=27 // pred_fallthru
        _
    $region28: #{tpu_custom_call.1} parent=5 // pred_fallthru
      _
    %p200 = scmp.le.s32.totalorder 1, %s10
    %p201 = scmp.lt.s32.totalorder %s10, 3
    %p202 = pnand %p200, %p201
    %p203 = pneg %p202
    // Predicated region
    $region33: #{tpu_custom_call.1} parent=5 // pred_check
      _
    $region34: #{tpu_custom_call.1} parent=5 // pred_check_branch
      %205 = sbr.rel (%p202) target = $region36
    $region35: #{tpu_custom_call.1} parent=5 // pred_region
      %s206 = ssub.s32 %s10, 1
      %p207 = scmp.lt.s32.totalorder %s19, 1
      %s208 = scalar_select %p207, %s19, 1
      %s209 = smul.addr %s208, 54
      %s210 = smul.addr %s209, 8
      %s211 = scalar_lea.vmem %s0, %s210
      %p212 = pneg %p48
      %p213 = pneg %p45
      %p214 = scmp.lt.s32.totalorder %s20, 0
      %s215 = scalar_select %p214, %s20, 0
      %s216 = smul.addr %s215, 8
      %s217 = scalar_lea.vmem %s1, %s216
      %p218 = pneg %p74
      %p219 = pneg %p71
      %p220 = scmp.lt.s32.totalorder %s20, 0
      %s221 = scalar_select %p220, %s20, 0
      %s222 = scalar_lea.vmem %s2, %s221
      %p223 = pneg %p100
      %p224 = pneg %p97
      %p225 = scmp.lt.s32.totalorder %s20, 0
      %s226 = scalar_select %p225, %s20, 0
      %s227 = scalar_lea.vmem %s3, %s226
      %p228 = pneg %p126
      %p229 = pneg %p123
      %p230 = pneg %p154
      %p231 = pneg %p151
      %p232 = scmp.lt.s32.totalorder %s19, 1
      %s233 = scalar_select %p232, %s19, 1
      %p234 = scmp.lt.s32.totalorder %s20, 0
      %s235 = scalar_select %p234, %s20, 0
      %s236 = smul.addr %s233, 32
      %s237 = sadd.s32 %s235, %s236
      %s238 = smul.addr %s237, 8
      %s239 = scalar_lea.vmem %s4, %s238
      %p240 = scmp.lt.s32.totalorder %s19, 1
      %s241 = scalar_select %p240, %s19, 1
      %s242 = smul.addr %s241, 54
      %s243 = smul.addr %s242, 8
      %s244 = scalar_lea.vmem %s0, %s243
      %p245 = scmp.lt.s32.totalorder %s20, 0
      %s246 = scalar_select %p245, %s20, 0
      %s247 = smul.addr %s246, 8
      %s248 = scalar_lea.vmem %s1, %s247
      %p249 = scmp.lt.s32.totalorder %s20, 0
      %s250 = scalar_select %p249, %s20, 0
      %s251 = scalar_lea.vmem %s2, %s250
      %p252 = scmp.lt.s32.totalorder %s20, 0
      %s253 = scalar_select %p252, %s20, 0
      %s254 = scalar_lea.vmem %s3, %s253
      %p255 = scmp.lt.s32.totalorder %s19, 1
      %s256 = scalar_select %p255, %s19, 1
      %p257 = scmp.lt.s32.totalorder %s20, 0
      %s258 = scalar_select %p257, %s20, 0
      %s259 = smul.addr %s256, 32
      %s260 = sadd.s32 %s258, %s259
      %s261 = smul.addr %s260, 8
      %s262 = scalar_lea.vmem %s4, %s261
      %v263 = vld [vmem:[%s244] sm:$0xff]
      %v264 = vld [vmem:[%s244 + $0x8] sm:$0xff]
      %v265 = vld [vmem:[%s244 + $0x10] sm:$0x3]
      %v266 = vld [vmem:[%s244 + $0x18] sm:$0xff]
      %v267 = vld [vmem:[%s244 + $0x20] sm:$0xff]
      %v268 = vld [vmem:[%s244 + $0x28] sm:$0x3]
      %v269 = vld [vmem:[%s244 + $0x30] sm:$0xff]
      %v270 = vld [vmem:[%s244 + $0x38] sm:$0xff]
      %v271 = vld [vmem:[%s244 + $0x40] sm:$0x3]
      %v272 = vld [vmem:[%s244 + $0x48] sm:$0xff]
      %v273 = vld [vmem:[%s244 + $0x50] sm:$0xff]
      %v274 = vld [vmem:[%s244 + $0x58] sm:$0x3]
      %v275 = vld [vmem:[%s244 + $0x60] sm:$0xff]
      %v276 = vld [vmem:[%s244 + $0x68] sm:$0xff]
      %v277 = vld [vmem:[%s244 + $0x70] sm:$0x3]
      %v278 = vld [vmem:[%s244 + $0x78] sm:$0xff]
      %v279 = vld [vmem:[%s244 + $0x80] sm:$0xff]
      %v280 = vld [vmem:[%s244 + $0x88] sm:$0x3]
      %v281 = vld [vmem:[%s244 + $0x90] sm:$0xff]
      %v282 = vld [vmem:[%s244 + $0x98] sm:$0xff]
      %v283 = vld [vmem:[%s244 + $0xa0] sm:$0x3]
      %v284 = vld [vmem:[%s244 + $0xa8] sm:$0xff]
      %v285 = vld [vmem:[%s244 + $0xb0] sm:$0xff]
      %v286 = vld [vmem:[%s244 + $0xb8] sm:$0x3]
      %v287 = vld [vmem:[%s244 + $0xc0] sm:$0xff]
      %v288 = vld [vmem:[%s244 + $0xc8] sm:$0xff]
      %v289 = vld [vmem:[%s244 + $0xd0] sm:$0x3]
      %v290 = vld [vmem:[%s244 + $0xd8] sm:$0xff]
      %v291 = vld [vmem:[%s244 + $0xe0] sm:$0xff]
      %v292 = vld [vmem:[%s244 + $0xe8] sm:$0x3]
      %v293 = vld [vmem:[%s244 + $0xf0] sm:$0xff]
      %v294 = vld [vmem:[%s244 + $0xf8] sm:$0xff]
      %v295 = vld [vmem:[%s244 + $0x100] sm:$0x3]
      %v296 = vld [vmem:[%s244 + $0x108] sm:$0xff]
      %v297 = vld [vmem:[%s244 + $0x110] sm:$0xff]
      %v298 = vld [vmem:[%s244 + $0x118] sm:$0x3]
      %v299 = vld [vmem:[%s244 + $0x120] sm:$0xff]
      %v300 = vld [vmem:[%s244 + $0x128] sm:$0xff]
      %v301 = vld [vmem:[%s244 + $0x130] sm:$0x3]
      %v302 = vld [vmem:[%s244 + $0x138] sm:$0xff]
      %v303 = vld [vmem:[%s244 + $0x140] sm:$0xff]
      %v304 = vld [vmem:[%s244 + $0x148] sm:$0x3]
      %v305 = vld [vmem:[%s244 + $0x150] sm:$0xff]
      %v306 = vld [vmem:[%s244 + $0x158] sm:$0xff]
      %v307 = vld [vmem:[%s244 + $0x160] sm:$0x3]
      %v308 = vld [vmem:[%s244 + $0x168] sm:$0xff]
      %v309 = vld [vmem:[%s244 + $0x170] sm:$0xff]
      %v310 = vld [vmem:[%s244 + $0x178] sm:$0x3]
      %v311 = vld [vmem:[%s244 + $0x180] sm:$0xff]
      %v312 = vld [vmem:[%s244 + $0x188] sm:$0xff]
      %v313 = vld [vmem:[%s244 + $0x190] sm:$0x3]
      %v314 = vld [vmem:[%s244 + $0x198] sm:$0xff]
      %v315 = vld [vmem:[%s244 + $0x1a0] sm:$0xff]
      %v316 = vld [vmem:[%s244 + $0x1a8] sm:$0x3]
      %v317 = vld [vmem:[%s248] sm:$0xff]
      %v318 = vld [vmem:[%s248 + $0x8] sm:$0xff]
      %v319 = vld [vmem:[%s248 + $0x10] sm:$0xff]
      %v320 = vld [vmem:[%s248 + $0x18] sm:$0xff]
      %v321 = vld [vmem:[%s248 + $0x20] sm:$0xff]
      %v322 = vld [vmem:[%s248 + $0x28] sm:$0xff]
      %v323 = vld [vmem:[%s248 + $0x30] sm:$0xff]
      %v324 = vld [vmem:[%s248 + $0x38] sm:$0xff]
      %v325 = vld [vmem:[%s248 + $0x40] sm:$0xff]
      %vm374 = vcmask 1046528
      %v375 = vrot.slane %v263, 1
      %v376 = vrot.slane %v264, 1
      %v377 = vsel %vm374, %v375, %v376
      %v378 = vrot.slane %v265, 1
      %v379 = vsel %vm374, %v376, %v378
      %v380 = vrot.slane %v266, 1
      %v381 = vrot.slane %v267, 1
      %v382 = vsel %vm374, %v380, %v381
      %v383 = vrot.slane %v268, 1
      %v384 = vsel %vm374, %v381, %v383
      %v385 = vrot.slane %v269, 1
      %v386 = vrot.slane %v270, 1
      %v387 = vsel %vm374, %v385, %v386
      %v388 = vrot.slane %v271, 1
      %v389 = vsel %vm374, %v386, %v388
      %v390 = vrot.slane %v272, 1
      %v391 = vrot.slane %v273, 1
      %v392 = vsel %vm374, %v390, %v391
      %v393 = vrot.slane %v274, 1
      %v394 = vsel %vm374, %v391, %v393
      %v395 = vrot.slane %v275, 1
      %v396 = vrot.slane %v276, 1
      %v397 = vsel %vm374, %v395, %v396
      %v398 = vrot.slane %v277, 1
      %v399 = vsel %vm374, %v396, %v398
      %v400 = vrot.slane %v278, 1
      %v401 = vrot.slane %v279, 1
      %v402 = vsel %vm374, %v400, %v401
      %v403 = vrot.slane %v280, 1
      %v404 = vsel %vm374, %v401, %v403
      %v405 = vrot.slane %v281, 1
      %v406 = vrot.slane %v282, 1
      %v407 = vsel %vm374, %v405, %v406
      %v408 = vrot.slane %v283, 1
      %v409 = vsel %vm374, %v406, %v408
      %v410 = vrot.slane %v284, 1
      %v411 = vrot.slane %v285, 1
      %v412 = vsel %vm374, %v410, %v411
      %v413 = vrot.slane %v286, 1
      %v414 = vsel %vm374, %v411, %v413
      %v415 = vrot.slane %v287, 1
      %v416 = vrot.slane %v288, 1
      %v417 = vsel %vm374, %v415, %v416
      %v418 = vrot.slane %v289, 1
      %v419 = vsel %vm374, %v416, %v418
      %v420 = vrot.slane %v290, 1
      %v421 = vrot.slane %v291, 1
      %v422 = vsel %vm374, %v420, %v421
      %v423 = vrot.slane %v292, 1
      %v424 = vsel %vm374, %v421, %v423
      %v425 = vrot.slane %v293, 1
      %v426 = vrot.slane %v294, 1
      %v427 = vsel %vm374, %v425, %v426
      %v428 = vrot.slane %v295, 1
      %v429 = vsel %vm374, %v426, %v428
      %v430 = vrot.slane %v296, 1
      %v431 = vrot.slane %v297, 1
      %v432 = vsel %vm374, %v430, %v431
      %v433 = vrot.slane %v298, 1
      %v434 = vsel %vm374, %v431, %v433
      %v435 = vrot.slane %v299, 1
      %v436 = vrot.slane %v300, 1
      %v437 = vsel %vm374, %v435, %v436
      %v438 = vrot.slane %v301, 1
      %v439 = vsel %vm374, %v436, %v438
      %v440 = vrot.slane %v302, 1
      %v441 = vrot.slane %v303, 1
      %v442 = vsel %vm374, %v440, %v441
      %v443 = vrot.slane %v304, 1
      %v444 = vsel %vm374, %v441, %v443
      %v445 = vrot.slane %v305, 1
      %v446 = vrot.slane %v306, 1
      %v447 = vsel %vm374, %v445, %v446
      %v448 = vrot.slane %v307, 1
      %v449 = vsel %vm374, %v446, %v448
      %v450 = vrot.slane %v308, 1
      %v451 = vrot.slane %v309, 1
      %v452 = vsel %vm374, %v450, %v451
      %v453 = vrot.slane %v310, 1
      %v454 = vsel %vm374, %v451, %v453
      %vm455 = vcmask 64512
      %v456 = vsel %vm455, %v377, 0
      %v458 = vsel %vm455, %v379, 0
      %v460 = vsel %vm455, %v382, 0
      %v462 = vsel %vm455, %v384, 0
      %v464 = vsel %vm455, %v387, 0
      %v466 = vsel %vm455, %v389, 0
      %v468 = vsel %vm455, %v392, 0
      %v470 = vsel %vm455, %v394, 0
      %v472 = vsel %vm455, %v397, 0
      %v474 = vsel %vm455, %v399, 0
      %v476 = vsel %vm455, %v402, 0
      %v478 = vsel %vm455, %v404, 0
      %v480 = vsel %vm455, %v407, 0
      %v482 = vsel %vm455, %v409, 0
      %v484 = vsel %vm455, %v412, 0
      %v486 = vsel %vm455, %v414, 0
      %v488 = vsel %vm455, %v417, 0
      %v490 = vsel %vm455, %v419, 0
      %v492 = vsel %vm455, %v422, 0
      %v494 = vsel %vm455, %v424, 0
      %v496 = vsel %vm455, %v427, 0
      %v498 = vsel %vm455, %v429, 0
      %v500 = vsel %vm455, %v432, 0
      %v502 = vsel %vm455, %v434, 0
      %v504 = vsel %vm455, %v437, 0
      %v506 = vsel %vm455, %v439, 0
      %v508 = vsel %vm455, %v442, 0
      %v510 = vsel %vm455, %v444, 0
      %v512 = vsel %vm455, %v447, 0
      %v514 = vsel %vm455, %v449, 0
      %v516 = vsel %vm455, %v452, 0
      %v518 = vsel %vm455, %v454, 0
      %520 = vmatprep.subr.mxu0 0.0
      %521 = vmatpush1.msra.mxu0 %v318
      %522 = vmatprep.subr.mxu0 0.0
      %523 = vmatpush1.msra.mxu0 0.0
      %524 = vmatprep.subr.mxu0 0.0
      %525 = vmatpush1.msra.mxu0 0.0
      %526 = vmatprep.subr.mxu0 0.0
      %527 = vmatpush1.msra.mxu0 0.0
      %528 = vmatprep.subr.mxu0 0.0
      %529 = vmatpush1.msra.mxu0 0.0
      %530 = vmatprep.subr.mxu0 0.0
      %531 = vmatpush1.msra.mxu0 0.0
      %532 = vmatprep.subr.mxu0 0.0
      %533 = vmatpush1.msra.mxu0 0.0
      %534 = vmatprep.subr.mxu0 0.0
      %535 = vmatpush1.msra.mxu0 0.0
      %536 = vmatprep.subr.mxu0 0.0
      %537 = vmatpush1.msra.mxu0 0.0
      %538 = vmatprep.subr.mxu0 0.0
      %539 = vmatpush1.msra.mxu0 0.0
      %540 = vmatprep.subr.mxu0 0.0
      %541 = vmatpush1.msra.mxu0 0.0
      %542 = vmatprep.subr.mxu0 0.0
      %543 = vmatpush1.msra.mxu0 0.0
      %544 = vmatprep.subr.mxu0 0.0
      %545 = vmatpush1.msra.mxu0 0.0
      %546 = vmatprep.subr.mxu0 0.0
      %547 = vmatpush1.msra.mxu0 0.0
      %548 = vmatprep.subr.mxu0 0.0
      %549 = vmatpush1.msra.mxu0 0.0
      %550 = vmatprep.subr.mxu0 0.0
      %551 = vmatpush1.msra.mxu0 0.0
      %552 = vmatprep.subr.mxu0 0.0
      %553 = vmatpush1.msra.mxu0 0.0
      %554 = vmatprep.subr.mxu0 0.0
      %555 = vmatpush1.msra.mxu0 0.0
      %556 = vmatprep.subr.mxu0 0.0
      %557 = vmatpush1.msra.mxu0 0.0
      %558 = vmatprep.subr.mxu0 0.0
      %559 = vmatpush1.msra.mxu0 0.0
      %560 = vmatprep.subr.mxu0 0.0
      %561 = vmatpush1.msra.mxu0 0.0
      %562 = vmatprep.subr.mxu0 0.0
      %563 = vmatpush1.msra.mxu0 0.0
      %564 = vmatprep.subr.mxu0 0.0
      %565 = vmatpush1.msra.mxu0 0.0
      %566 = vmatprep.subr.mxu0 0.0
      %567 = vmatpush1.msra.mxu0 0.0
      %568 = vmatprep.subr.mxu0 0.0
      %569 = vmatpush1.msra.mxu0 0.0
      %570 = vmatprep.subr.mxu0 0.0
      %571 = vmatpush1.msra.mxu0 0.0
      %572 = vmatprep.subr.mxu0 0.0
      %573 = vmatpush1.msra.mxu0 0.0
      %574 = vmatprep.subr.mxu0 0.0
      %575 = vmatpush1.msra.mxu0 0.0
      %576 = vmatprep.subr.mxu0 0.0
      %577 = vmatpush1.msra.mxu0 0.0
      %578 = vmatprep.subr.mxu0 0.0
      %579 = vmatpush1.msra.mxu0 0.0
      %580 = vmatprep.subr.mxu0 0.0
      %581 = vmatpush1.msra.mxu0 0.0
      %582 = vmatprep.subr.mxu0 0.0
      %583 = vmatpush1.msra.mxu0 0.0
      %584 = vmatprep.mubr.f32.mxu0 0.0
      %585 = vmatmul.mubr.f32.gmra.mrb[0].mxu0 %v456
      %v586 = vpop.f32.mrb[0].mxu0
      %v587 = vadd.f32 0.0, %v586
      %v588 = vpop.f32.mrb[0].mxu0
      %589 = vmatprep.mubr.f32.mxu0 0.0
      %590 = vmatmul.mubr.f32.gmra.mrb[0].mxu0 %v458
      %v591 = vpop.f32.mrb[0].mxu0
      %v592 = vadd.f32 0.0, %v591
      %v593 = vpop.f32.mrb[0].mxu0
      %594 = vmatprep.mubr.f32.mxu0 0.0
      %595 = vmatmul.mubr.f32.gmra.mrb[0].mxu0 %v460
      %v596 = vpop.f32.mrb[0].mxu0
      %v597 = vadd.f32 0.0, %v596
      %v598 = vpop.f32.mrb[0].mxu0
      %599 = vmatprep.mubr.f32.mxu0 0.0
      %600 = vmatmul.mubr.f32.gmra.mrb[0].mxu0 %v462
      %v601 = vpop.f32.mrb[0].mxu0
      %v602 = vadd.f32 0.0, %v601
      %v603 = vpop.f32.mrb[0].mxu0
      %604 = vmatprep.mubr.f32.mxu0 0.0
      %605 = vmatmul.mubr.f32.gmra.mrb[0].mxu0 %v464
      %v606 = vpop.f32.mrb[0].mxu0
      %v607 = vadd.f32 0.0, %v606
      %v608 = vpop.f32.mrb[0].mxu0
      %609 = vmatprep.mubr.f32.mxu0 0.0
      %610 = vmatmul.mubr.f32.gmra.mrb[0].mxu0 %v466
      %v611 = vpop.f32.mrb[0].mxu0
      %v612 = vadd.f32 0.0, %v611
      %v613 = vpop.f32.mrb[0].mxu0
      %614 = vmatprep.mubr.f32.mxu0 0.0
      %615 = vmatmul.mubr.f32.gmra.mrb[0].mxu0 %v468
      %v616 = vpop.f32.mrb[0].mxu0
      %v617 = vadd.f32 0.0, %v616
      %v618 = vpop.f32.mrb[0].mxu0
      %619 = vmatprep.mubr.f32.mxu0 0.0
      %620 = vmatmul.mubr.f32.gmra.mrb[0].mxu0 %v470
      %v621 = vpop.f32.mrb[0].mxu0
      %v622 = vadd.f32 0.0, %v621
      %v623 = vpop.f32.mrb[0].mxu0
      %624 = vmatprep.mubr.f32.mxu0 0.0
      %625 = vmatmul.mubr.f32.gmra.mrb[0].mxu0 %v472
      %v626 = vpop.f32.mrb[0].mxu0
      %v627 = vadd.f32 0.0, %v626
      %v628 = vpop.f32.mrb[0].mxu0
      %629 = vmatprep.mubr.f32.mxu0 0.0
      %630 = vmatmul.mubr.f32.gmra.mrb[0].mxu0 %v474
      %v631 = vpop.f32.mrb[0].mxu0
      %v632 = vadd.f32 0.0, %v631
      %v633 = vpop.f32.mrb[0].mxu0
      %634 = vmatprep.mubr.f32.mxu0 0.0
      %635 = vmatmul.mubr.f32.gmra.mrb[0].mxu0 %v476
      %v636 = vpop.f32.mrb[0].mxu0
      %v637 = vadd.f32 0.0, %v636
      %v638 = vpop.f32.mrb[0].mxu0
      %639 = vmatprep.mubr.f32.mxu0 0.0
      %640 = vmatmul.mubr.f32.gmra.mrb[0].mxu0 %v478
      %v641 = vpop.f32.mrb[0].mxu0
      %v642 = vadd.f32 0.0, %v641
      %v643 = vpop.f32.mrb[0].mxu0
      %644 = vmatprep.mubr.f32.mxu0 0.0
      %645 = vmatmul.mubr.f32.gmra.mrb[0].mxu0 %v480
      %v646 = vpop.f32.mrb[0].mxu0
      %v647 = vadd.f32 0.0, %v646
      %v648 = vpop.f32.mrb[0].mxu0
      %649 = vmatprep.mubr.f32.mxu0 0.0
      %650 = vmatmul.mubr.f32.gmra.mrb[0].mxu0 %v482
      %v651 = vpop.f32.mrb[0].mxu0
      %v652 = vadd.f32 0.0, %v651
      %v653 = vpop.f32.mrb[0].mxu0
      %654 = vmatprep.mubr.f32.mxu0 0.0
      %655 = vmatmul.mubr.f32.gmra.mrb[0].mxu0 %v484
      %v656 = vpop.f32.mrb[0].mxu0
      %v657 = vadd.f32 0.0, %v656
      %v658 = vpop.f32.mrb[0].mxu0
      %659 = vmatprep.mubr.f32.mxu0 0.0
      %660 = vmatmul.mubr.f32.gmra.mrb[0].mxu0 %v486
      %v661 = vpop.f32.mrb[0].mxu0
      %v662 = vadd.f32 0.0, %v661
      %v663 = vpop.f32.mrb[0].mxu0
      %664 = vmatprep.mubr.f32.mxu0 0.0
      %665 = vmatmul.mubr.f32.gmra.mrb[0].mxu0 %v488
      %v666 = vpop.f32.mrb[0].mxu0
      %v667 = vadd.f32 0.0, %v666
      %v668 = vpop.f32.mrb[0].mxu0
      %669 = vmatprep.mubr.f32.mxu0 0.0
      %670 = vmatmul.mubr.f32.gmra.mrb[0].mxu0 %v490
      %v671 = vpop.f32.mrb[0].mxu0
      %v672 = vadd.f32 0.0, %v671
      %v673 = vpop.f32.mrb[0].mxu0
      %674 = vmatprep.mubr.f32.mxu0 0.0
      %675 = vmatmul.mubr.f32.gmra.mrb[0].mxu0 %v492
      %v676 = vpop.f32.mrb[0].mxu0
      %v677 = vadd.f32 0.0, %v676
      %v678 = vpop.f32.mrb[0].mxu0
      %679 = vmatprep.mubr.f32.mxu0 0.0
      %680 = vmatmul.mubr.f32.gmra.mrb[0].mxu0 %v494
      %v681 = vpop.f32.mrb[0].mxu0
      %v682 = vadd.f32 0.0, %v681
      %v683 = vpop.f32.mrb[0].mxu0
      %684 = vmatprep.mubr.f32.mxu0 0.0
      %685 = vmatmul.mubr.f32.gmra.mrb[0].mxu0 %v496
      %v686 = vpop.f32.mrb[0].mxu0
      %v687 = vadd.f32 0.0, %v686
      %v688 = vpop.f32.mrb[0].mxu0
      %689 = vmatprep.mubr.f32.mxu0 0.0
      %690 = vmatmul.mubr.f32.gmra.mrb[0].mxu0 %v498
      %v691 = vpop.f32.mrb[0].mxu0
      %v692 = vadd.f32 0.0, %v691
      %v693 = vpop.f32.mrb[0].mxu0
      %694 = vmatprep.mubr.f32.mxu0 0.0
      %695 = vmatmul.mubr.f32.gmra.mrb[0].mxu0 %v500
      %v696 = vpop.f32.mrb[0].mxu0
      %v697 = vadd.f32 0.0, %v696
      %v698 = vpop.f32.mrb[0].mxu0
      %699 = vmatprep.mubr.f32.mxu0 0.0
      %700 = vmatmul.mubr.f32.gmra.mrb[0].mxu0 %v502
      %v701 = vpop.f32.mrb[0].mxu0
      %v702 = vadd.f32 0.0, %v701
      %v703 = vpop.f32.mrb[0].mxu0
      %704 = vmatprep.mubr.f32.mxu0 0.0
      %705 = vmatmul.mubr.f32.gmra.mrb[0].mxu0 %v504
      %v706 = vpop.f32.mrb[0].mxu0
      %v707 = vadd.f32 0.0, %v706
      %v708 = vpop.f32.mrb[0].mxu0
      %709 = vmatprep.mubr.f32.mxu0 0.0
      %710 = vmatmul.mubr.f32.gmra.mrb[0].mxu0 %v506
      %v711 = vpop.f32.mrb[0].mxu0
      %v712 = vadd.f32 0.0, %v711
      %v713 = vpop.f32.mrb[0].mxu0
      %714 = vmatprep.mubr.f32.mxu0 0.0
      %715 = vmatmul.mubr.f32.gmra.mrb[0].mxu0 %v508
      %v716 = vpop.f32.mrb[0].mxu0
      %v717 = vadd.f32 0.0, %v716
      %v718 = vpop.f32.mrb[0].mxu0
      %719 = vmatprep.mubr.f32.mxu0 0.0
      %720 = vmatmul.mubr.f32.gmra.mrb[0].mxu0 %v510
      %v721 = vpop.f32.mrb[0].mxu0
      %v722 = vadd.f32 0.0, %v721
      %v723 = vpop.f32.mrb[0].mxu0
      %724 = vmatprep.mubr.f32.mxu0 0.0
      %725 = vmatmul.mubr.f32.gmra.mrb[0].mxu0 %v512
      %v726 = vpop.f32.mrb[0].mxu0
      %v727 = vadd.f32 0.0, %v726
      %v728 = vpop.f32.mrb[0].mxu0
      %729 = vmatprep.mubr.f32.mxu0 0.0
      %730 = vmatmul.mubr.f32.gmra.mrb[0].mxu0 %v514
      %v731 = vpop.f32.mrb[0].mxu0
      %v732 = vadd.f32 0.0, %v731
      %v733 = vpop.f32.mrb[0].mxu0
      %734 = vmatprep.mubr.f32.mxu0 0.0
      %735 = vmatmul.mubr.f32.gmra.mrb[0].mxu0 %v516
      %v736 = vpop.f32.mrb[0].mxu0
      %v737 = vadd.f32 0.0, %v736
      %v738 = vpop.f32.mrb[0].mxu0
      %739 = vmatprep.mubr.f32.mxu0 0.0
      %740 = vmatmul.mubr.f32.gmra.mrb[0].mxu0 %v518
      %v741 = vpop.f32.mrb[0].mxu0
      %v742 = vadd.f32 0.0, %v741
      %v743 = vpop.f32.mrb[0].mxu0
      %744 = vdwg.mxu0
      %v745 = vsel %vm455, %v263, 0
      %v747 = vsel %vm455, %v264, 0
      %v749 = vsel %vm455, %v266, 0
      %v751 = vsel %vm455, %v267, 0
      %v753 = vsel %vm455, %v269, 0
      %v755 = vsel %vm455, %v270, 0
      %v757 = vsel %vm455, %v272, 0
      %v759 = vsel %vm455, %v273, 0
      %v761 = vsel %vm455, %v275, 0
      %v763 = vsel %vm455, %v276, 0
      %v765 = vsel %vm455, %v278, 0
      %v767 = vsel %vm455, %v279, 0
      %v769 = vsel %vm455, %v281, 0
      %v771 = vsel %vm455, %v282, 0
      %v773 = vsel %vm455, %v284, 0
      %v775 = vsel %vm455, %v285, 0
      %v777 = vsel %vm455, %v287, 0
      %v779 = vsel %vm455, %v288, 0
      %v781 = vsel %vm455, %v290, 0
      %v783 = vsel %vm455, %v291, 0
      %v785 = vsel %vm455, %v293, 0
      %v787 = vsel %vm455, %v294, 0
      %v789 = vsel %vm455, %v296, 0
      %v791 = vsel %vm455, %v297, 0
      %v793 = vsel %vm455, %v299, 0
      %v795 = vsel %vm455, %v300, 0
      %v797 = vsel %vm455, %v302, 0
      %v799 = vsel %vm455, %v303, 0
      %v801 = vsel %vm455, %v305, 0
      %v803 = vsel %vm455, %v306, 0
      %v805 = vsel %vm455, %v308, 0
      %v807 = vsel %vm455, %v309, 0
      %809 = vmatprep.subr.mxu0 0.0
      %810 = vmatpush1.msra.mxu0 %v317
      %811 = vmatprep.subr.mxu0 0.0
      %812 = vmatpush1.msra.mxu0 0.0
      %813 = vmatprep.subr.mxu0 0.0
      %814 = vmatpush1.msra.mxu0 0.0
      %815 = vmatprep.subr.mxu0 0.0
      %816 = vmatpush1.msra.mxu0 0.0
      %817 = vmatprep.subr.mxu0 0.0
      %818 = vmatpush1.msra.mxu0 0.0
      %819 = vmatprep.subr.mxu0 0.0
      %820 = vmatpush1.msra.mxu0 0.0
      %821 = vmatprep.subr.mxu0 0.0
      %822 = vmatpush1.msra.mxu0 0.0
      %823 = vmatprep.subr.mxu0 0.0
      %824 = vmatpush1.msra.mxu0 0.0
      %825 = vmatprep.subr.mxu0 0.0
      %826 = vmatpush1.msra.mxu0 0.0
      %827 = vmatprep.subr.mxu0 0.0
      %828 = vmatpush1.msra.mxu0 0.0
      %829 = vmatprep.subr.mxu0 0.0
      %830 = vmatpush1.msra.mxu0 0.0
      %831 = vmatprep.subr.mxu0 0.0
      %832 = vmatpush1.msra.mxu0 0.0
      %833 = vmatprep.subr.mxu0 0.0
      %834 = vmatpush1.msra.mxu0 0.0
      %835 = vmatprep.subr.mxu0 0.0
      %836 = vmatpush1.msra.mxu0 0.0
      %837 = vmatprep.subr.mxu0 0.0
      %838 = vmatpush1.msra.mxu0 0.0
      %839 = vmatprep.subr.mxu0 0.0
      %840 = vmatpush1.msra.mxu0 0.0
      %841 = vmatprep.subr.mxu0 0.0
      %842 = vmatpush1.msra.mxu0 0.0
      %843 = vmatprep.subr.mxu0 0.0
      %844 = vmatpush1.msra.mxu0 0.0
      %845 = vmatprep.subr.mxu0 0.0
      %846 = vmatpush1.msra.mxu0 0.0
      %847 = vmatprep.subr.mxu0 0.0
      %848 = vmatpush1.msra.mxu0 0.0
      %849 = vmatprep.subr.mxu0 0.0
      %850 = vmatpush1.msra.mxu0 0.0
      %851 = vmatprep.subr.mxu0 0.0
      %852 = vmatpush1.msra.mxu0 0.0
      %853 = vmatprep.subr.mxu0 0.0
      %854 = vmatpush1.msra.mxu0 0.0
      %855 = vmatprep.subr.mxu0 0.0
      %856 = vmatpush1.msra.mxu0 0.0
      %857 = vmatprep.subr.mxu0 0.0
      %858 = vmatpush1.msra.mxu0 0.0
      %859 = vmatprep.subr.mxu0 0.0
      %860 = vmatpush1.msra.mxu0 0.0
      %861 = vmatprep.subr.mxu0 0.0
      %862 = vmatpush1.msra.mxu0 0.0
      %863 = vmatprep.subr.mxu0 0.0
      %864 = vmatpush1.msra.mxu0 0.0
      %865 = vmatprep.subr.mxu0 0.0
      %866 = vmatpush1.msra.mxu0 0.0
      %867 = vmatprep.subr.mxu0 0.0
      %868 = vmatpush1.msra.mxu0 0.0
      %869 = vmatprep.subr.mxu0 0.0
      %870 = vmatpush1.msra.mxu0 0.0
      %871 = vmatprep.subr.mxu0 0.0
      %872 = vmatpush1.msra.mxu0 0.0
      %873 = vmatprep.mubr.f32.mxu0 0.0
      %874 = vmatmul.mubr.f32.gmra.mrb[0].mxu0 %v745
      %v875 = vpop.f32.mrb[0].mxu0
      %v876 = vadd.f32 %v587, %v875
      %v877 = vpop.f32.mrb[0].mxu0
      %878 = vmatprep.mubr.f32.mxu0 0.0
      %879 = vmatmul.mubr.f32.gmra.mrb[0].mxu0 %v747
      %v880 = vpop.f32.mrb[0].mxu0
      %v881 = vadd.f32 %v592, %v880
      %v882 = vpop.f32.mrb[0].mxu0
      %883 = vmatprep.mubr.f32.mxu0 0.0
      %884 = vmatmul.mubr.f32.gmra.mrb[0].mxu0 %v749
      %v885 = vpop.f32.mrb[0].mxu0
      %v886 = vadd.f32 %v597, %v885
      %v887 = vpop.f32.mrb[0].mxu0
      %888 = vmatprep.mubr.f32.mxu0 0.0
      %889 = vmatmul.mubr.f32.gmra.mrb[0].mxu0 %v751
      %v890 = vpop.f32.mrb[0].mxu0
      %v891 = vadd.f32 %v602, %v890
      %v892 = vpop.f32.mrb[0].mxu0
      %893 = vmatprep.mubr.f32.mxu0 0.0
      %894 = vmatmul.mubr.f32.gmra.mrb[0].mxu0 %v753
      %v895 = vpop.f32.mrb[0].mxu0
      %v896 = vadd.f32 %v607, %v895
      %v897 = vpop.f32.mrb[0].mxu0
      %898 = vmatprep.mubr.f32.mxu0 0.0
      %899 = vmatmul.mubr.f32.gmra.mrb[0].mxu0 %v755
      %v900 = vpop.f32.mrb[0].mxu0
      %v901 = vadd.f32 %v612, %v900
      %v902 = vpop.f32.mrb[0].mxu0
      %903 = vmatprep.mubr.f32.mxu0 0.0
      %904 = vmatmul.mubr.f32.gmra.mrb[0].mxu0 %v757
      %v905 = vpop.f32.mrb[0].mxu0
      %v906 = vadd.f32 %v617, %v905
      %v907 = vpop.f32.mrb[0].mxu0
      %908 = vmatprep.mubr.f32.mxu0 0.0
      %909 = vmatmul.mubr.f32.gmra.mrb[0].mxu0 %v759
      %v910 = vpop.f32.mrb[0].mxu0
      %v911 = vadd.f32 %v622, %v910
      %v912 = vpop.f32.mrb[0].mxu0
      %913 = vmatprep.mubr.f32.mxu0 0.0
      %914 = vmatmul.mubr.f32.gmra.mrb[0].mxu0 %v761
      %v915 = vpop.f32.mrb[0].mxu0
      %v916 = vadd.f32 %v627, %v915
      %v917 = vpop.f32.mrb[0].mxu0
      %918 = vmatprep.mubr.f32.mxu0 0.0
      %919 = vmatmul.mubr.f32.gmra.mrb[0].mxu0 %v763
      %v920 = vpop.f32.mrb[0].mxu0
      %v921 = vadd.f32 %v632, %v920
      %v922 = vpop.f32.mrb[0].mxu0
      %923 = vmatprep.mubr.f32.mxu0 0.0
      %924 = vmatmul.mubr.f32.gmra.mrb[0].mxu0 %v765
      %v925 = vpop.f32.mrb[0].mxu0
      %v926 = vadd.f32 %v637, %v925
      %v927 = vpop.f32.mrb[0].mxu0
      %928 = vmatprep.mubr.f32.mxu0 0.0
      %929 = vmatmul.mubr.f32.gmra.mrb[0].mxu0 %v767
      %v930 = vpop.f32.mrb[0].mxu0
      %v931 = vadd.f32 %v642, %v930
      %v932 = vpop.f32.mrb[0].mxu0
      %933 = vmatprep.mubr.f32.mxu0 0.0
      %934 = vmatmul.mubr.f32.gmra.mrb[0].mxu0 %v769
      %v935 = vpop.f32.mrb[0].mxu0
      %v936 = vadd.f32 %v647, %v935
      %v937 = vpop.f32.mrb[0].mxu0
      %938 = vmatprep.mubr.f32.mxu0 0.0
      %939 = vmatmul.mubr.f32.gmra.mrb[0].mxu0 %v771
      %v940 = vpop.f32.mrb[0].mxu0
      %v941 = vadd.f32 %v652, %v940
      %v942 = vpop.f32.mrb[0].mxu0
      %943 = vmatprep.mubr.f32.mxu0 0.0
      %944 = vmatmul.mubr.f32.gmra.mrb[0].mxu0 %v773
      %v945 = vpop.f32.mrb[0].mxu0
      %v946 = vadd.f32 %v657, %v945
      %v947 = vpop.f32.mrb[0].mxu0
      %948 = vmatprep.mubr.f32.mxu0 0.0
      %949 = vmatmul.mubr.f32.gmra.mrb[0].mxu0 %v775
      %v950 = vpop.f32.mrb[0].mxu0
      %v951 = vadd.f32 %v662, %v950
      %v952 = vpop.f32.mrb[0].mxu0
      %953 = vmatprep.mubr.f32.mxu0 0.0
      %954 = vmatmul.mubr.f32.gmra.mrb[0].mxu0 %v777
      %v955 = vpop.f32.mrb[0].mxu0
      %v956 = vadd.f32 %v667, %v955
      %v957 = vpop.f32.mrb[0].mxu0
      %958 = vmatprep.mubr.f32.mxu0 0.0
      %959 = vmatmul.mubr.f32.gmra.mrb[0].mxu0 %v779
      %v960 = vpop.f32.mrb[0].mxu0
      %v961 = vadd.f32 %v672, %v960
      %v962 = vpop.f32.mrb[0].mxu0
      %963 = vmatprep.mubr.f32.mxu0 0.0
      %964 = vmatmul.mubr.f32.gmra.mrb[0].mxu0 %v781
      %v965 = vpop.f32.mrb[0].mxu0
      %v966 = vadd.f32 %v677, %v965
      %v967 = vpop.f32.mrb[0].mxu0
      %968 = vmatprep.mubr.f32.mxu0 0.0
      %969 = vmatmul.mubr.f32.gmra.mrb[0].mxu0 %v783
      %v970 = vpop.f32.mrb[0].mxu0
      %v971 = vadd.f32 %v682, %v970
      %v972 = vpop.f32.mrb[0].mxu0
      %973 = vmatprep.mubr.f32.mxu0 0.0
      %974 = vmatmul.mubr.f32.gmra.mrb[0].mxu0 %v785
      %v975 = vpop.f32.mrb[0].mxu0
      %v976 = vadd.f32 %v687, %v975
      %v977 = vpop.f32.mrb[0].mxu0
      %978 = vmatprep.mubr.f32.mxu0 0.0
      %979 = vmatmul.mubr.f32.gmra.mrb[0].mxu0 %v787
      %v980 = vpop.f32.mrb[0].mxu0
      %v981 = vadd.f32 %v692, %v980
      %v982 = vpop.f32.mrb[0].mxu0
      %983 = vmatprep.mubr.f32.mxu0 0.0
      %984 = vmatmul.mubr.f32.gmra.mrb[0].mxu0 %v789
      %v985 = vpop.f32.mrb[0].mxu0
      %v986 = vadd.f32 %v697, %v985
      %v987 = vpop.f32.mrb[0].mxu0
      %988 = vmatprep.mubr.f32.mxu0 0.0
      %989 = vmatmul.mubr.f32.gmra.mrb[0].mxu0 %v791
      %v990 = vpop.f32.mrb[0].mxu0
      %v991 = vadd.f32 %v702, %v990
      %v992 = vpop.f32.mrb[0].mxu0
      %993 = vmatprep.mubr.f32.mxu0 0.0
      %994 = vmatmul.mubr.f32.gmra.mrb[0].mxu0 %v793
      %v995 = vpop.f32.mrb[0].mxu0
      %v996 = vadd.f32 %v707, %v995
      %v997 = vpop.f32.mrb[0].mxu0
      %998 = vmatprep.mubr.f32.mxu0 0.0
      %999 = vmatmul.mubr.f32.gmra.mrb[0].mxu0 %v795
      %v1000 = vpop.f32.mrb[0].mxu0
      %v1001 = vadd.f32 %v712, %v1000
      %v1002 = vpop.f32.mrb[0].mxu0
      %1003 = vmatprep.mubr.f32.mxu0 0.0
      %1004 = vmatmul.mubr.f32.gmra.mrb[0].mxu0 %v797
      %v1005 = vpop.f32.mrb[0].mxu0
      %v1006 = vadd.f32 %v717, %v1005
      %v1007 = vpop.f32.mrb[0].mxu0
      %1008 = vmatprep.mubr.f32.mxu0 0.0
      %1009 = vmatmul.mubr.f32.gmra.mrb[0].mxu0 %v799
      %v1010 = vpop.f32.mrb[0].mxu0
      %v1011 = vadd.f32 %v722, %v1010
      %v1012 = vpop.f32.mrb[0].mxu0
      %1013 = vmatprep.mubr.f32.mxu0 0.0
      %1014 = vmatmul.mubr.f32.gmra.mrb[0].mxu0 %v801
      %v1015 = vpop.f32.mrb[0].mxu0
      %v1016 = vadd.f32 %v727, %v1015
      %v1017 = vpop.f32.mrb[0].mxu0
      %1018 = vmatprep.mubr.f32.mxu0 0.0
      %1019 = vmatmul.mubr.f32.gmra.mrb[0].mxu0 %v803
      %v1020 = vpop.f32.mrb[0].mxu0
      %v1021 = vadd.f32 %v732, %v1020
      %v1022 = vpop.f32.mrb[0].mxu0
      %1023 = vmatprep.mubr.f32.mxu0 0.0
      %1024 = vmatmul.mubr.f32.gmra.mrb[0].mxu0 %v805
      %v1025 = vpop.f32.mrb[0].mxu0
      %v1026 = vadd.f32 %v737, %v1025
      %v1027 = vpop.f32.mrb[0].mxu0
      %1028 = vmatprep.mubr.f32.mxu0 0.0
      %1029 = vmatmul.mubr.f32.gmra.mrb[0].mxu0 %v807
      %v1030 = vpop.f32.mrb[0].mxu0
      %v1031 = vadd.f32 %v742, %v1030
      %v1032 = vpop.f32.mrb[0].mxu0
      %1033 = vdwg.mxu0
      %vm1034 = vcmask 1045504
      %v1035 = vrot.slane %v263, 2
      %v1036 = vrot.slane %v264, 2
      %v1037 = vsel %vm1034, %v1035, %v1036
      %v1038 = vrot.slane %v265, 2
      %v1039 = vsel %vm1034, %v1036, %v1038
      %v1040 = vrot.slane %v266, 2
      %v1041 = vrot.slane %v267, 2
      %v1042 = vsel %vm1034, %v1040, %v1041
      %v1043 = vrot.slane %v268, 2
      %v1044 = vsel %vm1034, %v1041, %v1043
      %v1045 = vrot.slane %v269, 2
      %v1046 = vrot.slane %v270, 2
      %v1047 = vsel %vm1034, %v1045, %v1046
      %v1048 = vrot.slane %v271, 2
      %v1049 = vsel %vm1034, %v1046, %v1048
      %v1050 = vrot.slane %v272, 2
      %v1051 = vrot.slane %v273, 2
      %v1052 = vsel %vm1034, %v1050, %v1051
      %v1053 = vrot.slane %v274, 2
      %v1054 = vsel %vm1034, %v1051, %v1053
      %v1055 = vrot.slane %v275, 2
      %v1056 = vrot.slane %v276, 2
      %v1057 = vsel %vm1034, %v1055, %v1056
      %v1058 = vrot.slane %v277, 2
      %v1059 = vsel %vm1034, %v1056, %v1058
      %v1060 = vrot.slane %v278, 2
      %v1061 = vrot.slane %v279, 2
      %v1062 = vsel %vm1034, %v1060, %v1061
      %v1063 = vrot.slane %v280, 2
      %v1064 = vsel %vm1034, %v1061, %v1063
      %v1065 = vrot.slane %v281, 2
      %v1066 = vrot.slane %v282, 2
      %v1067 = vsel %vm1034, %v1065, %v1066
      %v1068 = vrot.slane %v283, 2
      %v1069 = vsel %vm1034, %v1066, %v1068
      %v1070 = vrot.slane %v284, 2
      %v1071 = vrot.slane %v285, 2
      %v1072 = vsel %vm1034, %v1070, %v1071
      %v1073 = vrot.slane %v286, 2
      %v1074 = vsel %vm1034, %v1071, %v1073
      %v1075 = vrot.slane %v287, 2
      %v1076 = vrot.slane %v288, 2
      %v1077 = vsel %vm1034, %v1075, %v1076
      %v1078 = vrot.slane %v289, 2
      %v1079 = vsel %vm1034, %v1076, %v1078
      %v1080 = vrot.slane %v290, 2
      %v1081 = vrot.slane %v291, 2
      %v1082 = vsel %vm1034, %v1080, %v1081
      %v1083 = vrot.slane %v292, 2
      %v1084 = vsel %vm1034, %v1081, %v1083
      %v1085 = vrot.slane %v293, 2
      %v1086 = vrot.slane %v294, 2
      %v1087 = vsel %vm1034, %v1085, %v1086
      %v1088 = vrot.slane %v295, 2
      %v1089 = vsel %vm1034, %v1086, %v1088
      %v1090 = vrot.slane %v296, 2
      %v1091 = vrot.slane %v297, 2
      %v1092 = vsel %vm1034, %v1090, %v1091
      %v1093 = vrot.slane %v298, 2
      %v1094 = vsel %vm1034, %v1091, %v1093
      %v1095 = vrot.slane %v299, 2
      %v1096 = vrot.slane %v300, 2
      %v1097 = vsel %vm1034, %v1095, %v1096
      %v1098 = vrot.slane %v301, 2
      %v1099 = vsel %vm1034, %v1096, %v1098
      %v1100 = vrot.slane %v302, 2
      %v1101 = vrot.slane %v303, 2
      %v1102 = vsel %vm1034, %v1100, %v1101
      %v1103 = vrot.slane %v304, 2
      %v1104 = vsel %vm1034, %v1101, %v1103
      %v1105 = vrot.slane %v305, 2
      %v1106 = vrot.slane %v306, 2
      %v1107 = vsel %vm1034, %v1105, %v1106
      %v1108 = vrot.slane %v307, 2
      %v1109 = vsel %vm1034, %v1106, %v1108
      %v1110 = vrot.slane %v308, 2
      %v1111 = vrot.slane %v309, 2
      %v1112 = vsel %vm1034, %v1110, %v1111
      %v1113 = vrot.slane %v310, 2
      %v1114 = vsel %vm1034, %v1111, %v1113
      %v1115 = vsel %vm455, %v1037, 0
      %v1117 = vsel %vm455, %v1039, 0
      %v1119 = vsel %vm455, %v1042, 0
      %v1121 = vsel %vm455, %v1044, 0
      %v1123 = vsel %vm455, %v1047, 0
      %v1125 = vsel %vm455, %v1049, 0
      %v1127 = vsel %vm455, %v1052, 0
      %v1129 = vsel %vm455, %v1054, 0
      %v1131 = vsel %vm455, %v1057, 0
      %v1133 = vsel %vm455, %v1059, 0
      %v1135 = vsel %vm455, %v1062, 0
      %v1137 = vsel %vm455, %v1064, 0
      %v1139 = vsel %vm455, %v1067, 0
      %v1141 = vsel %vm455, %v1069, 0
      %v1143 = vsel %vm455, %v1072, 0
      %v1145 = vsel %vm455, %v1074, 0
      %v1147 = vsel %vm455, %v1077, 0
      %v1149 = vsel %vm455, %v1079, 0
      %v1151 = vsel %vm455, %v1082, 0
      %v1153 = vsel %vm455, %v1084, 0
      %v1155 = vsel %vm455, %v1087, 0
      %v1157 = vsel %vm455, %v1089, 0
      %v1159 = vsel %vm455, %v1092, 0
      %v1161 = vsel %vm455, %v1094, 0
      %v1163 = vsel %vm455, %v1097, 0
      %v1165 = vsel %vm455, %v1099, 0
      %v1167 = vsel %vm455, %v1102, 0
      %v1169 = vsel %vm455, %v1104, 0
      %v1171 = vsel %vm455, %v1107, 0
      %v1173 = vsel %vm455, %v1109, 0
      %v1175 = vsel %vm455, %v1112, 0
      %v1177 = vsel %vm455, %v1114, 0
      %1179 = vmatprep.subr.mxu0 0.0
      %1180 = vmatpush1.msra.mxu0 %v319
      %1181 = vmatprep.subr.mxu0 0.0
      %1182 = vmatpush1.msra.mxu0 0.0
      %1183 = vmatprep.subr.mxu0 0.0
      %1184 = vmatpush1.msra.mxu0 0.0
      %1185 = vmatprep.subr.mxu0 0.0
      %1186 = vmatpush1.msra.mxu0 0.0
      %1187 = vmatprep.subr.mxu0 0.0
      %1188 = vmatpush1.msra.mxu0 0.0
      %1189 = vmatprep.subr.mxu0 0.0
      %1190 = vmatpush1.msra.mxu0 0.0
      %1191 = vmatprep.subr.mxu0 0.0
      %1192 = vmatpush1.msra.mxu0 0.0
      %1193 = vmatprep.subr.mxu0 0.0
      %1194 = vmatpush1.msra.mxu0 0.0
      %1195 = vmatprep.subr.mxu0 0.0
      %1196 = vmatpush1.msra.mxu0 0.0
      %1197 = vmatprep.subr.mxu0 0.0
      %1198 = vmatpush1.msra.mxu0 0.0
      %1199 = vmatprep.subr.mxu0 0.0
      %1200 = vmatpush1.msra.mxu0 0.0
      %1201 = vmatprep.subr.mxu0 0.0
      %1202 = vmatpush1.msra.mxu0 0.0
      %1203 = vmatprep.subr.mxu0 0.0
      %1204 = vmatpush1.msra.mxu0 0.0
      %1205 = vmatprep.subr.mxu0 0.0
      %1206 = vmatpush1.msra.mxu0 0.0
      %1207 = vmatprep.subr.mxu0 0.0
      %1208 = vmatpush1.msra.mxu0 0.0
      %1209 = vmatprep.subr.mxu0 0.0
      %1210 = vmatpush1.msra.mxu0 0.0
      %1211 = vmatprep.subr.mxu0 0.0
      %1212 = vmatpush1.msra.mxu0 0.0
      %1213 = vmatprep.subr.mxu0 0.0
      %1214 = vmatpush1.msra.mxu0 0.0
      %1215 = vmatprep.subr.mxu0 0.0
      %1216 = vmatpush1.msra.mxu0 0.0
      %1217 = vmatprep.subr.mxu0 0.0
      %1218 = vmatpush1.msra.mxu0 0.0
      %1219 = vmatprep.subr.mxu0 0.0
      %1220 = vmatpush1.msra.mxu0 0.0
      %1221 = vmatprep.subr.mxu0 0.0
      %1222 = vmatpush1.msra.mxu0 0.0
      %1223 = vmatprep.subr.mxu0 0.0
      %1224 = vmatpush1.msra.mxu0 0.0
      %1225 = vmatprep.subr.mxu0 0.0
      %1226 = vmatpush1.msra.mxu0 0.0
      %1227 = vmatprep.subr.mxu0 0.0
      %1228 = vmatpush1.msra.mxu0 0.0
      %1229 = vmatprep.subr.mxu0 0.0
      %1230 = vmatpush1.msra.mxu0 0.0
      %1231 = vmatprep.subr.mxu0 0.0
      %1232 = vmatpush1.msra.mxu0 0.0
      %1233 = vmatprep.subr.mxu0 0.0
      %1234 = vmatpush1.msra.mxu0 0.0
      %1235 = vmatprep.subr.mxu0 0.0
      %1236 = vmatpush1.msra.mxu0 0.0
      %1237 = vmatprep.subr.mxu0 0.0
      %1238 = vmatpush1.msra.mxu0 0.0
      %1239 = vmatprep.subr.mxu0 0.0
      %1240 = vmatpush1.msra.mxu0 0.0
      %1241 = vmatprep.subr.mxu0 0.0
      %1242 = vmatpush1.msra.mxu0 0.0
      %1243 = vmatprep.mubr.f32.mxu0 0.0
      %1244 = vmatmul.mubr.f32.gmra.mrb[0].mxu0 %v1115
      %v1245 = vpop.f32.mrb[0].mxu0
      %v1246 = vadd.f32 0.0, %v1245
      %v1247 = vpop.f32.mrb[0].mxu0
      %1248 = vmatprep.mubr.f32.mxu0 0.0
      %1249 = vmatmul.mubr.f32.gmra.mrb[0].mxu0 %v1117
      %v1250 = vpop.f32.mrb[0].mxu0
      %v1251 = vadd.f32 0.0, %v1250
      %v1252 = vpop.f32.mrb[0].mxu0
      %1253 = vmatprep.mubr.f32.mxu0 0.0
      %1254 = vmatmul.mubr.f32.gmra.mrb[0].mxu0 %v1119
      %v1255 = vpop.f32.mrb[0].mxu0
      %v1256 = vadd.f32 0.0, %v1255
      %v1257 = vpop.f32.mrb[0].mxu0
      %1258 = vmatprep.mubr.f32.mxu0 0.0
      %1259 = vmatmul.mubr.f32.gmra.mrb[0].mxu0 %v1121
      %v1260 = vpop.f32.mrb[0].mxu0
      %v1261 = vadd.f32 0.0, %v1260
      %v1262 = vpop.f32.mrb[0].mxu0
      %1263 = vmatprep.mubr.f32.mxu0 0.0
      %1264 = vmatmul.mubr.f32.gmra.mrb[0].mxu0 %v1123
      %v1265 = vpop.f32.mrb[0].mxu0
      %v1266 = vadd.f32 0.0, %v1265
      %v1267 = vpop.f32.mrb[0].mxu0
      %1268 = vmatprep.mubr.f32.mxu0 0.0
      %1269 = vmatmul.mubr.f32.gmra.mrb[0].mxu0 %v1125
      %v1270 = vpop.f32.mrb[0].mxu0
      %v1271 = vadd.f32 0.0, %v1270
      %v1272 = vpop.f32.mrb[0].mxu0
      %1273 = vmatprep.mubr.f32.mxu0 0.0
      %1274 = vmatmul.mubr.f32.gmra.mrb[0].mxu0 %v1127
      %v1275 = vpop.f32.mrb[0].mxu0
      %v1276 = vadd.f32 0.0, %v1275
      %v1277 = vpop.f32.mrb[0].mxu0
      %1278 = vmatprep.mubr.f32.mxu0 0.0
      %1279 = vmatmul.mubr.f32.gmra.mrb[0].mxu0 %v1129
      %v1280 = vpop.f32.mrb[0].mxu0
      %v1281 = vadd.f32 0.0, %v1280
      %v1282 = vpop.f32.mrb[0].mxu0
      %1283 = vmatprep.mubr.f32.mxu0 0.0
      %1284 = vmatmul.mubr.f32.gmra.mrb[0].mxu0 %v1131
      %v1285 = vpop.f32.mrb[0].mxu0
      %v1286 = vadd.f32 0.0, %v1285
      %v1287 = vpop.f32.mrb[0].mxu0
      %1288 = vmatprep.mubr.f32.mxu0 0.0
      %1289 = vmatmul.mubr.f32.gmra.mrb[0].mxu0 %v1133
      %v1290 = vpop.f32.mrb[0].mxu0
      %v1291 = vadd.f32 0.0, %v1290
      %v1292 = vpop.f32.mrb[0].mxu0
      %1293 = vmatprep.mubr.f32.mxu0 0.0
      %1294 = vmatmul.mubr.f32.gmra.mrb[0].mxu0 %v1135
      %v1295 = vpop.f32.mrb[0].mxu0
      %v1296 = vadd.f32 0.0, %v1295
      %v1297 = vpop.f32.mrb[0].mxu0
      %1298 = vmatprep.mubr.f32.mxu0 0.0
      %1299 = vmatmul.mubr.f32.gmra.mrb[0].mxu0 %v1137
      %v1300 = vpop.f32.mrb[0].mxu0
      %v1301 = vadd.f32 0.0, %v1300
      %v1302 = vpop.f32.mrb[0].mxu0
      %1303 = vmatprep.mubr.f32.mxu0 0.0
      %1304 = vmatmul.mubr.f32.gmra.mrb[0].mxu0 %v1139
      %v1305 = vpop.f32.mrb[0].mxu0
      %v1306 = vadd.f32 0.0, %v1305
      %v1307 = vpop.f32.mrb[0].mxu0
      %1308 = vmatprep.mubr.f32.mxu0 0.0
      %1309 = vmatmul.mubr.f32.gmra.mrb[0].mxu0 %v1141
      %v1310 = vpop.f32.mrb[0].mxu0
      %v1311 = vadd.f32 0.0, %v1310
      %v1312 = vpop.f32.mrb[0].mxu0
      %1313 = vmatprep.mubr.f32.mxu0 0.0
      %1314 = vmatmul.mubr.f32.gmra.mrb[0].mxu0 %v1143
      %v1315 = vpop.f32.mrb[0].mxu0
      %v1316 = vadd.f32 0.0, %v1315
      %v1317 = vpop.f32.mrb[0].mxu0
      %1318 = vmatprep.mubr.f32.mxu0 0.0
      %1319 = vmatmul.mubr.f32.gmra.mrb[0].mxu0 %v1145
      %v1320 = vpop.f32.mrb[0].mxu0
      %v1321 = vadd.f32 0.0, %v1320
      %v1322 = vpop.f32.mrb[0].mxu0
      %1323 = vmatprep.mubr.f32.mxu0 0.0
      %1324 = vmatmul.mubr.f32.gmra.mrb[0].mxu0 %v1147
      %v1325 = vpop.f32.mrb[0].mxu0
      %v1326 = vadd.f32 0.0, %v1325
      %v1327 = vpop.f32.mrb[0].mxu0
      %1328 = vmatprep.mubr.f32.mxu0 0.0
      %1329 = vmatmul.mubr.f32.gmra.mrb[0].mxu0 %v1149
      %v1330 = vpop.f32.mrb[0].mxu0
      %v1331 = vadd.f32 0.0, %v1330
      %v1332 = vpop.f32.mrb[0].mxu0
      %1333 = vmatprep.mubr.f32.mxu0 0.0
      %1334 = vmatmul.mubr.f32.gmra.mrb[0].mxu0 %v1151
      %v1335 = vpop.f32.mrb[0].mxu0
      %v1336 = vadd.f32 0.0, %v1335
      %v1337 = vpop.f32.mrb[0].mxu0
      %1338 = vmatprep.mubr.f32.mxu0 0.0
      %1339 = vmatmul.mubr.f32.gmra.mrb[0].mxu0 %v1153
      %v1340 = vpop.f32.mrb[0].mxu0
      %v1341 = vadd.f32 0.0, %v1340
      %v1342 = vpop.f32.mrb[0].mxu0
      %1343 = vmatprep.mubr.f32.mxu0 0.0
      %1344 = vmatmul.mubr.f32.gmra.mrb[0].mxu0 %v1155
      %v1345 = vpop.f32.mrb[0].mxu0
      %v1346 = vadd.f32 0.0, %v1345
      %v1347 = vpop.f32.mrb[0].mxu0
      %1348 = vmatprep.mubr.f32.mxu0 0.0
      %1349 = vmatmul.mubr.f32.gmra.mrb[0].mxu0 %v1157
      %v1350 = vpop.f32.mrb[0].mxu0
      %v1351 = vadd.f32 0.0, %v1350
      %v1352 = vpop.f32.mrb[0].mxu0
      %1353 = vmatprep.mubr.f32.mxu0 0.0
      %1354 = vmatmul.mubr.f32.gmra.mrb[0].mxu0 %v1159
      %v1355 = vpop.f32.mrb[0].mxu0
      %v1356 = vadd.f32 0.0, %v1355
      %v1357 = vpop.f32.mrb[0].mxu0
      %1358 = vmatprep.mubr.f32.mxu0 0.0
      %1359 = vmatmul.mubr.f32.gmra.mrb[0].mxu0 %v1161
      %v1360 = vpop.f32.mrb[0].mxu0
      %v1361 = vadd.f32 0.0, %v1360
      %v1362 = vpop.f32.mrb[0].mxu0
      %1363 = vmatprep.mubr.f32.mxu0 0.0
      %1364 = vmatmul.mubr.f32.gmra.mrb[0].mxu0 %v1163
      %v1365 = vpop.f32.mrb[0].mxu0
      %v1366 = vadd.f32 0.0, %v1365
      %v1367 = vpop.f32.mrb[0].mxu0
      %1368 = vmatprep.mubr.f32.mxu0 0.0
      %1369 = vmatmul.mubr.f32.gmra.mrb[0].mxu0 %v1165
      %v1370 = vpop.f32.mrb[0].mxu0
      %v1371 = vadd.f32 0.0, %v1370
      %v1372 = vpop.f32.mrb[0].mxu0
      %1373 = vmatprep.mubr.f32.mxu0 0.0
      %1374 = vmatmul.mubr.f32.gmra.mrb[0].mxu0 %v1167
      %v1375 = vpop.f32.mrb[0].mxu0
      %v1376 = vadd.f32 0.0, %v1375
      %v1377 = vpop.f32.mrb[0].mxu0
      %1378 = vmatprep.mubr.f32.mxu0 0.0
      %1379 = vmatmul.mubr.f32.gmra.mrb[0].mxu0 %v1169
      %v1380 = vpop.f32.mrb[0].mxu0
      %v1381 = vadd.f32 0.0, %v1380
      %v1382 = vpop.f32.mrb[0].mxu0
      %1383 = vmatprep.mubr.f32.mxu0 0.0
      %1384 = vmatmul.mubr.f32.gmra.mrb[0].mxu0 %v1171
      %v1385 = vpop.f32.mrb[0].mxu0
      %v1386 = vadd.f32 0.0, %v1385
      %v1387 = vpop.f32.mrb[0].mxu0
      %1388 = vmatprep.mubr.f32.mxu0 0.0
      %1389 = vmatmul.mubr.f32.gmra.mrb[0].mxu0 %v1173
      %v1390 = vpop.f32.mrb[0].mxu0
      %v1391 = vadd.f32 0.0, %v1390
      %v1392 = vpop.f32.mrb[0].mxu0
      %1393 = vmatprep.mubr.f32.mxu0 0.0
      %1394 = vmatmul.mubr.f32.gmra.mrb[0].mxu0 %v1175
      %v1395 = vpop.f32.mrb[0].mxu0
      %v1396 = vadd.f32 0.0, %v1395
      %v1397 = vpop.f32.mrb[0].mxu0
      %1398 = vmatprep.mubr.f32.mxu0 0.0
      %1399 = vmatmul.mubr.f32.gmra.mrb[0].mxu0 %v1177
      %v1400 = vpop.f32.mrb[0].mxu0
      %v1401 = vadd.f32 0.0, %v1400
      %v1402 = vpop.f32.mrb[0].mxu0
      %1403 = vdwg.mxu0
      %v1404 = vadd.f32 %v876, %v1246
      %v1405 = vadd.f32 %v881, %v1251
      %v1406 = vadd.f32 %v886, %v1256
      %v1407 = vadd.f32 %v891, %v1261
      %v1408 = vadd.f32 %v896, %v1266
      %v1409 = vadd.f32 %v901, %v1271
      %v1410 = vadd.f32 %v906, %v1276
      %v1411 = vadd.f32 %v911, %v1281
      %v1412 = vadd.f32 %v916, %v1286
      %v1413 = vadd.f32 %v921, %v1291
      %v1414 = vadd.f32 %v926, %v1296
      %v1415 = vadd.f32 %v931, %v1301
      %v1416 = vadd.f32 %v936, %v1306
      %v1417 = vadd.f32 %v941, %v1311
      %v1418 = vadd.f32 %v946, %v1316
      %v1419 = vadd.f32 %v951, %v1321
      %v1420 = vadd.f32 %v956, %v1326
      %v1421 = vadd.f32 %v961, %v1331
      %v1422 = vadd.f32 %v966, %v1336
      %v1423 = vadd.f32 %v971, %v1341
      %v1424 = vadd.f32 %v976, %v1346
      %v1425 = vadd.f32 %v981, %v1351
      %v1426 = vadd.f32 %v986, %v1356
      %v1427 = vadd.f32 %v991, %v1361
      %v1428 = vadd.f32 %v996, %v1366
      %v1429 = vadd.f32 %v1001, %v1371
      %v1430 = vadd.f32 %v1006, %v1376
      %v1431 = vadd.f32 %v1011, %v1381
      %v1432 = vadd.f32 %v1016, %v1386
      %v1433 = vadd.f32 %v1021, %v1391
      %v1434 = vadd.f32 %v1026, %v1396
      %v1435 = vadd.f32 %v1031, %v1401
      %v1437 = vsel %vm455, %v311, 0
      %v1440 = vsel %vm455, %v312, 0
      %1442 = vmatprep.subr.mxu0 0.0
      %1443 = vmatpush1.msra.mxu0 %v320
      %1444 = vmatprep.subr.mxu0 0.0
      %1445 = vmatpush1.msra.mxu0 0.0
      %1446 = vmatprep.subr.mxu0 0.0
      %1447 = vmatpush1.msra.mxu0 0.0
      %1448 = vmatprep.subr.mxu0 0.0
      %1449 = vmatpush1.msra.mxu0 0.0
      %1450 = vmatprep.subr.mxu0 0.0
      %1451 = vmatpush1.msra.mxu0 0.0
      %1452 = vmatprep.subr.mxu0 0.0
      %1453 = vmatpush1.msra.mxu0 0.0
      %1454 = vmatprep.subr.mxu0 0.0
      %1455 = vmatpush1.msra.mxu0 0.0
      %1456 = vmatprep.subr.mxu0 0.0
      %1457 = vmatpush1.msra.mxu0 0.0
      %1458 = vmatprep.subr.mxu0 0.0
      %1459 = vmatpush1.msra.mxu0 0.0
      %1460 = vmatprep.subr.mxu0 0.0
      %1461 = vmatpush1.msra.mxu0 0.0
      %1462 = vmatprep.subr.mxu0 0.0
      %1463 = vmatpush1.msra.mxu0 0.0
      %1464 = vmatprep.subr.mxu0 0.0
      %1465 = vmatpush1.msra.mxu0 0.0
      %1466 = vmatprep.subr.mxu0 0.0
      %1467 = vmatpush1.msra.mxu0 0.0
      %1468 = vmatprep.subr.mxu0 0.0
      %1469 = vmatpush1.msra.mxu0 0.0
      %1470 = vmatprep.subr.mxu0 0.0
      %1471 = vmatpush1.msra.mxu0 0.0
      %1472 = vmatprep.subr.mxu0 0.0
      %1473 = vmatpush1.msra.mxu0 0.0
      %1474 = vmatprep.subr.mxu0 0.0
      %1475 = vmatpush1.msra.mxu0 0.0
      %1476 = vmatprep.subr.mxu0 0.0
      %1477 = vmatpush1.msra.mxu0 0.0
      %1478 = vmatprep.subr.mxu0 0.0
      %1479 = vmatpush1.msra.mxu0 0.0
      %1480 = vmatprep.subr.mxu0 0.0
      %1481 = vmatpush1.msra.mxu0 0.0
      %1482 = vmatprep.subr.mxu0 0.0
      %1483 = vmatpush1.msra.mxu0 0.0
      %1484 = vmatprep.subr.mxu0 0.0
      %1485 = vmatpush1.msra.mxu0 0.0
      %1486 = vmatprep.subr.mxu0 0.0
      %1487 = vmatpush1.msra.mxu0 0.0
      %1488 = vmatprep.subr.mxu0 0.0
      %1489 = vmatpush1.msra.mxu0 0.0
      %1490 = vmatprep.subr.mxu0 0.0
      %1491 = vmatpush1.msra.mxu0 0.0
      %1492 = vmatprep.subr.mxu0 0.0
      %1493 = vmatpush1.msra.mxu0 0.0
      %1494 = vmatprep.subr.mxu0 0.0
      %1495 = vmatpush1.msra.mxu0 0.0
      %1496 = vmatprep.subr.mxu0 0.0
      %1497 = vmatpush1.msra.mxu0 0.0
      %1498 = vmatprep.subr.mxu0 0.0
      %1499 = vmatpush1.msra.mxu0 0.0
      %1500 = vmatprep.subr.mxu0 0.0
      %1501 = vmatpush1.msra.mxu0 0.0
      %1502 = vmatprep.subr.mxu0 0.0
      %1503 = vmatpush1.msra.mxu0 0.0
      %1504 = vmatprep.subr.mxu0 0.0
      %1505 = vmatpush1.msra.mxu0 0.0
      %1506 = vmatprep.mubr.f32.mxu0 0.0
      %1507 = vmatmul.mubr.f32.gmra.mrb[0].mxu0 %v749
      %v1508 = vpop.f32.mrb[0].mxu0
      %v1509 = vadd.f32 0.0, %v1508
      %v1510 = vpop.f32.mrb[0].mxu0
      %1511 = vmatprep.mubr.f32.mxu0 0.0
      %1512 = vmatmul.mubr.f32.gmra.mrb[0].mxu0 %v751
      %v1513 = vpop.f32.mrb[0].mxu0
      %v1514 = vadd.f32 0.0, %v1513
      %v1515 = vpop.f32.mrb[0].mxu0
      %1516 = vmatprep.mubr.f32.mxu0 0.0
      %1517 = vmatmul.mubr.f32.gmra.mrb[0].mxu0 %v753
      %v1518 = vpop.f32.mrb[0].mxu0
      %v1519 = vadd.f32 0.0, %v1518
      %v1520 = vpop.f32.mrb[0].mxu0
      %1521 = vmatprep.mubr.f32.mxu0 0.0
      %1522 = vmatmul.mubr.f32.gmra.mrb[0].mxu0 %v755
      %v1523 = vpop.f32.mrb[0].mxu0
      %v1524 = vadd.f32 0.0, %v1523
      %v1525 = vpop.f32.mrb[0].mxu0
      %1526 = vmatprep.mubr.f32.mxu0 0.0
      %1527 = vmatmul.mubr.f32.gmra.mrb[0].mxu0 %v757
      %v1528 = vpop.f32.mrb[0].mxu0
      %v1529 = vadd.f32 0.0, %v1528
      %v1530 = vpop.f32.mrb[0].mxu0
      %1531 = vmatprep.mubr.f32.mxu0 0.0
      %1532 = vmatmul.mubr.f32.gmra.mrb[0].mxu0 %v759
      %v1533 = vpop.f32.mrb[0].mxu0
      %v1534 = vadd.f32 0.0, %v1533
      %v1535 = vpop.f32.mrb[0].mxu0
      %1536 = vmatprep.mubr.f32.mxu0 0.0
      %1537 = vmatmul.mubr.f32.gmra.mrb[0].mxu0 %v761
      %v1538 = vpop.f32.mrb[0].mxu0
      %v1539 = vadd.f32 0.0, %v1538
      %v1540 = vpop.f32.mrb[0].mxu0
      %1541 = vmatprep.mubr.f32.mxu0 0.0
      %1542 = vmatmul.mubr.f32.gmra.mrb[0].mxu0 %v763
      %v1543 = vpop.f32.mrb[0].mxu0
      %v1544 = vadd.f32 0.0, %v1543
      %v1545 = vpop.f32.mrb[0].mxu0
      %1546 = vmatprep.mubr.f32.mxu0 0.0
      %1547 = vmatmul.mubr.f32.gmra.mrb[0].mxu0 %v765
      %v1548 = vpop.f32.mrb[0].mxu0
      %v1549 = vadd.f32 0.0, %v1548
      %v1550 = vpop.f32.mrb[0].mxu0
      %1551 = vmatprep.mubr.f32.mxu0 0.0
      %1552 = vmatmul.mubr.f32.gmra.mrb[0].mxu0 %v767
      %v1553 = vpop.f32.mrb[0].mxu0
      %v1554 = vadd.f32 0.0, %v1553
      %v1555 = vpop.f32.mrb[0].mxu0
      %1556 = vmatprep.mubr.f32.mxu0 0.0
      %1557 = vmatmul.mubr.f32.gmra.mrb[0].mxu0 %v769
      %v1558 = vpop.f32.mrb[0].mxu0
      %v1559 = vadd.f32 0.0, %v1558
      %v1560 = vpop.f32.mrb[0].mxu0
      %1561 = vmatprep.mubr.f32.mxu0 0.0
      %1562 = vmatmul.mubr.f32.gmra.mrb[0].mxu0 %v771
      %v1563 = vpop.f32.mrb[0].mxu0
      %v1564 = vadd.f32 0.0, %v1563
      %v1565 = vpop.f32.mrb[0].mxu0
      %1566 = vmatprep.mubr.f32.mxu0 0.0
      %1567 = vmatmul.mubr.f32.gmra.mrb[0].mxu0 %v773
      %v1568 = vpop.f32.mrb[0].mxu0
      %v1569 = vadd.f32 0.0, %v1568
      %v1570 = vpop.f32.mrb[0].mxu0
      %1571 = vmatprep.mubr.f32.mxu0 0.0
      %1572 = vmatmul.mubr.f32.gmra.mrb[0].mxu0 %v775
      %v1573 = vpop.f32.mrb[0].mxu0
      %v1574 = vadd.f32 0.0, %v1573
      %v1575 = vpop.f32.mrb[0].mxu0
      %1576 = vmatprep.mubr.f32.mxu0 0.0
      %1577 = vmatmul.mubr.f32.gmra.mrb[0].mxu0 %v777
      %v1578 = vpop.f32.mrb[0].mxu0
      %v1579 = vadd.f32 0.0, %v1578
      %v1580 = vpop.f32.mrb[0].mxu0
      %1581 = vmatprep.mubr.f32.mxu0 0.0
      %1582 = vmatmul.mubr.f32.gmra.mrb[0].mxu0 %v779
      %v1583 = vpop.f32.mrb[0].mxu0
      %v1584 = vadd.f32 0.0, %v1583
      %v1585 = vpop.f32.mrb[0].mxu0
      %1586 = vmatprep.mubr.f32.mxu0 0.0
      %1587 = vmatmul.mubr.f32.gmra.mrb[0].mxu0 %v781
      %v1588 = vpop.f32.mrb[0].mxu0
      %v1589 = vadd.f32 0.0, %v1588
      %v1590 = vpop.f32.mrb[0].mxu0
      %1591 = vmatprep.mubr.f32.mxu0 0.0
      %1592 = vmatmul.mubr.f32.gmra.mrb[0].mxu0 %v783
      %v1593 = vpop.f32.mrb[0].mxu0
      %v1594 = vadd.f32 0.0, %v1593
      %v1595 = vpop.f32.mrb[0].mxu0
      %1596 = vmatprep.mubr.f32.mxu0 0.0
      %1597 = vmatmul.mubr.f32.gmra.mrb[0].mxu0 %v785
      %v1598 = vpop.f32.mrb[0].mxu0
      %v1599 = vadd.f32 0.0, %v1598
      %v1600 = vpop.f32.mrb[0].mxu0
      %1601 = vmatprep.mubr.f32.mxu0 0.0
      %1602 = vmatmul.mubr.f32.gmra.mrb[0].mxu0 %v787
      %v1603 = vpop.f32.mrb[0].mxu0
      %v1604 = vadd.f32 0.0, %v1603
      %v1605 = vpop.f32.mrb[0].mxu0
      %1606 = vmatprep.mubr.f32.mxu0 0.0
      %1607 = vmatmul.mubr.f32.gmra.mrb[0].mxu0 %v789
      %v1608 = vpop.f32.mrb[0].mxu0
      %v1609 = vadd.f32 0.0, %v1608
      %v1610 = vpop.f32.mrb[0].mxu0
      %1611 = vmatprep.mubr.f32.mxu0 0.0
      %1612 = vmatmul.mubr.f32.gmra.mrb[0].mxu0 %v791
      %v1613 = vpop.f32.mrb[0].mxu0
      %v1614 = vadd.f32 0.0, %v1613
      %v1615 = vpop.f32.mrb[0].mxu0
      %1616 = vmatprep.mubr.f32.mxu0 0.0
      %1617 = vmatmul.mubr.f32.gmra.mrb[0].mxu0 %v793
      %v1618 = vpop.f32.mrb[0].mxu0
      %v1619 = vadd.f32 0.0, %v1618
      %v1620 = vpop.f32.mrb[0].mxu0
      %1621 = vmatprep.mubr.f32.mxu0 0.0
      %1622 = vmatmul.mubr.f32.gmra.mrb[0].mxu0 %v795
      %v1623 = vpop.f32.mrb[0].mxu0
      %v1624 = vadd.f32 0.0, %v1623
      %v1625 = vpop.f32.mrb[0].mxu0
      %1626 = vmatprep.mubr.f32.mxu0 0.0
      %1627 = vmatmul.mubr.f32.gmra.mrb[0].mxu0 %v797
      %v1628 = vpop.f32.mrb[0].mxu0
      %v1629 = vadd.f32 0.0, %v1628
      %v1630 = vpop.f32.mrb[0].mxu0
      %1631 = vmatprep.mubr.f32.mxu0 0.0
      %1632 = vmatmul.mubr.f32.gmra.mrb[0].mxu0 %v799
      %v1633 = vpop.f32.mrb[0].mxu0
      %v1634 = vadd.f32 0.0, %v1633
      %v1635 = vpop.f32.mrb[0].mxu0
      %1636 = vmatprep.mubr.f32.mxu0 0.0
      %1637 = vmatmul.mubr.f32.gmra.mrb[0].mxu0 %v801
      %v1638 = vpop.f32.mrb[0].mxu0
      %v1639 = vadd.f32 0.0, %v1638
      %v1640 = vpop.f32.mrb[0].mxu0
      %1641 = vmatprep.mubr.f32.mxu0 0.0
      %1642 = vmatmul.mubr.f32.gmra.mrb[0].mxu0 %v803
      %v1643 = vpop.f32.mrb[0].mxu0
      %v1644 = vadd.f32 0.0, %v1643
      %v1645 = vpop.f32.mrb[0].mxu0
      %1646 = vmatprep.mubr.f32.mxu0 0.0
      %1647 = vmatmul.mubr.f32.gmra.mrb[0].mxu0 %v805
      %v1648 = vpop.f32.mrb[0].mxu0
      %v1649 = vadd.f32 0.0, %v1648
      %v1650 = vpop.f32.mrb[0].mxu0
      %1651 = vmatprep.mubr.f32.mxu0 0.0
      %1652 = vmatmul.mubr.f32.gmra.mrb[0].mxu0 %v807
      %v1653 = vpop.f32.mrb[0].mxu0
      %v1654 = vadd.f32 0.0, %v1653
      %v1655 = vpop.f32.mrb[0].mxu0
      %1656 = vmatprep.mubr.f32.mxu0 0.0
      %1657 = vmatmul.mubr.f32.gmra.mrb[0].mxu0 %v1437
      %v1658 = vpop.f32.mrb[0].mxu0
      %v1659 = vadd.f32 0.0, %v1658
      %v1660 = vpop.f32.mrb[0].mxu0
      %1661 = vmatprep.mubr.f32.mxu0 0.0
      %1662 = vmatmul.mubr.f32.gmra.mrb[0].mxu0 %v1440
      %v1663 = vpop.f32.mrb[0].mxu0
      %v1664 = vadd.f32 0.0, %v1663
      %v1665 = vpop.f32.mrb[0].mxu0
      %1666 = vdwg.mxu0
      %v1667 = vadd.f32 %v1404, %v1509
      %v1668 = vadd.f32 %v1405, %v1514
      %v1669 = vadd.f32 %v1406, %v1519
      %v1670 = vadd.f32 %v1407, %v1524
      %v1671 = vadd.f32 %v1408, %v1529
      %v1672 = vadd.f32 %v1409, %v1534
      %v1673 = vadd.f32 %v1410, %v1539
      %v1674 = vadd.f32 %v1411, %v1544
      %v1675 = vadd.f32 %v1412, %v1549
      %v1676 = vadd.f32 %v1413, %v1554
      %v1677 = vadd.f32 %v1414, %v1559
      %v1678 = vadd.f32 %v1415, %v1564
      %v1679 = vadd.f32 %v1416, %v1569
      %v1680 = vadd.f32 %v1417, %v1574
      %v1681 = vadd.f32 %v1418, %v1579
      %v1682 = vadd.f32 %v1419, %v1584
      %v1683 = vadd.f32 %v1420, %v1589
      %v1684 = vadd.f32 %v1421, %v1594
      %v1685 = vadd.f32 %v1422, %v1599
      %v1686 = vadd.f32 %v1423, %v1604
      %v1687 = vadd.f32 %v1424, %v1609
      %v1688 = vadd.f32 %v1425, %v1614
      %v1689 = vadd.f32 %v1426, %v1619
      %v1690 = vadd.f32 %v1427, %v1624
      %v1691 = vadd.f32 %v1428, %v1629
      %v1692 = vadd.f32 %v1429, %v1634
      %v1693 = vadd.f32 %v1430, %v1639
      %v1694 = vadd.f32 %v1431, %v1644
      %v1695 = vadd.f32 %v1432, %v1649
      %v1696 = vadd.f32 %v1433, %v1654
      %v1697 = vadd.f32 %v1434, %v1659
      %v1698 = vadd.f32 %v1435, %v1664
      %v1700 = vrot.slane %v311, 1
      %v1701 = vrot.slane %v312, 1
      %v1702 = vsel %vm374, %v1700, %v1701
      %v1703 = vrot.slane %v313, 1
      %v1704 = vsel %vm374, %v1701, %v1703
      %v1705 = vsel %vm455, %v1702, 0
      %v1707 = vsel %vm455, %v1704, 0
      %1709 = vmatprep.subr.mxu0 0.0
      %1710 = vmatpush1.msra.mxu0 %v321
      %1711 = vmatprep.subr.mxu0 0.0
      %1712 = vmatpush1.msra.mxu0 0.0
      %1713 = vmatprep.subr.mxu0 0.0
      %1714 = vmatpush1.msra.mxu0 0.0
      %1715 = vmatprep.subr.mxu0 0.0
      %1716 = vmatpush1.msra.mxu0 0.0
      %1717 = vmatprep.subr.mxu0 0.0
      %1718 = vmatpush1.msra.mxu0 0.0
      %1719 = vmatprep.subr.mxu0 0.0
      %1720 = vmatpush1.msra.mxu0 0.0
      %1721 = vmatprep.subr.mxu0 0.0
      %1722 = vmatpush1.msra.mxu0 0.0
      %1723 = vmatprep.subr.mxu0 0.0
      %1724 = vmatpush1.msra.mxu0 0.0
      %1725 = vmatprep.subr.mxu0 0.0
      %1726 = vmatpush1.msra.mxu0 0.0
      %1727 = vmatprep.subr.mxu0 0.0
      %1728 = vmatpush1.msra.mxu0 0.0
      %1729 = vmatprep.subr.mxu0 0.0
      %1730 = vmatpush1.msra.mxu0 0.0
      %1731 = vmatprep.subr.mxu0 0.0
      %1732 = vmatpush1.msra.mxu0 0.0
      %1733 = vmatprep.subr.mxu0 0.0
      %1734 = vmatpush1.msra.mxu0 0.0
      %1735 = vmatprep.subr.mxu0 0.0
      %1736 = vmatpush1.msra.mxu0 0.0
      %1737 = vmatprep.subr.mxu0 0.0
      %1738 = vmatpush1.msra.mxu0 0.0
      %1739 = vmatprep.subr.mxu0 0.0
      %1740 = vmatpush1.msra.mxu0 0.0
      %1741 = vmatprep.subr.mxu0 0.0
      %1742 = vmatpush1.msra.mxu0 0.0
      %1743 = vmatprep.subr.mxu0 0.0
      %1744 = vmatpush1.msra.mxu0 0.0
      %1745 = vmatprep.subr.mxu0 0.0
      %1746 = vmatpush1.msra.mxu0 0.0
      %1747 = vmatprep.subr.mxu0 0.0
      %1748 = vmatpush1.msra.mxu0 0.0
      %1749 = vmatprep.subr.mxu0 0.0
      %1750 = vmatpush1.msra.mxu0 0.0
      %1751 = vmatprep.subr.mxu0 0.0
      %1752 = vmatpush1.msra.mxu0 0.0
      %1753 = vmatprep.subr.mxu0 0.0
      %1754 = vmatpush1.msra.mxu0 0.0
      %1755 = vmatprep.subr.mxu0 0.0
      %1756 = vmatpush1.msra.mxu0 0.0
      %1757 = vmatprep.subr.mxu0 0.0
      %1758 = vmatpush1.msra.mxu0 0.0
      %1759 = vmatprep.subr.mxu0 0.0
      %1760 = vmatpush1.msra.mxu0 0.0
      %1761 = vmatprep.subr.mxu0 0.0
      %1762 = vmatpush1.msra.mxu0 0.0
      %1763 = vmatprep.subr.mxu0 0.0
      %1764 = vmatpush1.msra.mxu0 0.0
      %1765 = vmatprep.subr.mxu0 0.0
      %1766 = vmatpush1.msra.mxu0 0.0
      %1767 = vmatprep.subr.mxu0 0.0
      %1768 = vmatpush1.msra.mxu0 0.0
      %1769 = vmatprep.subr.mxu0 0.0
      %1770 = vmatpush1.msra.mxu0 0.0
      %1771 = vmatprep.subr.mxu0 0.0
      %1772 = vmatpush1.msra.mxu0 0.0
      %1773 = vmatprep.mubr.f32.mxu0 0.0
      %1774 = vmatmul.mubr.f32.gmra.mrb[0].mxu0 %v460
      %v1775 = vpop.f32.mrb[0].mxu0
      %v1776 = vadd.f32 0.0, %v1775
      %v1777 = vpop.f32.mrb[0].mxu0
      %1778 = vmatprep.mubr.f32.mxu0 0.0
      %1779 = vmatmul.mubr.f32.gmra.mrb[0].mxu0 %v462
      %v1780 = vpop.f32.mrb[0].mxu0
      %v1781 = vadd.f32 0.0, %v1780
      %v1782 = vpop.f32.mrb[0].mxu0
      %1783 = vmatprep.mubr.f32.mxu0 0.0
      %1784 = vmatmul.mubr.f32.gmra.mrb[0].mxu0 %v464
      %v1785 = vpop.f32.mrb[0].mxu0
      %v1786 = vadd.f32 0.0, %v1785
      %v1787 = vpop.f32.mrb[0].mxu0
      %1788 = vmatprep.mubr.f32.mxu0 0.0
      %1789 = vmatmul.mubr.f32.gmra.mrb[0].mxu0 %v466
      %v1790 = vpop.f32.mrb[0].mxu0
      %v1791 = vadd.f32 0.0, %v1790
      %v1792 = vpop.f32.mrb[0].mxu0
      %1793 = vmatprep.mubr.f32.mxu0 0.0
      %1794 = vmatmul.mubr.f32.gmra.mrb[0].mxu0 %v468
      %v1795 = vpop.f32.mrb[0].mxu0
      %v1796 = vadd.f32 0.0, %v1795
      %v1797 = vpop.f32.mrb[0].mxu0
      %1798 = vmatprep.mubr.f32.mxu0 0.0
      %1799 = vmatmul.mubr.f32.gmra.mrb[0].mxu0 %v470
      %v1800 = vpop.f32.mrb[0].mxu0
      %v1801 = vadd.f32 0.0, %v1800
      %v1802 = vpop.f32.mrb[0].mxu0
      %1803 = vmatprep.mubr.f32.mxu0 0.0
      %1804 = vmatmul.mubr.f32.gmra.mrb[0].mxu0 %v472
      %v1805 = vpop.f32.mrb[0].mxu0
      %v1806 = vadd.f32 0.0, %v1805
      %v1807 = vpop.f32.mrb[0].mxu0
      %1808 = vmatprep.mubr.f32.mxu0 0.0
      %1809 = vmatmul.mubr.f32.gmra.mrb[0].mxu0 %v474
      %v1810 = vpop.f32.mrb[0].mxu0
      %v1811 = vadd.f32 0.0, %v1810
      %v1812 = vpop.f32.mrb[0].mxu0
      %1813 = vmatprep.mubr.f32.mxu0 0.0
      %1814 = vmatmul.mubr.f32.gmra.mrb[0].mxu0 %v476
      %v1815 = vpop.f32.mrb[0].mxu0
      %v1816 = vadd.f32 0.0, %v1815
      %v1817 = vpop.f32.mrb[0].mxu0
      %1818 = vmatprep.mubr.f32.mxu0 0.0
      %1819 = vmatmul.mubr.f32.gmra.mrb[0].mxu0 %v478
      %v1820 = vpop.f32.mrb[0].mxu0
      %v1821 = vadd.f32 0.0, %v1820
      %v1822 = vpop.f32.mrb[0].mxu0
      %1823 = vmatprep.mubr.f32.mxu0 0.0
      %1824 = vmatmul.mubr.f32.gmra.mrb[0].mxu0 %v480
      %v1825 = vpop.f32.mrb[0].mxu0
      %v1826 = vadd.f32 0.0, %v1825
      %v1827 = vpop.f32.mrb[0].mxu0
      %1828 = vmatprep.mubr.f32.mxu0 0.0
      %1829 = vmatmul.mubr.f32.gmra.mrb[0].mxu0 %v482
      %v1830 = vpop.f32.mrb[0].mxu0
      %v1831 = vadd.f32 0.0, %v1830
      %v1832 = vpop.f32.mrb[0].mxu0
      %1833 = vmatprep.mubr.f32.mxu0 0.0
      %1834 = vmatmul.mubr.f32.gmra.mrb[0].mxu0 %v484
      %v1835 = vpop.f32.mrb[0].mxu0
      %v1836 = vadd.f32 0.0, %v1835
      %v1837 = vpop.f32.mrb[0].mxu0
      %1838 = vmatprep.mubr.f32.mxu0 0.0
      %1839 = vmatmul.mubr.f32.gmra.mrb[0].mxu0 %v486
      %v1840 = vpop.f32.mrb[0].mxu0
      %v1841 = vadd.f32 0.0, %v1840
      %v1842 = vpop.f32.mrb[0].mxu0
      %1843 = vmatprep.mubr.f32.mxu0 0.0
      %1844 = vmatmul.mubr.f32.gmra.mrb[0].mxu0 %v488
      %v1845 = vpop.f32.mrb[0].mxu0
      %v1846 = vadd.f32 0.0, %v1845
      %v1847 = vpop.f32.mrb[0].mxu0
      %1848 = vmatprep.mubr.f32.mxu0 0.0
      %1849 = vmatmul.mubr.f32.gmra.mrb[0].mxu0 %v490
      %v1850 = vpop.f32.mrb[0].mxu0
      %v1851 = vadd.f32 0.0, %v1850
      %v1852 = vpop.f32.mrb[0].mxu0
      %1853 = vmatprep.mubr.f32.mxu0 0.0
      %1854 = vmatmul.mubr.f32.gmra.mrb[0].mxu0 %v492
      %v1855 = vpop.f32.mrb[0].mxu0
      %v1856 = vadd.f32 0.0, %v1855
      %v1857 = vpop.f32.mrb[0].mxu0
      %1858 = vmatprep.mubr.f32.mxu0 0.0
      %1859 = vmatmul.mubr.f32.gmra.mrb[0].mxu0 %v494
      %v1860 = vpop.f32.mrb[0].mxu0
      %v1861 = vadd.f32 0.0, %v1860
      %v1862 = vpop.f32.mrb[0].mxu0
      %1863 = vmatprep.mubr.f32.mxu0 0.0
      %1864 = vmatmul.mubr.f32.gmra.mrb[0].mxu0 %v496
      %v1865 = vpop.f32.mrb[0].mxu0
      %v1866 = vadd.f32 0.0, %v1865
      %v1867 = vpop.f32.mrb[0].mxu0
      %1868 = vmatprep.mubr.f32.mxu0 0.0
      %1869 = vmatmul.mubr.f32.gmra.mrb[0].mxu0 %v498
      %v1870 = vpop.f32.mrb[0].mxu0
      %v1871 = vadd.f32 0.0, %v1870
      %v1872 = vpop.f32.mrb[0].mxu0
      %1873 = vmatprep.mubr.f32.mxu0 0.0
      %1874 = vmatmul.mubr.f32.gmra.mrb[0].mxu0 %v500
      %v1875 = vpop.f32.mrb[0].mxu0
      %v1876 = vadd.f32 0.0, %v1875
      %v1877 = vpop.f32.mrb[0].mxu0
      %1878 = vmatprep.mubr.f32.mxu0 0.0
      %1879 = vmatmul.mubr.f32.gmra.mrb[0].mxu0 %v502
      %v1880 = vpop.f32.mrb[0].mxu0
      %v1881 = vadd.f32 0.0, %v1880
      %v1882 = vpop.f32.mrb[0].mxu0
      %1883 = vmatprep.mubr.f32.mxu0 0.0
      %1884 = vmatmul.mubr.f32.gmra.mrb[0].mxu0 %v504
      %v1885 = vpop.f32.mrb[0].mxu0
      %v1886 = vadd.f32 0.0, %v1885
      %v1887 = vpop.f32.mrb[0].mxu0
      %1888 = vmatprep.mubr.f32.mxu0 0.0
      %1889 = vmatmul.mubr.f32.gmra.mrb[0].mxu0 %v506
      %v1890 = vpop.f32.mrb[0].mxu0
      %v1891 = vadd.f32 0.0, %v1890
      %v1892 = vpop.f32.mrb[0].mxu0
      %1893 = vmatprep.mubr.f32.mxu0 0.0
      %1894 = vmatmul.mubr.f32.gmra.mrb[0].mxu0 %v508
      %v1895 = vpop.f32.mrb[0].mxu0
      %v1896 = vadd.f32 0.0, %v1895
      %v1897 = vpop.f32.mrb[0].mxu0
      %1898 = vmatprep.mubr.f32.mxu0 0.0
      %1899 = vmatmul.mubr.f32.gmra.mrb[0].mxu0 %v510
      %v1900 = vpop.f32.mrb[0].mxu0
      %v1901 = vadd.f32 0.0, %v1900
      %v1902 = vpop.f32.mrb[0].mxu0
      %1903 = vmatprep.mubr.f32.mxu0 0.0
      %1904 = vmatmul.mubr.f32.gmra.mrb[0].mxu0 %v512
      %v1905 = vpop.f32.mrb[0].mxu0
      %v1906 = vadd.f32 0.0, %v1905
      %v1907 = vpop.f32.mrb[0].mxu0
      %1908 = vmatprep.mubr.f32.mxu0 0.0
      %1909 = vmatmul.mubr.f32.gmra.mrb[0].mxu0 %v514
      %v1910 = vpop.f32.mrb[0].mxu0
      %v1911 = vadd.f32 0.0, %v1910
      %v1912 = vpop.f32.mrb[0].mxu0
      %1913 = vmatprep.mubr.f32.mxu0 0.0
      %1914 = vmatmul.mubr.f32.gmra.mrb[0].mxu0 %v516
      %v1915 = vpop.f32.mrb[0].mxu0
      %v1916 = vadd.f32 0.0, %v1915
      %v1917 = vpop.f32.mrb[0].mxu0
      %1918 = vmatprep.mubr.f32.mxu0 0.0
      %1919 = vmatmul.mubr.f32.gmra.mrb[0].mxu0 %v518
      %v1920 = vpop.f32.mrb[0].mxu0
      %v1921 = vadd.f32 0.0, %v1920
      %v1922 = vpop.f32.mrb[0].mxu0
      %1923 = vmatprep.mubr.f32.mxu0 0.0
      %1924 = vmatmul.mubr.f32.gmra.mrb[0].mxu0 %v1705
      %v1925 = vpop.f32.mrb[0].mxu0
      %v1926 = vadd.f32 0.0, %v1925
      %v1927 = vpop.f32.mrb[0].mxu0
      %1928 = vmatprep.mubr.f32.mxu0 0.0
      %1929 = vmatmul.mubr.f32.gmra.mrb[0].mxu0 %v1707
      %v1930 = vpop.f32.mrb[0].mxu0
      %v1931 = vadd.f32 0.0, %v1930
      %v1932 = vpop.f32.mrb[0].mxu0
      %1933 = vdwg.mxu0
      %v1934 = vadd.f32 %v1667, %v1776
      %v1935 = vadd.f32 %v1668, %v1781
      %v1936 = vadd.f32 %v1669, %v1786
      %v1937 = vadd.f32 %v1670, %v1791
      %v1938 = vadd.f32 %v1671, %v1796
      %v1939 = vadd.f32 %v1672, %v1801
      %v1940 = vadd.f32 %v1673, %v1806
      %v1941 = vadd.f32 %v1674, %v1811
      %v1942 = vadd.f32 %v1675, %v1816
      %v1943 = vadd.f32 %v1676, %v1821
      %v1944 = vadd.f32 %v1677, %v1826
      %v1945 = vadd.f32 %v1678, %v1831
      %v1946 = vadd.f32 %v1679, %v1836
      %v1947 = vadd.f32 %v1680, %v1841
      %v1948 = vadd.f32 %v1681, %v1846
      %v1949 = vadd.f32 %v1682, %v1851
      %v1950 = vadd.f32 %v1683, %v1856
      %v1951 = vadd.f32 %v1684, %v1861
      %v1952 = vadd.f32 %v1685, %v1866
      %v1953 = vadd.f32 %v1686, %v1871
      %v1954 = vadd.f32 %v1687, %v1876
      %v1955 = vadd.f32 %v1688, %v1881
      %v1956 = vadd.f32 %v1689, %v1886
      %v1957 = vadd.f32 %v1690, %v1891
      %v1958 = vadd.f32 %v1691, %v1896
      %v1959 = vadd.f32 %v1692, %v1901
      %v1960 = vadd.f32 %v1693, %v1906
      %v1961 = vadd.f32 %v1694, %v1911
      %v1962 = vadd.f32 %v1695, %v1916
      %v1963 = vadd.f32 %v1696, %v1921
      %v1964 = vadd.f32 %v1697, %v1926
      %v1965 = vadd.f32 %v1698, %v1931
      %v1966 = vrot.slane %v311, 2
      %v1967 = vrot.slane %v312, 2
      %v1968 = vsel %vm1034, %v1966, %v1967
      %v1969 = vrot.slane %v313, 2
      %v1970 = vsel %vm1034, %v1967, %v1969
      %v1971 = vsel %vm455, %v1968, 0
      %v1973 = vsel %vm455, %v1970, 0
      %1975 = vmatprep.subr.mxu0 0.0
      %1976 = vmatpush1.msra.mxu0 %v322
      %1977 = vmatprep.subr.mxu0 0.0
      %1978 = vmatpush1.msra.mxu0 0.0
      %1979 = vmatprep.subr.mxu0 0.0
      %1980 = vmatpush1.msra.mxu0 0.0
      %1981 = vmatprep.subr.mxu0 0.0
      %1982 = vmatpush1.msra.mxu0 0.0
      %1983 = vmatprep.subr.mxu0 0.0
      %1984 = vmatpush1.msra.mxu0 0.0
      %1985 = vmatprep.subr.mxu0 0.0
      %1986 = vmatpush1.msra.mxu0 0.0
      %1987 = vmatprep.subr.mxu0 0.0
      %1988 = vmatpush1.msra.mxu0 0.0
      %1989 = vmatprep.subr.mxu0 0.0
      %1990 = vmatpush1.msra.mxu0 0.0
      %1991 = vmatprep.subr.mxu0 0.0
      %1992 = vmatpush1.msra.mxu0 0.0
      %1993 = vmatprep.subr.mxu0 0.0
      %1994 = vmatpush1.msra.mxu0 0.0
      %1995 = vmatprep.subr.mxu0 0.0
      %1996 = vmatpush1.msra.mxu0 0.0
      %1997 = vmatprep.subr.mxu0 0.0
      %1998 = vmatpush1.msra.mxu0 0.0
      %1999 = vmatprep.subr.mxu0 0.0
      %2000 = vmatpush1.msra.mxu0 0.0
      %2001 = vmatprep.subr.mxu0 0.0
      %2002 = vmatpush1.msra.mxu0 0.0
      %2003 = vmatprep.subr.mxu0 0.0
      %2004 = vmatpush1.msra.mxu0 0.0
      %2005 = vmatprep.subr.mxu0 0.0
      %2006 = vmatpush1.msra.mxu0 0.0
      %2007 = vmatprep.subr.mxu0 0.0
      %2008 = vmatpush1.msra.mxu0 0.0
      %2009 = vmatprep.subr.mxu0 0.0
      %2010 = vmatpush1.msra.mxu0 0.0
      %2011 = vmatprep.subr.mxu0 0.0
      %2012 = vmatpush1.msra.mxu0 0.0
      %2013 = vmatprep.subr.mxu0 0.0
      %2014 = vmatpush1.msra.mxu0 0.0
      %2015 = vmatprep.subr.mxu0 0.0
      %2016 = vmatpush1.msra.mxu0 0.0
      %2017 = vmatprep.subr.mxu0 0.0
      %2018 = vmatpush1.msra.mxu0 0.0
      %2019 = vmatprep.subr.mxu0 0.0
      %2020 = vmatpush1.msra.mxu0 0.0
      %2021 = vmatprep.subr.mxu0 0.0
      %2022 = vmatpush1.msra.mxu0 0.0
      %2023 = vmatprep.subr.mxu0 0.0
      %2024 = vmatpush1.msra.mxu0 0.0
      %2025 = vmatprep.subr.mxu0 0.0
      %2026 = vmatpush1.msra.mxu0 0.0
      %2027 = vmatprep.subr.mxu0 0.0
      %2028 = vmatpush1.msra.mxu0 0.0
      %2029 = vmatprep.subr.mxu0 0.0
      %2030 = vmatpush1.msra.mxu0 0.0
      %2031 = vmatprep.subr.mxu0 0.0
      %2032 = vmatpush1.msra.mxu0 0.0
      %2033 = vmatprep.subr.mxu0 0.0
      %2034 = vmatpush1.msra.mxu0 0.0
      %2035 = vmatprep.subr.mxu0 0.0
      %2036 = vmatpush1.msra.mxu0 0.0
      %2037 = vmatprep.subr.mxu0 0.0
      %2038 = vmatpush1.msra.mxu0 0.0
      %2039 = vmatprep.mubr.f32.mxu0 0.0
      %2040 = vmatmul.mubr.f32.gmra.mrb[0].mxu0 %v1119
      %v2041 = vpop.f32.mrb[0].mxu0
      %v2042 = vadd.f32 0.0, %v2041
      %v2043 = vpop.f32.mrb[0].mxu0
      %2044 = vmatprep.mubr.f32.mxu0 0.0
      %2045 = vmatmul.mubr.f32.gmra.mrb[0].mxu0 %v1121
      %v2046 = vpop.f32.mrb[0].mxu0
      %v2047 = vadd.f32 0.0, %v2046
      %v2048 = vpop.f32.mrb[0].mxu0
      %2049 = vmatprep.mubr.f32.mxu0 0.0
      %2050 = vmatmul.mubr.f32.gmra.mrb[0].mxu0 %v1123
      %v2051 = vpop.f32.mrb[0].mxu0
      %v2052 = vadd.f32 0.0, %v2051
      %v2053 = vpop.f32.mrb[0].mxu0
      %2054 = vmatprep.mubr.f32.mxu0 0.0
      %2055 = vmatmul.mubr.f32.gmra.mrb[0].mxu0 %v1125
      %v2056 = vpop.f32.mrb[0].mxu0
      %v2057 = vadd.f32 0.0, %v2056
      %v2058 = vpop.f32.mrb[0].mxu0
      %2059 = vmatprep.mubr.f32.mxu0 0.0
      %2060 = vmatmul.mubr.f32.gmra.mrb[0].mxu0 %v1127
      %v2061 = vpop.f32.mrb[0].mxu0
      %v2062 = vadd.f32 0.0, %v2061
      %v2063 = vpop.f32.mrb[0].mxu0
      %2064 = vmatprep.mubr.f32.mxu0 0.0
      %2065 = vmatmul.mubr.f32.gmra.mrb[0].mxu0 %v1129
      %v2066 = vpop.f32.mrb[0].mxu0
      %v2067 = vadd.f32 0.0, %v2066
      %v2068 = vpop.f32.mrb[0].mxu0
      %2069 = vmatprep.mubr.f32.mxu0 0.0
      %2070 = vmatmul.mubr.f32.gmra.mrb[0].mxu0 %v1131
      %v2071 = vpop.f32.mrb[0].mxu0
      %v2072 = vadd.f32 0.0, %v2071
      %v2073 = vpop.f32.mrb[0].mxu0
      %2074 = vmatprep.mubr.f32.mxu0 0.0
      %2075 = vmatmul.mubr.f32.gmra.mrb[0].mxu0 %v1133
      %v2076 = vpop.f32.mrb[0].mxu0
      %v2077 = vadd.f32 0.0, %v2076
      %v2078 = vpop.f32.mrb[0].mxu0
      %2079 = vmatprep.mubr.f32.mxu0 0.0
      %2080 = vmatmul.mubr.f32.gmra.mrb[0].mxu0 %v1135
      %v2081 = vpop.f32.mrb[0].mxu0
      %v2082 = vadd.f32 0.0, %v2081
      %v2083 = vpop.f32.mrb[0].mxu0
      %2084 = vmatprep.mubr.f32.mxu0 0.0
      %2085 = vmatmul.mubr.f32.gmra.mrb[0].mxu0 %v1137
      %v2086 = vpop.f32.mrb[0].mxu0
      %v2087 = vadd.f32 0.0, %v2086
      %v2088 = vpop.f32.mrb[0].mxu0
      %2089 = vmatprep.mubr.f32.mxu0 0.0
      %2090 = vmatmul.mubr.f32.gmra.mrb[0].mxu0 %v1139
      %v2091 = vpop.f32.mrb[0].mxu0
      %v2092 = vadd.f32 0.0, %v2091
      %v2093 = vpop.f32.mrb[0].mxu0
      %2094 = vmatprep.mubr.f32.mxu0 0.0
      %2095 = vmatmul.mubr.f32.gmra.mrb[0].mxu0 %v1141
      %v2096 = vpop.f32.mrb[0].mxu0
      %v2097 = vadd.f32 0.0, %v2096
      %v2098 = vpop.f32.mrb[0].mxu0
      %2099 = vmatprep.mubr.f32.mxu0 0.0
      %2100 = vmatmul.mubr.f32.gmra.mrb[0].mxu0 %v1143
      %v2101 = vpop.f32.mrb[0].mxu0
      %v2102 = vadd.f32 0.0, %v2101
      %v2103 = vpop.f32.mrb[0].mxu0
      %2104 = vmatprep.mubr.f32.mxu0 0.0
      %2105 = vmatmul.mubr.f32.gmra.mrb[0].mxu0 %v1145
      %v2106 = vpop.f32.mrb[0].mxu0
      %v2107 = vadd.f32 0.0, %v2106
      %v2108 = vpop.f32.mrb[0].mxu0
      %2109 = vmatprep.mubr.f32.mxu0 0.0
      %2110 = vmatmul.mubr.f32.gmra.mrb[0].mxu0 %v1147
      %v2111 = vpop.f32.mrb[0].mxu0
      %v2112 = vadd.f32 0.0, %v2111
      %v2113 = vpop.f32.mrb[0].mxu0
      %2114 = vmatprep.mubr.f32.mxu0 0.0
      %2115 = vmatmul.mubr.f32.gmra.mrb[0].mxu0 %v1149
      %v2116 = vpop.f32.mrb[0].mxu0
      %v2117 = vadd.f32 0.0, %v2116
      %v2118 = vpop.f32.mrb[0].mxu0
      %2119 = vmatprep.mubr.f32.mxu0 0.0
      %2120 = vmatmul.mubr.f32.gmra.mrb[0].mxu0 %v1151
      %v2121 = vpop.f32.mrb[0].mxu0
      %v2122 = vadd.f32 0.0, %v2121
      %v2123 = vpop.f32.mrb[0].mxu0
      %2124 = vmatprep.mubr.f32.mxu0 0.0
      %2125 = vmatmul.mubr.f32.gmra.mrb[0].mxu0 %v1153
      %v2126 = vpop.f32.mrb[0].mxu0
      %v2127 = vadd.f32 0.0, %v2126
      %v2128 = vpop.f32.mrb[0].mxu0
      %2129 = vmatprep.mubr.f32.mxu0 0.0
      %2130 = vmatmul.mubr.f32.gmra.mrb[0].mxu0 %v1155
      %v2131 = vpop.f32.mrb[0].mxu0
      %v2132 = vadd.f32 0.0, %v2131
      %v2133 = vpop.f32.mrb[0].mxu0
      %2134 = vmatprep.mubr.f32.mxu0 0.0
      %2135 = vmatmul.mubr.f32.gmra.mrb[0].mxu0 %v1157
      %v2136 = vpop.f32.mrb[0].mxu0
      %v2137 = vadd.f32 0.0, %v2136
      %v2138 = vpop.f32.mrb[0].mxu0
      %2139 = vmatprep.mubr.f32.mxu0 0.0
      %2140 = vmatmul.mubr.f32.gmra.mrb[0].mxu0 %v1159
      %v2141 = vpop.f32.mrb[0].mxu0
      %v2142 = vadd.f32 0.0, %v2141
      %v2143 = vpop.f32.mrb[0].mxu0
      %2144 = vmatprep.mubr.f32.mxu0 0.0
      %2145 = vmatmul.mubr.f32.gmra.mrb[0].mxu0 %v1161
      %v2146 = vpop.f32.mrb[0].mxu0
      %v2147 = vadd.f32 0.0, %v2146
      %v2148 = vpop.f32.mrb[0].mxu0
      %2149 = vmatprep.mubr.f32.mxu0 0.0
      %2150 = vmatmul.mubr.f32.gmra.mrb[0].mxu0 %v1163
      %v2151 = vpop.f32.mrb[0].mxu0
      %v2152 = vadd.f32 0.0, %v2151
      %v2153 = vpop.f32.mrb[0].mxu0
      %2154 = vmatprep.mubr.f32.mxu0 0.0
      %2155 = vmatmul.mubr.f32.gmra.mrb[0].mxu0 %v1165
      %v2156 = vpop.f32.mrb[0].mxu0
      %v2157 = vadd.f32 0.0, %v2156
      %v2158 = vpop.f32.mrb[0].mxu0
      %2159 = vmatprep.mubr.f32.mxu0 0.0
      %2160 = vmatmul.mubr.f32.gmra.mrb[0].mxu0 %v1167
      %v2161 = vpop.f32.mrb[0].mxu0
      %v2162 = vadd.f32 0.0, %v2161
      %v2163 = vpop.f32.mrb[0].mxu0
      %2164 = vmatprep.mubr.f32.mxu0 0.0
      %2165 = vmatmul.mubr.f32.gmra.mrb[0].mxu0 %v1169
      %v2166 = vpop.f32.mrb[0].mxu0
      %v2167 = vadd.f32 0.0, %v2166
      %v2168 = vpop.f32.mrb[0].mxu0
      %2169 = vmatprep.mubr.f32.mxu0 0.0
      %2170 = vmatmul.mubr.f32.gmra.mrb[0].mxu0 %v1171
      %v2171 = vpop.f32.mrb[0].mxu0
      %v2172 = vadd.f32 0.0, %v2171
      %v2173 = vpop.f32.mrb[0].mxu0
      %2174 = vmatprep.mubr.f32.mxu0 0.0
      %2175 = vmatmul.mubr.f32.gmra.mrb[0].mxu0 %v1173
      %v2176 = vpop.f32.mrb[0].mxu0
      %v2177 = vadd.f32 0.0, %v2176
      %v2178 = vpop.f32.mrb[0].mxu0
      %2179 = vmatprep.mubr.f32.mxu0 0.0
      %2180 = vmatmul.mubr.f32.gmra.mrb[0].mxu0 %v1175
      %v2181 = vpop.f32.mrb[0].mxu0
      %v2182 = vadd.f32 0.0, %v2181
      %v2183 = vpop.f32.mrb[0].mxu0
      %2184 = vmatprep.mubr.f32.mxu0 0.0
      %2185 = vmatmul.mubr.f32.gmra.mrb[0].mxu0 %v1177
      %v2186 = vpop.f32.mrb[0].mxu0
      %v2187 = vadd.f32 0.0, %v2186
      %v2188 = vpop.f32.mrb[0].mxu0
      %2189 = vmatprep.mubr.f32.mxu0 0.0
      %2190 = vmatmul.mubr.f32.gmra.mrb[0].mxu0 %v1971
      %v2191 = vpop.f32.mrb[0].mxu0
      %v2192 = vadd.f32 0.0, %v2191
      %v2193 = vpop.f32.mrb[0].mxu0
      %2194 = vmatprep.mubr.f32.mxu0 0.0
      %2195 = vmatmul.mubr.f32.gmra.mrb[0].mxu0 %v1973
      %v2196 = vpop.f32.mrb[0].mxu0
      %v2197 = vadd.f32 0.0, %v2196
      %v2198 = vpop.f32.mrb[0].mxu0
      %2199 = vdwg.mxu0
      %v2200 = vadd.f32 %v1934, %v2042
      %v2201 = vadd.f32 %v1935, %v2047
      %v2202 = vadd.f32 %v1936, %v2052
      %v2203 = vadd.f32 %v1937, %v2057
      %v2204 = vadd.f32 %v1938, %v2062
      %v2205 = vadd.f32 %v1939, %v2067
      %v2206 = vadd.f32 %v1940, %v2072
      %v2207 = vadd.f32 %v1941, %v2077
      %v2208 = vadd.f32 %v1942, %v2082
      %v2209 = vadd.f32 %v1943, %v2087
      %v2210 = vadd.f32 %v1944, %v2092
      %v2211 = vadd.f32 %v1945, %v2097
      %v2212 = vadd.f32 %v1946, %v2102
      %v2213 = vadd.f32 %v1947, %v2107
      %v2214 = vadd.f32 %v1948, %v2112
      %v2215 = vadd.f32 %v1949, %v2117
      %v2216 = vadd.f32 %v1950, %v2122
      %v2217 = vadd.f32 %v1951, %v2127
      %v2218 = vadd.f32 %v1952, %v2132
      %v2219 = vadd.f32 %v1953, %v2137
      %v2220 = vadd.f32 %v1954, %v2142
      %v2221 = vadd.f32 %v1955, %v2147
      %v2222 = vadd.f32 %v1956, %v2152
      %v2223 = vadd.f32 %v1957, %v2157
      %v2224 = vadd.f32 %v1958, %v2162
      %v2225 = vadd.f32 %v1959, %v2167
      %v2226 = vadd.f32 %v1960, %v2172
      %v2227 = vadd.f32 %v1961, %v2177
      %v2228 = vadd.f32 %v1962, %v2182
      %v2229 = vadd.f32 %v1963, %v2187
      %v2230 = vadd.f32 %v1964, %v2192
      %v2231 = vadd.f32 %v1965, %v2197
      %v2233 = vsel %vm455, %v314, 0
      %v2236 = vsel %vm455, %v315, 0
      %2238 = vmatprep.subr.mxu0 0.0
      %2239 = vmatpush1.msra.mxu0 %v323
      %2240 = vmatprep.subr.mxu0 0.0
      %2241 = vmatpush1.msra.mxu0 0.0
      %2242 = vmatprep.subr.mxu0 0.0
      %2243 = vmatpush1.msra.mxu0 0.0
      %2244 = vmatprep.subr.mxu0 0.0
      %2245 = vmatpush1.msra.mxu0 0.0
      %2246 = vmatprep.subr.mxu0 0.0
      %2247 = vmatpush1.msra.mxu0 0.0
      %2248 = vmatprep.subr.mxu0 0.0
      %2249 = vmatpush1.msra.mxu0 0.0
      %2250 = vmatprep.subr.mxu0 0.0
      %2251 = vmatpush1.msra.mxu0 0.0
      %2252 = vmatprep.subr.mxu0 0.0
      %2253 = vmatpush1.msra.mxu0 0.0
      %2254 = vmatprep.subr.mxu0 0.0
      %2255 = vmatpush1.msra.mxu0 0.0
      %2256 = vmatprep.subr.mxu0 0.0
      %2257 = vmatpush1.msra.mxu0 0.0
      %2258 = vmatprep.subr.mxu0 0.0
      %2259 = vmatpush1.msra.mxu0 0.0
      %2260 = vmatprep.subr.mxu0 0.0
      %2261 = vmatpush1.msra.mxu0 0.0
      %2262 = vmatprep.subr.mxu0 0.0
      %2263 = vmatpush1.msra.mxu0 0.0
      %2264 = vmatprep.subr.mxu0 0.0
      %2265 = vmatpush1.msra.mxu0 0.0
      %2266 = vmatprep.subr.mxu0 0.0
      %2267 = vmatpush1.msra.mxu0 0.0
      %2268 = vmatprep.subr.mxu0 0.0
      %2269 = vmatpush1.msra.mxu0 0.0
      %2270 = vmatprep.subr.mxu0 0.0
      %2271 = vmatpush1.msra.mxu0 0.0
      %2272 = vmatprep.subr.mxu0 0.0
      %2273 = vmatpush1.msra.mxu0 0.0
      %2274 = vmatprep.subr.mxu0 0.0
      %2275 = vmatpush1.msra.mxu0 0.0
      %2276 = vmatprep.subr.mxu0 0.0
      %2277 = vmatpush1.msra.mxu0 0.0
      %2278 = vmatprep.subr.mxu0 0.0
      %2279 = vmatpush1.msra.mxu0 0.0
      %2280 = vmatprep.subr.mxu0 0.0
      %2281 = vmatpush1.msra.mxu0 0.0
      %2282 = vmatprep.subr.mxu0 0.0
      %2283 = vmatpush1.msra.mxu0 0.0
      %2284 = vmatprep.subr.mxu0 0.0
      %2285 = vmatpush1.msra.mxu0 0.0
      %2286 = vmatprep.subr.mxu0 0.0
      %2287 = vmatpush1.msra.mxu0 0.0
      %2288 = vmatprep.subr.mxu0 0.0
      %2289 = vmatpush1.msra.mxu0 0.0
      %2290 = vmatprep.subr.mxu0 0.0
      %2291 = vmatpush1.msra.mxu0 0.0
      %2292 = vmatprep.subr.mxu0 0.0
      %2293 = vmatpush1.msra.mxu0 0.0
      %2294 = vmatprep.subr.mxu0 0.0
      %2295 = vmatpush1.msra.mxu0 0.0
      %2296 = vmatprep.subr.mxu0 0.0
      %2297 = vmatpush1.msra.mxu0 0.0
      %2298 = vmatprep.subr.mxu0 0.0
      %2299 = vmatpush1.msra.mxu0 0.0
      %2300 = vmatprep.subr.mxu0 0.0
      %2301 = vmatpush1.msra.mxu0 0.0
      %2302 = vmatprep.mubr.f32.mxu0 0.0
      %2303 = vmatmul.mubr.f32.gmra.mrb[0].mxu0 %v753
      %v2304 = vpop.f32.mrb[0].mxu0
      %v2305 = vadd.f32 0.0, %v2304
      %v2306 = vpop.f32.mrb[0].mxu0
      %2307 = vmatprep.mubr.f32.mxu0 0.0
      %2308 = vmatmul.mubr.f32.gmra.mrb[0].mxu0 %v755
      %v2309 = vpop.f32.mrb[0].mxu0
      %v2310 = vadd.f32 0.0, %v2309
      %v2311 = vpop.f32.mrb[0].mxu0
      %2312 = vmatprep.mubr.f32.mxu0 0.0
      %2313 = vmatmul.mubr.f32.gmra.mrb[0].mxu0 %v757
      %v2314 = vpop.f32.mrb[0].mxu0
      %v2315 = vadd.f32 0.0, %v2314
      %v2316 = vpop.f32.mrb[0].mxu0
      %2317 = vmatprep.mubr.f32.mxu0 0.0
      %2318 = vmatmul.mubr.f32.gmra.mrb[0].mxu0 %v759
      %v2319 = vpop.f32.mrb[0].mxu0
      %v2320 = vadd.f32 0.0, %v2319
      %v2321 = vpop.f32.mrb[0].mxu0
      %2322 = vmatprep.mubr.f32.mxu0 0.0
      %2323 = vmatmul.mubr.f32.gmra.mrb[0].mxu0 %v761
      %v2324 = vpop.f32.mrb[0].mxu0
      %v2325 = vadd.f32 0.0, %v2324
      %v2326 = vpop.f32.mrb[0].mxu0
      %2327 = vmatprep.mubr.f32.mxu0 0.0
      %2328 = vmatmul.mubr.f32.gmra.mrb[0].mxu0 %v763
      %v2329 = vpop.f32.mrb[0].mxu0
      %v2330 = vadd.f32 0.0, %v2329
      %v2331 = vpop.f32.mrb[0].mxu0
      %2332 = vmatprep.mubr.f32.mxu0 0.0
      %2333 = vmatmul.mubr.f32.gmra.mrb[0].mxu0 %v765
      %v2334 = vpop.f32.mrb[0].mxu0
      %v2335 = vadd.f32 0.0, %v2334
      %v2336 = vpop.f32.mrb[0].mxu0
      %2337 = vmatprep.mubr.f32.mxu0 0.0
      %2338 = vmatmul.mubr.f32.gmra.mrb[0].mxu0 %v767
      %v2339 = vpop.f32.mrb[0].mxu0
      %v2340 = vadd.f32 0.0, %v2339
      %v2341 = vpop.f32.mrb[0].mxu0
      %2342 = vmatprep.mubr.f32.mxu0 0.0
      %2343 = vmatmul.mubr.f32.gmra.mrb[0].mxu0 %v769
      %v2344 = vpop.f32.mrb[0].mxu0
      %v2345 = vadd.f32 0.0, %v2344
      %v2346 = vpop.f32.mrb[0].mxu0
      %2347 = vmatprep.mubr.f32.mxu0 0.0
      %2348 = vmatmul.mubr.f32.gmra.mrb[0].mxu0 %v771
      %v2349 = vpop.f32.mrb[0].mxu0
      %v2350 = vadd.f32 0.0, %v2349
      %v2351 = vpop.f32.mrb[0].mxu0
      %2352 = vmatprep.mubr.f32.mxu0 0.0
      %2353 = vmatmul.mubr.f32.gmra.mrb[0].mxu0 %v773
      %v2354 = vpop.f32.mrb[0].mxu0
      %v2355 = vadd.f32 0.0, %v2354
      %v2356 = vpop.f32.mrb[0].mxu0
      %2357 = vmatprep.mubr.f32.mxu0 0.0
      %2358 = vmatmul.mubr.f32.gmra.mrb[0].mxu0 %v775
      %v2359 = vpop.f32.mrb[0].mxu0
      %v2360 = vadd.f32 0.0, %v2359
      %v2361 = vpop.f32.mrb[0].mxu0
      %2362 = vmatprep.mubr.f32.mxu0 0.0
      %2363 = vmatmul.mubr.f32.gmra.mrb[0].mxu0 %v777
      %v2364 = vpop.f32.mrb[0].mxu0
      %v2365 = vadd.f32 0.0, %v2364
      %v2366 = vpop.f32.mrb[0].mxu0
      %2367 = vmatprep.mubr.f32.mxu0 0.0
      %2368 = vmatmul.mubr.f32.gmra.mrb[0].mxu0 %v779
      %v2369 = vpop.f32.mrb[0].mxu0
      %v2370 = vadd.f32 0.0, %v2369
      %v2371 = vpop.f32.mrb[0].mxu0
      %2372 = vmatprep.mubr.f32.mxu0 0.0
      %2373 = vmatmul.mubr.f32.gmra.mrb[0].mxu0 %v781
      %v2374 = vpop.f32.mrb[0].mxu0
      %v2375 = vadd.f32 0.0, %v2374
      %v2376 = vpop.f32.mrb[0].mxu0
      %2377 = vmatprep.mubr.f32.mxu0 0.0
      %2378 = vmatmul.mubr.f32.gmra.mrb[0].mxu0 %v783
      %v2379 = vpop.f32.mrb[0].mxu0
      %v2380 = vadd.f32 0.0, %v2379
      %v2381 = vpop.f32.mrb[0].mxu0
      %2382 = vmatprep.mubr.f32.mxu0 0.0
      %2383 = vmatmul.mubr.f32.gmra.mrb[0].mxu0 %v785
      %v2384 = vpop.f32.mrb[0].mxu0
      %v2385 = vadd.f32 0.0, %v2384
      %v2386 = vpop.f32.mrb[0].mxu0
      %2387 = vmatprep.mubr.f32.mxu0 0.0
      %2388 = vmatmul.mubr.f32.gmra.mrb[0].mxu0 %v787
      %v2389 = vpop.f32.mrb[0].mxu0
      %v2390 = vadd.f32 0.0, %v2389
      %v2391 = vpop.f32.mrb[0].mxu0
      %2392 = vmatprep.mubr.f32.mxu0 0.0
      %2393 = vmatmul.mubr.f32.gmra.mrb[0].mxu0 %v789
      %v2394 = vpop.f32.mrb[0].mxu0
      %v2395 = vadd.f32 0.0, %v2394
      %v2396 = vpop.f32.mrb[0].mxu0
      %2397 = vmatprep.mubr.f32.mxu0 0.0
      %2398 = vmatmul.mubr.f32.gmra.mrb[0].mxu0 %v791
      %v2399 = vpop.f32.mrb[0].mxu0
      %v2400 = vadd.f32 0.0, %v2399
      %v2401 = vpop.f32.mrb[0].mxu0
      %2402 = vmatprep.mubr.f32.mxu0 0.0
      %2403 = vmatmul.mubr.f32.gmra.mrb[0].mxu0 %v793
      %v2404 = vpop.f32.mrb[0].mxu0
      %v2405 = vadd.f32 0.0, %v2404
      %v2406 = vpop.f32.mrb[0].mxu0
      %2407 = vmatprep.mubr.f32.mxu0 0.0
      %2408 = vmatmul.mubr.f32.gmra.mrb[0].mxu0 %v795
      %v2409 = vpop.f32.mrb[0].mxu0
      %v2410 = vadd.f32 0.0, %v2409
      %v2411 = vpop.f32.mrb[0].mxu0
      %2412 = vmatprep.mubr.f32.mxu0 0.0
      %2413 = vmatmul.mubr.f32.gmra.mrb[0].mxu0 %v797
      %v2414 = vpop.f32.mrb[0].mxu0
      %v2415 = vadd.f32 0.0, %v2414
      %v2416 = vpop.f32.mrb[0].mxu0
      %2417 = vmatprep.mubr.f32.mxu0 0.0
      %2418 = vmatmul.mubr.f32.gmra.mrb[0].mxu0 %v799
      %v2419 = vpop.f32.mrb[0].mxu0
      %v2420 = vadd.f32 0.0, %v2419
      %v2421 = vpop.f32.mrb[0].mxu0
      %2422 = vmatprep.mubr.f32.mxu0 0.0
      %2423 = vmatmul.mubr.f32.gmra.mrb[0].mxu0 %v801
      %v2424 = vpop.f32.mrb[0].mxu0
      %v2425 = vadd.f32 0.0, %v2424
      %v2426 = vpop.f32.mrb[0].mxu0
      %2427 = vmatprep.mubr.f32.mxu0 0.0
      %2428 = vmatmul.mubr.f32.gmra.mrb[0].mxu0 %v803
      %v2429 = vpop.f32.mrb[0].mxu0
      %v2430 = vadd.f32 0.0, %v2429
      %v2431 = vpop.f32.mrb[0].mxu0
      %2432 = vmatprep.mubr.f32.mxu0 0.0
      %2433 = vmatmul.mubr.f32.gmra.mrb[0].mxu0 %v805
      %v2434 = vpop.f32.mrb[0].mxu0
      %v2435 = vadd.f32 0.0, %v2434
      %v2436 = vpop.f32.mrb[0].mxu0
      %2437 = vmatprep.mubr.f32.mxu0 0.0
      %2438 = vmatmul.mubr.f32.gmra.mrb[0].mxu0 %v807
      %v2439 = vpop.f32.mrb[0].mxu0
      %v2440 = vadd.f32 0.0, %v2439
      %v2441 = vpop.f32.mrb[0].mxu0
      %2442 = vmatprep.mubr.f32.mxu0 0.0
      %2443 = vmatmul.mubr.f32.gmra.mrb[0].mxu0 %v1437
      %v2444 = vpop.f32.mrb[0].mxu0
      %v2445 = vadd.f32 0.0, %v2444
      %v2446 = vpop.f32.mrb[0].mxu0
      %2447 = vmatprep.mubr.f32.mxu0 0.0
      %2448 = vmatmul.mubr.f32.gmra.mrb[0].mxu0 %v1440
      %v2449 = vpop.f32.mrb[0].mxu0
      %v2450 = vadd.f32 0.0, %v2449
      %v2451 = vpop.f32.mrb[0].mxu0
      %2452 = vmatprep.mubr.f32.mxu0 0.0
      %2453 = vmatmul.mubr.f32.gmra.mrb[0].mxu0 %v2233
      %v2454 = vpop.f32.mrb[0].mxu0
      %v2455 = vadd.f32 0.0, %v2454
      %v2456 = vpop.f32.mrb[0].mxu0
      %2457 = vmatprep.mubr.f32.mxu0 0.0
      %2458 = vmatmul.mubr.f32.gmra.mrb[0].mxu0 %v2236
      %v2459 = vpop.f32.mrb[0].mxu0
      %v2460 = vadd.f32 0.0, %v2459
      %v2461 = vpop.f32.mrb[0].mxu0
      %2462 = vdwg.mxu0
      %v2463 = vadd.f32 %v2200, %v2305
      %v2464 = vadd.f32 %v2201, %v2310
      %v2465 = vadd.f32 %v2202, %v2315
      %v2466 = vadd.f32 %v2203, %v2320
      %v2467 = vadd.f32 %v2204, %v2325
      %v2468 = vadd.f32 %v2205, %v2330
      %v2469 = vadd.f32 %v2206, %v2335
      %v2470 = vadd.f32 %v2207, %v2340
      %v2471 = vadd.f32 %v2208, %v2345
      %v2472 = vadd.f32 %v2209, %v2350
      %v2473 = vadd.f32 %v2210, %v2355
      %v2474 = vadd.f32 %v2211, %v2360
      %v2475 = vadd.f32 %v2212, %v2365
      %v2476 = vadd.f32 %v2213, %v2370
      %v2477 = vadd.f32 %v2214, %v2375
      %v2478 = vadd.f32 %v2215, %v2380
      %v2479 = vadd.f32 %v2216, %v2385
      %v2480 = vadd.f32 %v2217, %v2390
      %v2481 = vadd.f32 %v2218, %v2395
      %v2482 = vadd.f32 %v2219, %v2400
      %v2483 = vadd.f32 %v2220, %v2405
      %v2484 = vadd.f32 %v2221, %v2410
      %v2485 = vadd.f32 %v2222, %v2415
      %v2486 = vadd.f32 %v2223, %v2420
      %v2487 = vadd.f32 %v2224, %v2425
      %v2488 = vadd.f32 %v2225, %v2430
      %v2489 = vadd.f32 %v2226, %v2435
      %v2490 = vadd.f32 %v2227, %v2440
      %v2491 = vadd.f32 %v2228, %v2445
      %v2492 = vadd.f32 %v2229, %v2450
      %v2493 = vadd.f32 %v2230, %v2455
      %v2494 = vadd.f32 %v2231, %v2460
      %v2496 = vrot.slane %v314, 1
      %v2497 = vrot.slane %v315, 1
      %v2498 = vsel %vm374, %v2496, %v2497
      %v2499 = vrot.slane %v316, 1
      %v2500 = vsel %vm374, %v2497, %v2499
      %v2501 = vsel %vm455, %v2498, 0
      %v2503 = vsel %vm455, %v2500, 0
      %2505 = vmatprep.subr.mxu0 0.0
      %2506 = vmatpush1.msra.mxu0 %v324
      %2507 = vmatprep.subr.mxu0 0.0
      %2508 = vmatpush1.msra.mxu0 0.0
      %2509 = vmatprep.subr.mxu0 0.0
      %2510 = vmatpush1.msra.mxu0 0.0
      %2511 = vmatprep.subr.mxu0 0.0
      %2512 = vmatpush1.msra.mxu0 0.0
      %2513 = vmatprep.subr.mxu0 0.0
      %2514 = vmatpush1.msra.mxu0 0.0
      %2515 = vmatprep.subr.mxu0 0.0
      %2516 = vmatpush1.msra.mxu0 0.0
      %2517 = vmatprep.subr.mxu0 0.0
      %2518 = vmatpush1.msra.mxu0 0.0
      %2519 = vmatprep.subr.mxu0 0.0
      %2520 = vmatpush1.msra.mxu0 0.0
      %2521 = vmatprep.subr.mxu0 0.0
      %2522 = vmatpush1.msra.mxu0 0.0
      %2523 = vmatprep.subr.mxu0 0.0
      %2524 = vmatpush1.msra.mxu0 0.0
      %2525 = vmatprep.subr.mxu0 0.0
      %2526 = vmatpush1.msra.mxu0 0.0
      %2527 = vmatprep.subr.mxu0 0.0
      %2528 = vmatpush1.msra.mxu0 0.0
      %2529 = vmatprep.subr.mxu0 0.0
      %2530 = vmatpush1.msra.mxu0 0.0
      %2531 = vmatprep.subr.mxu0 0.0
      %2532 = vmatpush1.msra.mxu0 0.0
      %2533 = vmatprep.subr.mxu0 0.0
      %2534 = vmatpush1.msra.mxu0 0.0
      %2535 = vmatprep.subr.mxu0 0.0
      %2536 = vmatpush1.msra.mxu0 0.0
      %2537 = vmatprep.subr.mxu0 0.0
      %2538 = vmatpush1.msra.mxu0 0.0
      %2539 = vmatprep.subr.mxu0 0.0
      %2540 = vmatpush1.msra.mxu0 0.0
      %2541 = vmatprep.subr.mxu0 0.0
      %2542 = vmatpush1.msra.mxu0 0.0
      %2543 = vmatprep.subr.mxu0 0.0
      %2544 = vmatpush1.msra.mxu0 0.0
      %2545 = vmatprep.subr.mxu0 0.0
      %2546 = vmatpush1.msra.mxu0 0.0
      %2547 = vmatprep.subr.mxu0 0.0
      %2548 = vmatpush1.msra.mxu0 0.0
      %2549 = vmatprep.subr.mxu0 0.0
      %2550 = vmatpush1.msra.mxu0 0.0
      %2551 = vmatprep.subr.mxu0 0.0
      %2552 = vmatpush1.msra.mxu0 0.0
      %2553 = vmatprep.subr.mxu0 0.0
      %2554 = vmatpush1.msra.mxu0 0.0
      %2555 = vmatprep.subr.mxu0 0.0
      %2556 = vmatpush1.msra.mxu0 0.0
      %2557 = vmatprep.subr.mxu0 0.0
      %2558 = vmatpush1.msra.mxu0 0.0
      %2559 = vmatprep.subr.mxu0 0.0
      %2560 = vmatpush1.msra.mxu0 0.0
      %2561 = vmatprep.subr.mxu0 0.0
      %2562 = vmatpush1.msra.mxu0 0.0
      %2563 = vmatprep.subr.mxu0 0.0
      %2564 = vmatpush1.msra.mxu0 0.0
      %2565 = vmatprep.subr.mxu0 0.0
      %2566 = vmatpush1.msra.mxu0 0.0
      %2567 = vmatprep.subr.mxu0 0.0
      %2568 = vmatpush1.msra.mxu0 0.0
      %2569 = vmatprep.mubr.f32.mxu0 0.0
      %2570 = vmatmul.mubr.f32.gmra.mrb[0].mxu0 %v464
      %v2571 = vpop.f32.mrb[0].mxu0
      %v2572 = vadd.f32 0.0, %v2571
      %v2573 = vpop.f32.mrb[0].mxu0
      %2574 = vmatprep.mubr.f32.mxu0 0.0
      %2575 = vmatmul.mubr.f32.gmra.mrb[0].mxu0 %v466
      %v2576 = vpop.f32.mrb[0].mxu0
      %v2577 = vadd.f32 0.0, %v2576
      %v2578 = vpop.f32.mrb[0].mxu0
      %2579 = vmatprep.mubr.f32.mxu0 0.0
      %2580 = vmatmul.mubr.f32.gmra.mrb[0].mxu0 %v468
      %v2581 = vpop.f32.mrb[0].mxu0
      %v2582 = vadd.f32 0.0, %v2581
      %v2583 = vpop.f32.mrb[0].mxu0
      %2584 = vmatprep.mubr.f32.mxu0 0.0
      %2585 = vmatmul.mubr.f32.gmra.mrb[0].mxu0 %v470
      %v2586 = vpop.f32.mrb[0].mxu0
      %v2587 = vadd.f32 0.0, %v2586
      %v2588 = vpop.f32.mrb[0].mxu0
      %2589 = vmatprep.mubr.f32.mxu0 0.0
      %2590 = vmatmul.mubr.f32.gmra.mrb[0].mxu0 %v472
      %v2591 = vpop.f32.mrb[0].mxu0
      %v2592 = vadd.f32 0.0, %v2591
      %v2593 = vpop.f32.mrb[0].mxu0
      %2594 = vmatprep.mubr.f32.mxu0 0.0
      %2595 = vmatmul.mubr.f32.gmra.mrb[0].mxu0 %v474
      %v2596 = vpop.f32.mrb[0].mxu0
      %v2597 = vadd.f32 0.0, %v2596
      %v2598 = vpop.f32.mrb[0].mxu0
      %2599 = vmatprep.mubr.f32.mxu0 0.0
      %2600 = vmatmul.mubr.f32.gmra.mrb[0].mxu0 %v476
      %v2601 = vpop.f32.mrb[0].mxu0
      %v2602 = vadd.f32 0.0, %v2601
      %v2603 = vpop.f32.mrb[0].mxu0
      %2604 = vmatprep.mubr.f32.mxu0 0.0
      %2605 = vmatmul.mubr.f32.gmra.mrb[0].mxu0 %v478
      %v2606 = vpop.f32.mrb[0].mxu0
      %v2607 = vadd.f32 0.0, %v2606
      %v2608 = vpop.f32.mrb[0].mxu0
      %2609 = vmatprep.mubr.f32.mxu0 0.0
      %2610 = vmatmul.mubr.f32.gmra.mrb[0].mxu0 %v480
      %v2611 = vpop.f32.mrb[0].mxu0
      %v2612 = vadd.f32 0.0, %v2611
      %v2613 = vpop.f32.mrb[0].mxu0
      %2614 = vmatprep.mubr.f32.mxu0 0.0
      %2615 = vmatmul.mubr.f32.gmra.mrb[0].mxu0 %v482
      %v2616 = vpop.f32.mrb[0].mxu0
      %v2617 = vadd.f32 0.0, %v2616
      %v2618 = vpop.f32.mrb[0].mxu0
      %2619 = vmatprep.mubr.f32.mxu0 0.0
      %2620 = vmatmul.mubr.f32.gmra.mrb[0].mxu0 %v484
      %v2621 = vpop.f32.mrb[0].mxu0
      %v2622 = vadd.f32 0.0, %v2621
      %v2623 = vpop.f32.mrb[0].mxu0
      %2624 = vmatprep.mubr.f32.mxu0 0.0
      %2625 = vmatmul.mubr.f32.gmra.mrb[0].mxu0 %v486
      %v2626 = vpop.f32.mrb[0].mxu0
      %v2627 = vadd.f32 0.0, %v2626
      %v2628 = vpop.f32.mrb[0].mxu0
      %2629 = vmatprep.mubr.f32.mxu0 0.0
      %2630 = vmatmul.mubr.f32.gmra.mrb[0].mxu0 %v488
      %v2631 = vpop.f32.mrb[0].mxu0
      %v2632 = vadd.f32 0.0, %v2631
      %v2633 = vpop.f32.mrb[0].mxu0
      %2634 = vmatprep.mubr.f32.mxu0 0.0
      %2635 = vmatmul.mubr.f32.gmra.mrb[0].mxu0 %v490
      %v2636 = vpop.f32.mrb[0].mxu0
      %v2637 = vadd.f32 0.0, %v2636
      %v2638 = vpop.f32.mrb[0].mxu0
      %2639 = vmatprep.mubr.f32.mxu0 0.0
      %2640 = vmatmul.mubr.f32.gmra.mrb[0].mxu0 %v492
      %v2641 = vpop.f32.mrb[0].mxu0
      %v2642 = vadd.f32 0.0, %v2641
      %v2643 = vpop.f32.mrb[0].mxu0
      %2644 = vmatprep.mubr.f32.mxu0 0.0
      %2645 = vmatmul.mubr.f32.gmra.mrb[0].mxu0 %v494
      %v2646 = vpop.f32.mrb[0].mxu0
      %v2647 = vadd.f32 0.0, %v2646
      %v2648 = vpop.f32.mrb[0].mxu0
      %2649 = vmatprep.mubr.f32.mxu0 0.0
      %2650 = vmatmul.mubr.f32.gmra.mrb[0].mxu0 %v496
      %v2651 = vpop.f32.mrb[0].mxu0
      %v2652 = vadd.f32 0.0, %v2651
      %v2653 = vpop.f32.mrb[0].mxu0
      %2654 = vmatprep.mubr.f32.mxu0 0.0
      %2655 = vmatmul.mubr.f32.gmra.mrb[0].mxu0 %v498
      %v2656 = vpop.f32.mrb[0].mxu0
      %v2657 = vadd.f32 0.0, %v2656
      %v2658 = vpop.f32.mrb[0].mxu0
      %2659 = vmatprep.mubr.f32.mxu0 0.0
      %2660 = vmatmul.mubr.f32.gmra.mrb[0].mxu0 %v500
      %v2661 = vpop.f32.mrb[0].mxu0
      %v2662 = vadd.f32 0.0, %v2661
      %v2663 = vpop.f32.mrb[0].mxu0
      %2664 = vmatprep.mubr.f32.mxu0 0.0
      %2665 = vmatmul.mubr.f32.gmra.mrb[0].mxu0 %v502
      %v2666 = vpop.f32.mrb[0].mxu0
      %v2667 = vadd.f32 0.0, %v2666
      %v2668 = vpop.f32.mrb[0].mxu0
      %2669 = vmatprep.mubr.f32.mxu0 0.0
      %2670 = vmatmul.mubr.f32.gmra.mrb[0].mxu0 %v504
      %v2671 = vpop.f32.mrb[0].mxu0
      %v2672 = vadd.f32 0.0, %v2671
      %v2673 = vpop.f32.mrb[0].mxu0
      %2674 = vmatprep.mubr.f32.mxu0 0.0
      %2675 = vmatmul.mubr.f32.gmra.mrb[0].mxu0 %v506
      %v2676 = vpop.f32.mrb[0].mxu0
      %v2677 = vadd.f32 0.0, %v2676
      %v2678 = vpop.f32.mrb[0].mxu0
      %2679 = vmatprep.mubr.f32.mxu0 0.0
      %2680 = vmatmul.mubr.f32.gmra.mrb[0].mxu0 %v508
      %v2681 = vpop.f32.mrb[0].mxu0
      %v2682 = vadd.f32 0.0, %v2681
      %v2683 = vpop.f32.mrb[0].mxu0
      %2684 = vmatprep.mubr.f32.mxu0 0.0
      %2685 = vmatmul.mubr.f32.gmra.mrb[0].mxu0 %v510
      %v2686 = vpop.f32.mrb[0].mxu0
      %v2687 = vadd.f32 0.0, %v2686
      %v2688 = vpop.f32.mrb[0].mxu0
      %2689 = vmatprep.mubr.f32.mxu0 0.0
      %2690 = vmatmul.mubr.f32.gmra.mrb[0].mxu0 %v512
      %v2691 = vpop.f32.mrb[0].mxu0
      %v2692 = vadd.f32 0.0, %v2691
      %v2693 = vpop.f32.mrb[0].mxu0
      %2694 = vmatprep.mubr.f32.mxu0 0.0
      %2695 = vmatmul.mubr.f32.gmra.mrb[0].mxu0 %v514
      %v2696 = vpop.f32.mrb[0].mxu0
      %v2697 = vadd.f32 0.0, %v2696
      %v2698 = vpop.f32.mrb[0].mxu0
      %2699 = vmatprep.mubr.f32.mxu0 0.0
      %2700 = vmatmul.mubr.f32.gmra.mrb[0].mxu0 %v516
      %v2701 = vpop.f32.mrb[0].mxu0
      %v2702 = vadd.f32 0.0, %v2701
      %v2703 = vpop.f32.mrb[0].mxu0
      %2704 = vmatprep.mubr.f32.mxu0 0.0
      %2705 = vmatmul.mubr.f32.gmra.mrb[0].mxu0 %v518
      %v2706 = vpop.f32.mrb[0].mxu0
      %v2707 = vadd.f32 0.0, %v2706
      %v2708 = vpop.f32.mrb[0].mxu0
      %2709 = vmatprep.mubr.f32.mxu0 0.0
      %2710 = vmatmul.mubr.f32.gmra.mrb[0].mxu0 %v1705
      %v2711 = vpop.f32.mrb[0].mxu0
      %v2712 = vadd.f32 0.0, %v2711
      %v2713 = vpop.f32.mrb[0].mxu0
      %2714 = vmatprep.mubr.f32.mxu0 0.0
      %2715 = vmatmul.mubr.f32.gmra.mrb[0].mxu0 %v1707
      %v2716 = vpop.f32.mrb[0].mxu0
      %v2717 = vadd.f32 0.0, %v2716
      %v2718 = vpop.f32.mrb[0].mxu0
      %2719 = vmatprep.mubr.f32.mxu0 0.0
      %2720 = vmatmul.mubr.f32.gmra.mrb[0].mxu0 %v2501
      %v2721 = vpop.f32.mrb[0].mxu0
      %v2722 = vadd.f32 0.0, %v2721
      %v2723 = vpop.f32.mrb[0].mxu0
      %2724 = vmatprep.mubr.f32.mxu0 0.0
      %2725 = vmatmul.mubr.f32.gmra.mrb[0].mxu0 %v2503
      %v2726 = vpop.f32.mrb[0].mxu0
      %v2727 = vadd.f32 0.0, %v2726
      %v2728 = vpop.f32.mrb[0].mxu0
      %2729 = vdwg.mxu0
      %v2730 = vadd.f32 %v2463, %v2572
      %v2731 = vadd.f32 %v2464, %v2577
      %v2732 = vadd.f32 %v2465, %v2582
      %v2733 = vadd.f32 %v2466, %v2587
      %v2734 = vadd.f32 %v2467, %v2592
      %v2735 = vadd.f32 %v2468, %v2597
      %v2736 = vadd.f32 %v2469, %v2602
      %v2737 = vadd.f32 %v2470, %v2607
      %v2738 = vadd.f32 %v2471, %v2612
      %v2739 = vadd.f32 %v2472, %v2617
      %v2740 = vadd.f32 %v2473, %v2622
      %v2741 = vadd.f32 %v2474, %v2627
      %v2742 = vadd.f32 %v2475, %v2632
      %v2743 = vadd.f32 %v2476, %v2637
      %v2744 = vadd.f32 %v2477, %v2642
      %v2745 = vadd.f32 %v2478, %v2647
      %v2746 = vadd.f32 %v2479, %v2652
      %v2747 = vadd.f32 %v2480, %v2657
      %v2748 = vadd.f32 %v2481, %v2662
      %v2749 = vadd.f32 %v2482, %v2667
      %v2750 = vadd.f32 %v2483, %v2672
      %v2751 = vadd.f32 %v2484, %v2677
      %v2752 = vadd.f32 %v2485, %v2682
      %v2753 = vadd.f32 %v2486, %v2687
      %v2754 = vadd.f32 %v2487, %v2692
      %v2755 = vadd.f32 %v2488, %v2697
      %v2756 = vadd.f32 %v2489, %v2702
      %v2757 = vadd.f32 %v2490, %v2707
      %v2758 = vadd.f32 %v2491, %v2712
      %v2759 = vadd.f32 %v2492, %v2717
      %v2760 = vadd.f32 %v2493, %v2722
      %v2761 = vadd.f32 %v2494, %v2727
      %v2762 = vrot.slane %v314, 2
      %v2763 = vrot.slane %v315, 2
      %v2764 = vsel %vm1034, %v2762, %v2763
      %v2765 = vrot.slane %v316, 2
      %v2766 = vsel %vm1034, %v2763, %v2765
      %v2767 = vsel %vm455, %v2764, 0
      %v2769 = vsel %vm455, %v2766, 0
      %2771 = vmatprep.subr.mxu0 0.0
      %2772 = vmatpush1.msra.mxu0 %v325
      %2773 = vmatprep.subr.mxu0 0.0
      %2774 = vmatpush1.msra.mxu0 0.0
      %2775 = vmatprep.subr.mxu0 0.0
      %2776 = vmatpush1.msra.mxu0 0.0
      %2777 = vmatprep.subr.mxu0 0.0
      %2778 = vmatpush1.msra.mxu0 0.0
      %2779 = vmatprep.subr.mxu0 0.0
      %2780 = vmatpush1.msra.mxu0 0.0
      %2781 = vmatprep.subr.mxu0 0.0
      %2782 = vmatpush1.msra.mxu0 0.0
      %2783 = vmatprep.subr.mxu0 0.0
      %2784 = vmatpush1.msra.mxu0 0.0
      %2785 = vmatprep.subr.mxu0 0.0
      %2786 = vmatpush1.msra.mxu0 0.0
      %2787 = vmatprep.subr.mxu0 0.0
      %2788 = vmatpush1.msra.mxu0 0.0
      %2789 = vmatprep.subr.mxu0 0.0
      %2790 = vmatpush1.msra.mxu0 0.0
      %2791 = vmatprep.subr.mxu0 0.0
      %2792 = vmatpush1.msra.mxu0 0.0
      %2793 = vmatprep.subr.mxu0 0.0
      %2794 = vmatpush1.msra.mxu0 0.0
      %2795 = vmatprep.subr.mxu0 0.0
      %2796 = vmatpush1.msra.mxu0 0.0
      %2797 = vmatprep.subr.mxu0 0.0
      %2798 = vmatpush1.msra.mxu0 0.0
      %2799 = vmatprep.subr.mxu0 0.0
      %2800 = vmatpush1.msra.mxu0 0.0
      %2801 = vmatprep.subr.mxu0 0.0
      %2802 = vmatpush1.msra.mxu0 0.0
      %2803 = vmatprep.subr.mxu0 0.0
      %2804 = vmatpush1.msra.mxu0 0.0
      %2805 = vmatprep.subr.mxu0 0.0
      %2806 = vmatpush1.msra.mxu0 0.0
      %2807 = vmatprep.subr.mxu0 0.0
      %2808 = vmatpush1.msra.mxu0 0.0
      %2809 = vmatprep.subr.mxu0 0.0
      %2810 = vmatpush1.msra.mxu0 0.0
      %2811 = vmatprep.subr.mxu0 0.0
      %2812 = vmatpush1.msra.mxu0 0.0
      %2813 = vmatprep.subr.mxu0 0.0
      %2814 = vmatpush1.msra.mxu0 0.0
      %2815 = vmatprep.subr.mxu0 0.0
      %2816 = vmatpush1.msra.mxu0 0.0
      %2817 = vmatprep.subr.mxu0 0.0
      %2818 = vmatpush1.msra.mxu0 0.0
      %2819 = vmatprep.subr.mxu0 0.0
      %2820 = vmatpush1.msra.mxu0 0.0
      %2821 = vmatprep.subr.mxu0 0.0
      %2822 = vmatpush1.msra.mxu0 0.0
      %2823 = vmatprep.subr.mxu0 0.0
      %2824 = vmatpush1.msra.mxu0 0.0
      %2825 = vmatprep.subr.mxu0 0.0
      %2826 = vmatpush1.msra.mxu0 0.0
      %2827 = vmatprep.subr.mxu0 0.0
      %2828 = vmatpush1.msra.mxu0 0.0
      %2829 = vmatprep.subr.mxu0 0.0
      %2830 = vmatpush1.msra.mxu0 0.0
      %2831 = vmatprep.subr.mxu0 0.0
      %2832 = vmatpush1.msra.mxu0 0.0
      %2833 = vmatprep.subr.mxu0 0.0
      %2834 = vmatpush1.msra.mxu0 0.0
      %2835 = vmatprep.mubr.f32.mxu0 0.0
      %2836 = vmatmul.mubr.f32.gmra.mrb[0].mxu0 %v1123
      %v2837 = vpop.f32.mrb[0].mxu0
      %v2838 = vadd.f32 0.0, %v2837
      %v2839 = vpop.f32.mrb[0].mxu0
      %2840 = vmatprep.mubr.f32.mxu0 0.0
      %2841 = vmatmul.mubr.f32.gmra.mrb[0].mxu0 %v1125
      %v2842 = vpop.f32.mrb[0].mxu0
      %v2843 = vadd.f32 0.0, %v2842
      %v2844 = vpop.f32.mrb[0].mxu0
      %2845 = vmatprep.mubr.f32.mxu0 0.0
      %2846 = vmatmul.mubr.f32.gmra.mrb[0].mxu0 %v1127
      %v2847 = vpop.f32.mrb[0].mxu0
      %v2848 = vadd.f32 0.0, %v2847
      %v2849 = vpop.f32.mrb[0].mxu0
      %2850 = vmatprep.mubr.f32.mxu0 0.0
      %2851 = vmatmul.mubr.f32.gmra.mrb[0].mxu0 %v1129
      %v2852 = vpop.f32.mrb[0].mxu0
      %v2853 = vadd.f32 0.0, %v2852
      %v2854 = vpop.f32.mrb[0].mxu0
      %2855 = vmatprep.mubr.f32.mxu0 0.0
      %2856 = vmatmul.mubr.f32.gmra.mrb[0].mxu0 %v1131
      %v2857 = vpop.f32.mrb[0].mxu0
      %v2858 = vadd.f32 0.0, %v2857
      %v2859 = vpop.f32.mrb[0].mxu0
      %2860 = vmatprep.mubr.f32.mxu0 0.0
      %2861 = vmatmul.mubr.f32.gmra.mrb[0].mxu0 %v1133
      %v2862 = vpop.f32.mrb[0].mxu0
      %v2863 = vadd.f32 0.0, %v2862
      %v2864 = vpop.f32.mrb[0].mxu0
      %2865 = vmatprep.mubr.f32.mxu0 0.0
      %2866 = vmatmul.mubr.f32.gmra.mrb[0].mxu0 %v1135
      %v2867 = vpop.f32.mrb[0].mxu0
      %v2868 = vadd.f32 0.0, %v2867
      %v2869 = vpop.f32.mrb[0].mxu0
      %2870 = vmatprep.mubr.f32.mxu0 0.0
      %2871 = vmatmul.mubr.f32.gmra.mrb[0].mxu0 %v1137
      %v2872 = vpop.f32.mrb[0].mxu0
      %v2873 = vadd.f32 0.0, %v2872
      %v2874 = vpop.f32.mrb[0].mxu0
      %2875 = vmatprep.mubr.f32.mxu0 0.0
      %2876 = vmatmul.mubr.f32.gmra.mrb[0].mxu0 %v1139
      %v2877 = vpop.f32.mrb[0].mxu0
      %v2878 = vadd.f32 0.0, %v2877
      %v2879 = vpop.f32.mrb[0].mxu0
      %2880 = vmatprep.mubr.f32.mxu0 0.0
      %2881 = vmatmul.mubr.f32.gmra.mrb[0].mxu0 %v1141
      %v2882 = vpop.f32.mrb[0].mxu0
      %v2883 = vadd.f32 0.0, %v2882
      %v2884 = vpop.f32.mrb[0].mxu0
      %2885 = vmatprep.mubr.f32.mxu0 0.0
      %2886 = vmatmul.mubr.f32.gmra.mrb[0].mxu0 %v1143
      %v2887 = vpop.f32.mrb[0].mxu0
      %v2888 = vadd.f32 0.0, %v2887
      %v2889 = vpop.f32.mrb[0].mxu0
      %2890 = vmatprep.mubr.f32.mxu0 0.0
      %2891 = vmatmul.mubr.f32.gmra.mrb[0].mxu0 %v1145
      %v2892 = vpop.f32.mrb[0].mxu0
      %v2893 = vadd.f32 0.0, %v2892
      %v2894 = vpop.f32.mrb[0].mxu0
      %2895 = vmatprep.mubr.f32.mxu0 0.0
      %2896 = vmatmul.mubr.f32.gmra.mrb[0].mxu0 %v1147
      %v2897 = vpop.f32.mrb[0].mxu0
      %v2898 = vadd.f32 0.0, %v2897
      %v2899 = vpop.f32.mrb[0].mxu0
      %2900 = vmatprep.mubr.f32.mxu0 0.0
      %2901 = vmatmul.mubr.f32.gmra.mrb[0].mxu0 %v1149
      %v2902 = vpop.f32.mrb[0].mxu0
      %v2903 = vadd.f32 0.0, %v2902
      %v2904 = vpop.f32.mrb[0].mxu0
      %2905 = vmatprep.mubr.f32.mxu0 0.0
      %2906 = vmatmul.mubr.f32.gmra.mrb[0].mxu0 %v1151
      %v2907 = vpop.f32.mrb[0].mxu0
      %v2908 = vadd.f32 0.0, %v2907
      %v2909 = vpop.f32.mrb[0].mxu0
      %2910 = vmatprep.mubr.f32.mxu0 0.0
      %2911 = vmatmul.mubr.f32.gmra.mrb[0].mxu0 %v1153
      %v2912 = vpop.f32.mrb[0].mxu0
      %v2913 = vadd.f32 0.0, %v2912
      %v2914 = vpop.f32.mrb[0].mxu0
      %2915 = vmatprep.mubr.f32.mxu0 0.0
      %2916 = vmatmul.mubr.f32.gmra.mrb[0].mxu0 %v1155
      %v2917 = vpop.f32.mrb[0].mxu0
      %v2918 = vadd.f32 0.0, %v2917
      %v2919 = vpop.f32.mrb[0].mxu0
      %2920 = vmatprep.mubr.f32.mxu0 0.0
      %2921 = vmatmul.mubr.f32.gmra.mrb[0].mxu0 %v1157
      %v2922 = vpop.f32.mrb[0].mxu0
      %v2923 = vadd.f32 0.0, %v2922
      %v2924 = vpop.f32.mrb[0].mxu0
      %2925 = vmatprep.mubr.f32.mxu0 0.0
      %2926 = vmatmul.mubr.f32.gmra.mrb[0].mxu0 %v1159
      %v2927 = vpop.f32.mrb[0].mxu0
      %v2928 = vadd.f32 0.0, %v2927
      %v2929 = vpop.f32.mrb[0].mxu0
      %2930 = vmatprep.mubr.f32.mxu0 0.0
      %2931 = vmatmul.mubr.f32.gmra.mrb[0].mxu0 %v1161
      %v2932 = vpop.f32.mrb[0].mxu0
      %v2933 = vadd.f32 0.0, %v2932
      %v2934 = vpop.f32.mrb[0].mxu0
      %2935 = vmatprep.mubr.f32.mxu0 0.0
      %2936 = vmatmul.mubr.f32.gmra.mrb[0].mxu0 %v1163
      %v2937 = vpop.f32.mrb[0].mxu0
      %v2938 = vadd.f32 0.0, %v2937
      %v2939 = vpop.f32.mrb[0].mxu0
      %2940 = vmatprep.mubr.f32.mxu0 0.0
      %2941 = vmatmul.mubr.f32.gmra.mrb[0].mxu0 %v1165
      %v2942 = vpop.f32.mrb[0].mxu0
      %v2943 = vadd.f32 0.0, %v2942
      %v2944 = vpop.f32.mrb[0].mxu0
      %2945 = vmatprep.mubr.f32.mxu0 0.0
      %2946 = vmatmul.mubr.f32.gmra.mrb[0].mxu0 %v1167
      %v2947 = vpop.f32.mrb[0].mxu0
      %v2948 = vadd.f32 0.0, %v2947
      %v2949 = vpop.f32.mrb[0].mxu0
      %2950 = vmatprep.mubr.f32.mxu0 0.0
      %2951 = vmatmul.mubr.f32.gmra.mrb[0].mxu0 %v1169
      %v2952 = vpop.f32.mrb[0].mxu0
      %v2953 = vadd.f32 0.0, %v2952
      %v2954 = vpop.f32.mrb[0].mxu0
      %2955 = vmatprep.mubr.f32.mxu0 0.0
      %2956 = vmatmul.mubr.f32.gmra.mrb[0].mxu0 %v1171
      %v2957 = vpop.f32.mrb[0].mxu0
      %v2958 = vadd.f32 0.0, %v2957
      %v2959 = vpop.f32.mrb[0].mxu0
      %2960 = vmatprep.mubr.f32.mxu0 0.0
      %2961 = vmatmul.mubr.f32.gmra.mrb[0].mxu0 %v1173
      %v2962 = vpop.f32.mrb[0].mxu0
      %v2963 = vadd.f32 0.0, %v2962
      %v2964 = vpop.f32.mrb[0].mxu0
      %2965 = vmatprep.mubr.f32.mxu0 0.0
      %2966 = vmatmul.mubr.f32.gmra.mrb[0].mxu0 %v1175
      %v2967 = vpop.f32.mrb[0].mxu0
      %v2968 = vadd.f32 0.0, %v2967
      %v2969 = vpop.f32.mrb[0].mxu0
      %2970 = vmatprep.mubr.f32.mxu0 0.0
      %2971 = vmatmul.mubr.f32.gmra.mrb[0].mxu0 %v1177
      %v2972 = vpop.f32.mrb[0].mxu0
      %v2973 = vadd.f32 0.0, %v2972
      %v2974 = vpop.f32.mrb[0].mxu0
      %2975 = vmatprep.mubr.f32.mxu0 0.0
      %2976 = vmatmul.mubr.f32.gmra.mrb[0].mxu0 %v1971
      %v2977 = vpop.f32.mrb[0].mxu0
      %v2978 = vadd.f32 0.0, %v2977
      %v2979 = vpop.f32.mrb[0].mxu0
      %2980 = vmatprep.mubr.f32.mxu0 0.0
      %2981 = vmatmul.mubr.f32.gmra.mrb[0].mxu0 %v1973
      %v2982 = vpop.f32.mrb[0].mxu0
      %v2983 = vadd.f32 0.0, %v2982
      %v2984 = vpop.f32.mrb[0].mxu0
      %2985 = vmatprep.mubr.f32.mxu0 0.0
      %2986 = vmatmul.mubr.f32.gmra.mrb[0].mxu0 %v2767
      %v2987 = vpop.f32.mrb[0].mxu0
      %v2988 = vadd.f32 0.0, %v2987
      %v2989 = vpop.f32.mrb[0].mxu0
      %2990 = vmatprep.mubr.f32.mxu0 0.0
      %2991 = vmatmul.mubr.f32.gmra.mrb[0].mxu0 %v2769
      %v2992 = vpop.f32.mrb[0].mxu0
      %v2993 = vadd.f32 0.0, %v2992
      %v2994 = vpop.f32.mrb[0].mxu0
      %2995 = vdwg.mxu0
      %v2996 = vadd.f32 %v2730, %v2838
      %v2997 = vadd.f32 %v2731, %v2843
      %v2998 = vadd.f32 %v2732, %v2848
      %v2999 = vadd.f32 %v2733, %v2853
      %v3000 = vadd.f32 %v2734, %v2858
      %v3001 = vadd.f32 %v2735, %v2863
      %v3002 = vadd.f32 %v2736, %v2868
      %v3003 = vadd.f32 %v2737, %v2873
      %v3004 = vadd.f32 %v2738, %v2878
      %v3005 = vadd.f32 %v2739, %v2883
      %v3006 = vadd.f32 %v2740, %v2888
      %v3007 = vadd.f32 %v2741, %v2893
      %v3008 = vadd.f32 %v2742, %v2898
      %v3009 = vadd.f32 %v2743, %v2903
      %v3010 = vadd.f32 %v2744, %v2908
      %v3011 = vadd.f32 %v2745, %v2913
      %v3012 = vadd.f32 %v2746, %v2918
      %v3013 = vadd.f32 %v2747, %v2923
      %v3014 = vadd.f32 %v2748, %v2928
      %v3015 = vadd.f32 %v2749, %v2933
      %v3016 = vadd.f32 %v2750, %v2938
      %v3017 = vadd.f32 %v2751, %v2943
      %v3018 = vadd.f32 %v2752, %v2948
      %v3019 = vadd.f32 %v2753, %v2953
      %v3020 = vadd.f32 %v2754, %v2958
      %v3021 = vadd.f32 %v2755, %v2963
      %v3022 = vadd.f32 %v2756, %v2968
      %v3023 = vadd.f32 %v2757, %v2973
      %v3024 = vadd.f32 %v2758, %v2978
      %v3025 = vadd.f32 %v2759, %v2983
      %v3026 = vadd.f32 %v2760, %v2988
      %v3027 = vadd.f32 %v2761, %v2993
      %v3028 = vld [vmem:[%s251] sm:$0x1]
      %v3030 = vlaneseq
      %v3031 = vshrl.u32 %v3030, 7
      %v3032 = vsub.s32 0, %v3031
      %v3033 = vrot.slane %v3028, %v3032
      %v3035 = vmul.f32 %v2996, %v3033
      %v3036 = vmul.f32 %v2997, %v3033
      %v3037 = vmul.f32 %v2998, %v3033
      %v3038 = vmul.f32 %v2999, %v3033
      %v3039 = vmul.f32 %v3000, %v3033
      %v3040 = vmul.f32 %v3001, %v3033
      %v3041 = vmul.f32 %v3002, %v3033
      %v3042 = vmul.f32 %v3003, %v3033
      %v3043 = vmul.f32 %v3004, %v3033
      %v3044 = vmul.f32 %v3005, %v3033
      %v3045 = vmul.f32 %v3006, %v3033
      %v3046 = vmul.f32 %v3007, %v3033
      %v3047 = vmul.f32 %v3008, %v3033
      %v3048 = vmul.f32 %v3009, %v3033
      %v3049 = vmul.f32 %v3010, %v3033
      %v3050 = vmul.f32 %v3011, %v3033
      %v3051 = vmul.f32 %v3012, %v3033
      %v3052 = vmul.f32 %v3013, %v3033
      %v3053 = vmul.f32 %v3014, %v3033
      %v3054 = vmul.f32 %v3015, %v3033
      %v3055 = vmul.f32 %v3016, %v3033
      %v3056 = vmul.f32 %v3017, %v3033
      %v3057 = vmul.f32 %v3018, %v3033
      %v3058 = vmul.f32 %v3019, %v3033
      %v3059 = vmul.f32 %v3020, %v3033
      %v3060 = vmul.f32 %v3021, %v3033
      %v3061 = vmul.f32 %v3022, %v3033
      %v3062 = vmul.f32 %v3023, %v3033
      %v3063 = vmul.f32 %v3024, %v3033
      %v3064 = vmul.f32 %v3025, %v3033
      %v3065 = vmul.f32 %v3026, %v3033
      %v3066 = vmul.f32 %v3027, %v3033
      %v3067 = vld [vmem:[%s254] sm:$0x1]
      %v3069 = vlaneseq
      %v3070 = vshrl.u32 %v3069, 7
      %v3071 = vsub.s32 0, %v3070
      %v3072 = vrot.slane %v3067, %v3071
      %v3074 = vadd.f32 %v3035, %v3072
      %v3075 = vadd.f32 %v3036, %v3072
      %v3076 = vadd.f32 %v3037, %v3072
      %v3077 = vadd.f32 %v3038, %v3072
      %v3078 = vadd.f32 %v3039, %v3072
      %v3079 = vadd.f32 %v3040, %v3072
      %v3080 = vadd.f32 %v3041, %v3072
      %v3081 = vadd.f32 %v3042, %v3072
      %v3082 = vadd.f32 %v3043, %v3072
      %v3083 = vadd.f32 %v3044, %v3072
      %v3084 = vadd.f32 %v3045, %v3072
      %v3085 = vadd.f32 %v3046, %v3072
      %v3086 = vadd.f32 %v3047, %v3072
      %v3087 = vadd.f32 %v3048, %v3072
      %v3088 = vadd.f32 %v3049, %v3072
      %v3089 = vadd.f32 %v3050, %v3072
      %v3090 = vadd.f32 %v3051, %v3072
      %v3091 = vadd.f32 %v3052, %v3072
      %v3092 = vadd.f32 %v3053, %v3072
      %v3093 = vadd.f32 %v3054, %v3072
      %v3094 = vadd.f32 %v3055, %v3072
      %v3095 = vadd.f32 %v3056, %v3072
      %v3096 = vadd.f32 %v3057, %v3072
      %v3097 = vadd.f32 %v3058, %v3072
      %v3098 = vadd.f32 %v3059, %v3072
      %v3099 = vadd.f32 %v3060, %v3072
      %v3100 = vadd.f32 %v3061, %v3072
      %v3101 = vadd.f32 %v3062, %v3072
      %v3102 = vadd.f32 %v3063, %v3072
      %v3103 = vadd.f32 %v3064, %v3072
      %v3104 = vadd.f32 %v3065, %v3072
      %v3105 = vadd.f32 %v3066, %v3072
      %v3106 = vmax.f32 %v3074, 0.0
      %v3107 = vmax.f32 %v3075, 0.0
      %v3108 = vmax.f32 %v3076, 0.0
      %v3109 = vmax.f32 %v3077, 0.0
      %v3110 = vmax.f32 %v3078, 0.0
      %v3111 = vmax.f32 %v3079, 0.0
      %v3112 = vmax.f32 %v3080, 0.0
      %v3113 = vmax.f32 %v3081, 0.0
      %v3114 = vmax.f32 %v3082, 0.0
      %v3115 = vmax.f32 %v3083, 0.0
      %v3116 = vmax.f32 %v3084, 0.0
      %v3117 = vmax.f32 %v3085, 0.0
      %v3118 = vmax.f32 %v3086, 0.0
      %v3119 = vmax.f32 %v3087, 0.0
      %v3120 = vmax.f32 %v3088, 0.0
      %v3121 = vmax.f32 %v3089, 0.0
      %v3122 = vmax.f32 %v3090, 0.0
      %v3123 = vmax.f32 %v3091, 0.0
      %v3124 = vmax.f32 %v3092, 0.0
      %v3125 = vmax.f32 %v3093, 0.0
      %v3126 = vmax.f32 %v3094, 0.0
      %v3127 = vmax.f32 %v3095, 0.0
      %v3128 = vmax.f32 %v3096, 0.0
      %v3129 = vmax.f32 %v3097, 0.0
      %v3130 = vmax.f32 %v3098, 0.0
      %v3131 = vmax.f32 %v3099, 0.0
      %v3132 = vmax.f32 %v3100, 0.0
      %v3133 = vmax.f32 %v3101, 0.0
      %v3134 = vmax.f32 %v3102, 0.0
      %v3135 = vmax.f32 %v3103, 0.0
      %v3136 = vmax.f32 %v3104, 0.0
      %v3137 = vmax.f32 %v3105, 0.0
      %3138 = vst.msk [vmem:[%s262] sm:$0xff] %vm455, %v3106
      %3139 = vst.msk [vmem:[%s262 + $0x8] sm:$0xff] %vm455, %v3107
      %3140 = vst.msk [vmem:[%s262 + $0x10] sm:$0xff] %vm455, %v3108
      %3141 = vst.msk [vmem:[%s262 + $0x18] sm:$0xff] %vm455, %v3109
      %3142 = vst.msk [vmem:[%s262 + $0x20] sm:$0xff] %vm455, %v3110
      %3143 = vst.msk [vmem:[%s262 + $0x28] sm:$0xff] %vm455, %v3111
      %3144 = vst.msk [vmem:[%s262 + $0x30] sm:$0xff] %vm455, %v3112
      %3145 = vst.msk [vmem:[%s262 + $0x38] sm:$0xff] %vm455, %v3113
      %3146 = vst.msk [vmem:[%s262 + $0x40] sm:$0xff] %vm455, %v3114
      %3147 = vst.msk [vmem:[%s262 + $0x48] sm:$0xff] %vm455, %v3115
      %3148 = vst.msk [vmem:[%s262 + $0x50] sm:$0xff] %vm455, %v3116
      %3149 = vst.msk [vmem:[%s262 + $0x58] sm:$0xff] %vm455, %v3117
      %3150 = vst.msk [vmem:[%s262 + $0x60] sm:$0xff] %vm455, %v3118
      %3151 = vst.msk [vmem:[%s262 + $0x68] sm:$0xff] %vm455, %v3119
      %3152 = vst.msk [vmem:[%s262 + $0x70] sm:$0xff] %vm455, %v3120
      %3153 = vst.msk [vmem:[%s262 + $0x78] sm:$0xff] %vm455, %v3121
      %3154 = vst.msk [vmem:[%s262 + $0x80] sm:$0xff] %vm455, %v3122
      %3155 = vst.msk [vmem:[%s262 + $0x88] sm:$0xff] %vm455, %v3123
      %3156 = vst.msk [vmem:[%s262 + $0x90] sm:$0xff] %vm455, %v3124
      %3157 = vst.msk [vmem:[%s262 + $0x98] sm:$0xff] %vm455, %v3125
      %3158 = vst.msk [vmem:[%s262 + $0xa0] sm:$0xff] %vm455, %v3126
      %3159 = vst.msk [vmem:[%s262 + $0xa8] sm:$0xff] %vm455, %v3127
      %3160 = vst.msk [vmem:[%s262 + $0xb0] sm:$0xff] %vm455, %v3128
      %3161 = vst.msk [vmem:[%s262 + $0xb8] sm:$0xff] %vm455, %v3129
      %3162 = vst.msk [vmem:[%s262 + $0xc0] sm:$0xff] %vm455, %v3130
      %3163 = vst.msk [vmem:[%s262 + $0xc8] sm:$0xff] %vm455, %v3131
      %3164 = vst.msk [vmem:[%s262 + $0xd0] sm:$0xff] %vm455, %v3132
      %3165 = vst.msk [vmem:[%s262 + $0xd8] sm:$0xff] %vm455, %v3133
      %3166 = vst.msk [vmem:[%s262 + $0xe0] sm:$0xff] %vm455, %v3134
      %3167 = vst.msk [vmem:[%s262 + $0xe8] sm:$0xff] %vm455, %v3135
      %3168 = vst.msk [vmem:[%s262 + $0xf0] sm:$0xff] %vm455, %v3136
      %3169 = vst.msk [vmem:[%s262 + $0xf8] sm:$0xff] %vm455, %v3137
      %p3170 = scmp.lt.s32.totalorder %s19, 1
      %s3171 = scalar_select %p3170, %s19, 1
      %p3172 = scmp.lt.s32.totalorder %s20, 0
      %s3173 = scalar_select %p3172, %s20, 0
      %s3174 = smul.addr %s3171, 32
      %s3175 = sadd.s32 %s3173, %s3174
      %s3176 = smul.addr %s3175, 8
      %s3177 = scalar_lea.vmem %s4, %s3176
      // Predicated region
      $region37: #{tpu_custom_call.1} parent=35 // pred_check
        %p3178 = pneg %p151
      $region38: #{tpu_custom_call.1} parent=35 // pred_check_branch
        %3180 = sbr.rel (%p3178) target = $region40
      $region39: #{tpu_custom_call.1} parent=35 // pred_region
        _
      $region40: #{tpu_custom_call.1} parent=35 // pred_fallthru
        _
    $region36: #{tpu_custom_call.1} parent=5 // pred_fallthru
      _
    %p3181 = scmp.le.s32.totalorder 2, %s10
    // Predicated region
    $region41: #{tpu_custom_call.1} parent=5 // pred_check
      %p3182 = pneg %p3181
    $region42: #{tpu_custom_call.1} parent=5 // pred_check_branch
      %3184 = sbr.rel (%p3182) target = $region44
    $region43: #{tpu_custom_call.1} parent=5 // pred_region
      %s3185 = ssub.s32 %s10, 2
      // Predicated region
      $region45: #{tpu_custom_call.1} parent=43 // pred_check
        %p3186 = pneg %p157
      $region46: #{tpu_custom_call.1} parent=43 // pred_check_branch
        %3188 = sbr.rel (%p3186) target = $region48
      $region47: #{tpu_custom_call.1} parent=43 // pred_region
        %p3189 = scmp.lt.s32.totalorder %s21, 1
        %s3190 = scalar_select %p3189, %s21, 1
        %p3191 = scmp.lt.s32.totalorder %s22, 0
        %s3192 = scalar_select %p3191, %s22, 0
        %s3193 = smul.addr %s3190, 32
        %s3194 = sadd.s32 %s3192, %s3193
        %s3195 = smul.addr %s3194, 8
        %s3196 = scalar_lea.vmem %s4, %s3195
      $region48: #{tpu_custom_call.1} parent=43 // pred_fallthru
        _
    $region44: #{tpu_custom_call.1} parent=5 // pred_fallthru
      _
  $region6: #{tpu_custom_call.1} parent=0 // loop_footer
    %s14 = sadd.s32 1, %s10
  $region7: #{tpu_custom_call.1} parent=0 // loop_footer_branch
    %9 = sbr.rel target = $region3
  $region8: #{tpu_custom_call.1} parent=0 // loop_exit
    _

</llo_original>
